<compile_context>
chip_gen: v6e
topology: v6e:2x2x1
jax: 0.10.0
libtpu: 0.0.40
codegen_flags: <defaults>
</compile_context>

<pallas_src>
import functools

import jax
import jax.numpy as jnp
import numpy as np
from jax import lax
from jax.experimental import pallas as pl
from jax.experimental.pallas import tpu as pltpu

# ---- Memristor model constants (defaults of Memristor.__init__) -------------
DT = 0.001
RON = 1.0e7
ROFF = 1.0e12
MU = 220.0
GAMMA1 = 600.0
GAMMA2 = 2.0
GAMMA3 = 5.0
THETA = 1.0
ALPHA = 0.01
BETA = 10.0
LAM = 0.2

# Folded compile-time constants (R_Compliance = 0, I_Compliance = 0 defaults).
INV_LAM = 1.0 / LAM
MU_DT = MU * DT
G1_DT = GAMMA1 * DT          # 0.6  < 1
G2_DT = GAMMA2 * DT          # 0.002 < 1
G3_DT = GAMMA3 * DT
BETA_DT = BETA * DT
THETA_DT = THETA * DT
ROFF_SCALED = float(ROFF / (np.exp(INV_LAM) - 1.0))  # Roff / (exp(1/lam) - 1)

_CHUNK = 8  # sublane-aligned number of time steps per inner-loop iteration


def _round_up(x, m):
    return ((x + m - 1) // m) * m


def _cdiv(a, b):
    return (a + b - 1) // b


def _memristor_state_step(res, fil, S, v_t):
    """One step of the carried recurrence only (no Rm / current).

    Exact simplification of the PyTorch module for the default config
    (residue=True, symmetric=False, C2C/D2D/random_init_res=False,
     R_Compliance=0 -> vin == v_t, I_Compliance=0 -> no clamping).
    """
    vpos = jnp.maximum(v_t, 0.0)

    tot0 = jnp.clip(res + fil, 0.0, 1.0)
    s_upd = tot0 > 0.999999      # update_S_mask
    ch_upd = S < 1.000001        # updata_chanel_mask (on pre-update S)

    # Two *independent* exps (issue back-to-back into the EUP FIFO) instead of
    # exp(1-S) followed by a dependent divide on the carried S chain.
    e_neg = jnp.exp(1.0 - S)
    e_pos = jnp.exp(S - 1.0)
    dS = THETA_DT * vpos * e_neg - G3_DT * e_pos
    S = jnp.maximum(jnp.where(s_upd, S + dS, S), 1.0)

    # Diffusion: gamma*dt < 1 and fil,res >= 0 -> clamp(rate*x, 0, x) is the
    # identity, so the update collapses to a single scale.
    fil = jnp.where(ch_upd, fil * (1.0 - G1_DT), fil)
    res = jnp.where(ch_upd, res * (1.0 - G2_DT), res)

    # Ion drift (non-symmetric).  alpha + (1 - tot0) is already inside
    # [alpha, alpha + 1], so the original denominator clamp is the identity.
    drift = jnp.clip(vpos * (MU_DT / (ALPHA + (1.0 - tot0))),
                     0.0, 1.0 - fil - res)
    fil = jnp.where(ch_upd, fil + drift, fil)

    # Filament -> residue transformation.
    transform = jnp.where(
        ch_upd,
        jnp.clip(BETA_DT * fil, 0.0, jnp.minimum(1.0 - res, fil)),
        0.0)
    fil = fil - transform
    res = res + transform

    tot = jnp.clip(res + fil, 0.0, 1.0)
    return res, fil, S, tot


def _rm_current(tot, S, v_t):
    """Memristance and output current (vectorizable, off the carried chain)."""
    Rm = (RON * tot / (S * S)
          + ROFF_SCALED * (jnp.exp((1.0 - tot) * INV_LAM) - 1.0))
    return v_t / Rm              # R_Compliance == 0


def _memristor_kernel(vin_ref, cur_ref, res_ref, fil_ref, S_ref,
                      tot_buf, s_buf):
    """grid = (batch_blocks, device_blocks, time_blocks); time is sequential.

    vin_ref / cur_ref : (TB, TT, TN) blocks of the [B, T, N] arrays.
    res/fil/S scratch : (TB, TN) state carried across the time blocks.
    tot_buf / s_buf   : (TB, _CHUNK, TN) per-step stash for the hoisted
                        Rm/current pass.
    """
    @pl.when(pl.program_id(2) == 0)
    def _init():
        res_ref[...] = jnp.zeros_like(res_ref)
        fil_ref[...] = jnp.zeros_like(fil_ref)
        S_ref[...] = jnp.zeros_like(S_ref)

    n_chunks = vin_ref.shape[1] // _CHUNK  # TT is a multiple of _CHUNK

    def chunk_body(c, carry):
        res, fil, S = carry
        base = pl.multiple_of(c * _CHUNK, _CHUNK)
        v_chunk = vin_ref[:, pl.ds(base, _CHUNK), :]      # (TB, 8, TN), aligned

        # Serial part: state recurrence only (short EUP/VALU chain per step).
        for j in range(_CHUNK):                           # static unroll
            res, fil, S, tot = _memristor_state_step(res, fil, S,
                                                     v_chunk[:, j, :])
            tot_buf[:, j, :] = tot
            s_buf[:, j, :] = S

        # Dense vectorized output pass for the whole chunk (keeps the EUP slot
        # full with independent exp/divide work), stored directly to cur_ref.
        cur_ref[:, pl.ds(base, _CHUNK), :] = _rm_current(
            tot_buf[...], s_buf[...], v_chunk)
        return (res, fil, S)

    res, fil, S = lax.fori_loop(
        0, n_chunks, chunk_body,
        (res_ref[...], fil_ref[...], S_ref[...]))
    res_ref[...] = res
    fil_ref[...] = fil
    S_ref[...] = S


@functools.partial(jax.jit, static_argnames=("tt_max", "vmem_budget_bytes"))
def memristor_forward(vin_btn, *, tt_max=256, vmem_budget_bytes=8 * 1024 * 1024):
    """vin_btn: float32 [B, T, N] -> currents float32 [B, T, N]."""
    vin_btn = jnp.asarray(vin_btn, jnp.float32)
    B, T, N = vin_btn.shape

    # ---- Device (lane) axis: pad to a multiple of 128 (lane-dense stores) and
    # pick a tile TN dividing the padded extent.  n_n > 1 gives a real parallel
    # grid axis (second TensorCore on v7x) for large-N workloads.
    N_pad = _round_up(N, 128)
    TN = 128
    for cand in (512, 384, 256, 128):
        if N_pad % cand == 0:
            TN = cand
            break
    n_n = N_pad // TN

    # ---- Batch axis: wider TB = more independent recurrence chains per step
    # (hides EUP latency); keep TB a divisor of B.
    if B <= 32:
        TB = B
    else:
        TB = next((c for c in (32, 16, 8) if B % c == 0), B)
    n_b = B // TB

    # ---- Time-block size: multiple of 8, capped by tt_max and a conservative
    # VMEM budget for the double-buffered in/out blocks (4 * TB * TT * TN * 4B),
    # safe under the default scoped VMEM limit on every TPU generation.
    cap = max(_CHUNK, (vmem_budget_bytes // (16 * TB * TN)) // _CHUNK * _CHUNK)
    cap = min(cap, tt_max)
    T8 = _round_up(T, _CHUNK)
    n_t = _cdiv(T8, cap)
    TT = _round_up(_cdiv(T8, n_t), _CHUNK)
    T_pad = n_t * TT

    pad_t = T_pad - T
    pad_n = N_pad - N
    if pad_t or pad_n:
        vin_p = jnp.pad(vin_btn, ((0, 0), (0, pad_t), (0, pad_n)))
    else:
        vin_p = vin_btn

    # Actually tell Mosaic the VMEM we intend to use (blocks are 2x-buffered).
    block_bytes = 4 * TB * TT * TN
    scratch_bytes = 4 * TB * TN * 3 + 4 * TB * _CHUNK * TN * 2
    vmem_limit = int(min(64 * 1024 * 1024,
                         max(16 * 1024 * 1024,
                             4 * block_bytes + scratch_bytes + (2 << 20))))

    out = pl.pallas_call(
        _memristor_kernel,
        out_shape=jax.ShapeDtypeStruct((B, T_pad, N_pad), jnp.float32),
        grid_spec=pltpu.PrefetchScalarGridSpec(
            num_scalar_prefetch=0,
            grid=(n_b, n_n, n_t),
            in_specs=[pl.BlockSpec((TB, TT, TN), lambda b, n, t: (b, t, n))],
            out_specs=pl.BlockSpec((TB, TT, TN), lambda b, n, t: (b, t, n)),
            scratch_shapes=[
                pltpu.VMEM((TB, TN), jnp.float32),          # res
                pltpu.VMEM((TB, TN), jnp.float32),          # fil
                pltpu.VMEM((TB, TN), jnp.float32),          # S
                pltpu.VMEM((TB, _CHUNK, TN), jnp.float32),  # per-step tot stash
                pltpu.VMEM((TB, _CHUNK, TN), jnp.float32),  # per-step S stash
            ],
        ),
        compiler_params=pltpu.CompilerParams(
            dimension_semantics=("parallel", "parallel", "arbitrary"),
            vmem_limit_bytes=vmem_limit,
        ),
    )(vin_p)

    if pad_t or pad_n:
        out = out[:, :T, :N]
    return out


def memristor_forward_ref(vin_btn):
    """Pure-JAX reference (lax.scan over time) for correctness checking."""
    vin = jnp.asarray(vin_btn, jnp.float32)
    B, T, N = vin.shape
    init = (jnp.zeros((B, N), jnp.float32),
            jnp.zeros((B, N), jnp.float32),
            jnp.zeros((B, N), jnp.float32))

    def step(carry, v_t):
        res, fil, S = carry
        res, fil, S, tot = _memristor_state_step(res, fil, S, v_t)
        return (res, fil, S), _rm_current(tot, S, v_t)

    _, cur_tbn = lax.scan(step, init, jnp.transpose(vin, (1, 0, 2)))
    return jnp.transpose(cur_tbn, (1, 0, 2))


if __name__ == "__main__":
    key = jax.random.PRNGKey(0)
    # batch=8 sequences, 500 time steps, 128 memristor devices (lane-dense).
    B, T, N = 8, 500, 128
    # Modest positive-biased voltages so the filament actually grows.
    vin = jax.random.uniform(key, (B, T, N), dtype=jnp.float32,
                             minval=-0.5, maxval=2.0)

    out = jax.block_until_ready(memristor_forward(vin))
    ref = jax.block_until_ready(jax.jit(memristor_forward_ref)(vin))

    np.testing.assert_allclose(np.asarray(out), np.asarray(ref),
                               rtol=1e-4, atol=1e-18)
    assert out.shape == (B, T, N) and out.dtype == jnp.float32
    print("KERNEL_OK")
</pallas_src>

<mosaic_0001>
module attributes {stable_mosaic.version = 11 : i64} {
  func.func @_memristor_kernel(%arg0: i32, %arg1: i32, %arg2: i32, %arg3: memref<8x256x128xf32, #tpu.memory_space<vmem>>, %arg4: memref<8x256x128xf32, #tpu.memory_space<vmem>>, %arg5: memref<8x128xf32, #tpu.memory_space<vmem>>, %arg6: memref<8x128xf32, #tpu.memory_space<vmem>>, %arg7: memref<8x128xf32, #tpu.memory_space<vmem>>, %arg8: memref<8x8x128xf32, #tpu.memory_space<vmem>>, %arg9: memref<8x8x128xf32, #tpu.memory_space<vmem>>) attributes {dimension_semantics = [#tpu.dimension_semantics<parallel>, #tpu.dimension_semantics<parallel>, #tpu.dimension_semantics<arbitrary>], iteration_bounds = array<i64: 1, 1, 2>, scalar_prefetch = 0 : i64, scratch_operands = 5 : i64, tpu.core_type = #tpu.core_type<tc>, window_params = [{transform_indices = @transform_0, window_bounds = array<i64: 8, 256, 128>}, {transform_indices = @transform_1, window_bounds = array<i64: 8, 256, 128>}]} {
    %c0_i32 = arith.constant 0 : i32
    %0 = arith.cmpi eq, %arg2, %c0_i32 : i32
    %1 = arith.extui %0 : i1 to i32
    %c0_i32_0 = arith.constant 0 : i32
    %2 = arith.cmpi ne, %1, %c0_i32_0 : i32
    scf.if %2 {
      %cst = arith.constant 0.000000e+00 : f32
      %11 = vector.broadcast %cst : f32 to vector<8x128xf32>
      %c0_14 = arith.constant 0 : index
      %c0_15 = arith.constant 0 : index
      %12 = vector.load %arg5[%c0_14, %c0_15] : memref<8x128xf32, #tpu.memory_space<vmem>>, vector<8x128xf32>
      tpu.vector_store %arg5[%c0_14, %c0_15], %11 {strides = array<i32>} : memref<8x128xf32, #tpu.memory_space<vmem>>, vector<8x128xf32>,
      %cst_16 = arith.constant 0.000000e+00 : f32
      %13 = vector.broadcast %cst_16 : f32 to vector<8x128xf32>
      %c0_17 = arith.constant 0 : index
      %c0_18 = arith.constant 0 : index
      %14 = vector.load %arg6[%c0_17, %c0_18] : memref<8x128xf32, #tpu.memory_space<vmem>>, vector<8x128xf32>
      tpu.vector_store %arg6[%c0_17, %c0_18], %13 {strides = array<i32>} : memref<8x128xf32, #tpu.memory_space<vmem>>, vector<8x128xf32>,
      %cst_19 = arith.constant 0.000000e+00 : f32
      %15 = vector.broadcast %cst_19 : f32 to vector<8x128xf32>
      %c0_20 = arith.constant 0 : index
      %c0_21 = arith.constant 0 : index
      %16 = vector.load %arg7[%c0_20, %c0_21] : memref<8x128xf32, #tpu.memory_space<vmem>>, vector<8x128xf32>
      tpu.vector_store %arg7[%c0_20, %c0_21], %15 {strides = array<i32>} : memref<8x128xf32, #tpu.memory_space<vmem>>, vector<8x128xf32>,
    } else {
    }
    %c0 = arith.constant 0 : index
    %c0_1 = arith.constant 0 : index
    %3 = vector.load %arg5[%c0, %c0_1] : memref<8x128xf32, #tpu.memory_space<vmem>>, vector<8x128xf32>
    %c0_2 = arith.constant 0 : index
    %c0_3 = arith.constant 0 : index
    %4 = vector.load %arg6[%c0_2, %c0_3] : memref<8x128xf32, #tpu.memory_space<vmem>>, vector<8x128xf32>
    %c0_4 = arith.constant 0 : index
    %c0_5 = arith.constant 0 : index
    %5 = vector.load %arg7[%c0_4, %c0_5] : memref<8x128xf32, #tpu.memory_space<vmem>>, vector<8x128xf32>
    %c0_i32_6 = arith.constant 0 : i32
    %c32_i32 = arith.constant 32 : i32
    %6 = arith.addi %c0_i32_6, %c32_i32 : i32
    %c1_i32 = arith.constant 1 : i32
    %7:3 = scf.for %arg10 = %c0_i32_6 to %6 step %c1_i32 iter_args(%arg11 = %3, %arg12 = %4, %arg13 = %5) -> (vector<8x128xf32>, vector<8x128xf32>, vector<8x128xf32>)  : i32 {
      %c8_i32 = arith.constant 8 : i32
      %11 = arith.muli %arg10, %c8_i32 : i32
      %12 = tpu.assume_multiple %11, 8 : i32
      %c0_14 = arith.constant 0 : index
      %13 = arith.index_cast %12 : i32 to index
      %c0_15 = arith.constant 0 : index
      %14 = vector.load %arg3[%c0_14, %13, %c0_15] : memref<8x256x128xf32, #tpu.memory_space<vmem>>, vector<8x8x128xf32>
      %15 = vector.extract_strided_slice %14 {offsets = [0, 0, 0], sizes = [8, 1, 128], strides = [1, 1, 1]} : vector<8x8x128xf32> to vector<8x1x128xf32>
      %16 = vector.shape_cast %15 : vector<8x1x128xf32> to vector<8x128xf32>
      %cst = arith.constant 0.000000e+00 : f32
      %17 = vector.broadcast %cst : f32 to vector<8x128xf32>
      %18 = arith.maximumf %16, %17 : vector<8x128xf32>
      %19 = arith.addf %arg11, %arg12 : vector<8x128xf32>
      %cst_16 = arith.constant 0.000000e+00 : f32
      %cst_17 = arith.constant 1.000000e+00 : f32
      %20 = vector.broadcast %cst_16 : f32 to vector<8x128xf32>
      %21 = arith.maximumf %20, %19 : vector<8x128xf32>
      %22 = vector.broadcast %cst_17 : f32 to vector<8x128xf32>
      %23 = arith.minimumf %22, %21 : vector<8x128xf32>
      %cst_18 = arith.constant 0.999998986 : f32
      %24 = vector.broadcast %cst_18 : f32 to vector<8x128xf32>
      %25 = arith.cmpf ogt, %23, %24 : vector<8x128xf32>
      %cst_19 = arith.constant 1.00000095 : f32
      %26 = vector.broadcast %cst_19 : f32 to vector<8x128xf32>
      %27 = arith.cmpf olt, %arg13, %26 : vector<8x128xf32>
      %cst_20 = arith.constant 1.000000e+00 : f32
      %28 = vector.broadcast %cst_20 : f32 to vector<8x128xf32>
      %29 = arith.subf %28, %arg13 : vector<8x128xf32>
      %30 = math.exp %29 : vector<8x128xf32>
      %cst_21 = arith.constant 1.000000e+00 : f32
      %31 = vector.broadcast %cst_21 : f32 to vector<8x128xf32>
      %32 = arith.subf %arg13, %31 : vector<8x128xf32>
      %33 = math.exp %32 : vector<8x128xf32>
      %cst_22 = arith.constant 1.000000e-03 : f32
      %34 = vector.broadcast %cst_22 : f32 to vector<8x128xf32>
      %35 = arith.mulf %34, %18 : vector<8x128xf32>
      %36 = arith.mulf %35, %30 : vector<8x128xf32>
      %cst_23 = arith.constant 5.000000e-03 : f32
      %37 = vector.broadcast %cst_23 : f32 to vector<8x128xf32>
      %38 = arith.mulf %37, %33 : vector<8x128xf32>
      %39 = arith.subf %36, %38 : vector<8x128xf32>
      %40 = arith.addf %arg13, %39 : vector<8x128xf32>
      %41 = arith.select %25, %40, %arg13 : vector<8x128xi1>, vector<8x128xf32>
      %cst_24 = arith.constant 1.000000e+00 : f32
      %42 = vector.broadcast %cst_24 : f32 to vector<8x128xf32>
      %43 = arith.maximumf %41, %42 : vector<8x128xf32>
      %cst_25 = arith.constant 4.000000e-01 : f32
      %44 = vector.broadcast %cst_25 : f32 to vector<8x128xf32>
      %45 = arith.mulf %arg12, %44 : vector<8x128xf32>
      %46 = arith.select %27, %45, %arg12 : vector<8x128xi1>, vector<8x128xf32>
      %cst_26 = arith.constant 9.980000e-01 : f32
      %47 = vector.broadcast %cst_26 : f32 to vector<8x128xf32>
      %48 = arith.mulf %arg11, %47 : vector<8x128xf32>
      %49 = arith.select %27, %48, %arg11 : vector<8x128xi1>, vector<8x128xf32>
      %cst_27 = arith.constant 1.000000e+00 : f32
      %50 = vector.broadcast %cst_27 : f32 to vector<8x128xf32>
      %51 = arith.subf %50, %23 : vector<8x128xf32>
      %cst_28 = arith.constant 0.00999999977 : f32
      %52 = vector.broadcast %cst_28 : f32 to vector<8x128xf32>
      %53 = arith.addf %52, %51 : vector<8x128xf32>
      %cst_29 = arith.constant 2.200000e-01 : f32
      %54 = vector.broadcast %cst_29 : f32 to vector<8x128xf32>
      %55 = arith.divf %54, %53 : vector<8x128xf32>
      %56 = arith.mulf %18, %55 : vector<8x128xf32>
      %cst_30 = arith.constant 1.000000e+00 : f32
      %57 = vector.broadcast %cst_30 : f32 to vector<8x128xf32>
      %58 = arith.subf %57, %46 : vector<8x128xf32>
      %59 = arith.subf %58, %49 : vector<8x128xf32>
      %cst_31 = arith.constant 0.000000e+00 : f32
      %60 = vector.broadcast %cst_31 : f32 to vector<8x128xf32>
      %61 = arith.maximumf %60, %56 : vector<8x128xf32>
      %62 = arith.minimumf %59, %61 : vector<8x128xf32>
      %63 = arith.addf %46, %62 : vector<8x128xf32>
      %64 = arith.select %27, %63, %46 : vector<8x128xi1>, vector<8x128xf32>
      %cst_32 = arith.constant 0.00999999977 : f32
      %65 = vector.broadcast %cst_32 : f32 to vector<8x128xf32>
      %66 = arith.mulf %65, %64 : vector<8x128xf32>
      %cst_33 = arith.constant 1.000000e+00 : f32
      %67 = vector.broadcast %cst_33 : f32 to vector<8x128xf32>
      %68 = arith.subf %67, %49 : vector<8x128xf32>
      %69 = arith.minimumf %68, %64 : vector<8x128xf32>
      %cst_34 = arith.constant 0.000000e+00 : f32
      %70 = vector.broadcast %cst_34 : f32 to vector<8x128xf32>
      %71 = arith.maximumf %70, %66 : vector<8x128xf32>
      %72 = arith.minimumf %69, %71 : vector<8x128xf32>
      %cst_35 = arith.constant 0.000000e+00 : f32
      %73 = vector.broadcast %cst_35 : f32 to vector<8x128xf32>
      %74 = arith.select %27, %72, %73 : vector<8x128xi1>, vector<8x128xf32>
      %75 = arith.subf %64, %74 : vector<8x128xf32>
      %76 = arith.addf %49, %74 : vector<8x128xf32>
      %77 = arith.addf %76, %75 : vector<8x128xf32>
      %cst_36 = arith.constant 0.000000e+00 : f32
      %cst_37 = arith.constant 1.000000e+00 : f32
      %78 = vector.broadcast %cst_36 : f32 to vector<8x128xf32>
      %79 = arith.maximumf %78, %77 : vector<8x128xf32>
      %80 = vector.broadcast %cst_37 : f32 to vector<8x128xf32>
      %81 = arith.minimumf %80, %79 : vector<8x128xf32>
      %c0_38 = arith.constant 0 : index
      %c0_39 = arith.constant 0 : index
      %c0_40 = arith.constant 0 : index
      %82 = vector.load %arg8[%c0_38, %c0_39, %c0_40] : memref<8x8x128xf32, #tpu.memory_space<vmem>>, vector<8x1x128xf32>
      %83 = vector.shape_cast %82 : vector<8x1x128xf32> to vector<8x128xf32>
      %84 = vector.shape_cast %81 : vector<8x128xf32> to vector<8x1x128xf32>
      tpu.vector_store %arg8[%c0_38, %c0_39, %c0_40], %84 {strides = array<i32>} : memref<8x8x128xf32, #tpu.memory_space<vmem>>, vector<8x1x128xf32>,
      %c0_41 = arith.constant 0 : index
      %c0_42 = arith.constant 0 : index
      %c0_43 = arith.constant 0 : index
      %85 = vector.load %arg9[%c0_41, %c0_42, %c0_43] : memref<8x8x128xf32, #tpu.memory_space<vmem>>, vector<8x1x128xf32>
      %86 = vector.shape_cast %85 : vector<8x1x128xf32> to vector<8x128xf32>
      %87 = vector.shape_cast %43 : vector<8x128xf32> to vector<8x1x128xf32>
      tpu.vector_store %arg9[%c0_41, %c0_42, %c0_43], %87 {strides = array<i32>} : memref<8x8x128xf32, #tpu.memory_space<vmem>>, vector<8x1x128xf32>,
      %88 = vector.extract_strided_slice %14 {offsets = [0, 1, 0], sizes = [8, 1, 128], strides = [1, 1, 1]} : vector<8x8x128xf32> to vector<8x1x128xf32>
      %89 = vector.shape_cast %88 : vector<8x1x128xf32> to vector<8x128xf32>
      %cst_44 = arith.constant 0.000000e+00 : f32
      %90 = vector.broadcast %cst_44 : f32 to vector<8x128xf32>
      %91 = arith.maximumf %89, %90 : vector<8x128xf32>
      %92 = arith.addf %76, %75 : vector<8x128xf32>
      %cst_45 = arith.constant 0.000000e+00 : f32
      %cst_46 = arith.constant 1.000000e+00 : f32
      %93 = vector.broadcast %cst_45 : f32 to vector<8x128xf32>
      %94 = arith.maximumf %93, %92 : vector<8x128xf32>
      %95 = vector.broadcast %cst_46 : f32 to vector<8x128xf32>
      %96 = arith.minimumf %95, %94 : vector<8x128xf32>
      %cst_47 = arith.constant 0.999998986 : f32
      %97 = vector.broadcast %cst_47 : f32 to vector<8x128xf32>
      %98 = arith.cmpf ogt, %96, %97 : vector<8x128xf32>
      %cst_48 = arith.constant 1.00000095 : f32
      %99 = vector.broadcast %cst_48 : f32 to vector<8x128xf32>
      %100 = arith.cmpf olt, %43, %99 : vector<8x128xf32>
      %cst_49 = arith.constant 1.000000e+00 : f32
      %101 = vector.broadcast %cst_49 : f32 to vector<8x128xf32>
      %102 = arith.subf %101, %43 : vector<8x128xf32>
      %103 = math.exp %102 : vector<8x128xf32>
      %cst_50 = arith.constant 1.000000e+00 : f32
      %104 = vector.broadcast %cst_50 : f32 to vector<8x128xf32>
      %105 = arith.subf %43, %104 : vector<8x128xf32>
      %106 = math.exp %105 : vector<8x128xf32>
      %cst_51 = arith.constant 1.000000e-03 : f32
      %107 = vector.broadcast %cst_51 : f32 to vector<8x128xf32>
      %108 = arith.mulf %107, %91 : vector<8x128xf32>
      %109 = arith.mulf %108, %103 : vector<8x128xf32>
      %cst_52 = arith.constant 5.000000e-03 : f32
      %110 = vector.broadcast %cst_52 : f32 to vector<8x128xf32>
      %111 = arith.mulf %110, %106 : vector<8x128xf32>
      %112 = arith.subf %109, %111 : vector<8x128xf32>
      %113 = arith.addf %43, %112 : vector<8x128xf32>
      %114 = arith.select %98, %113, %43 : vector<8x128xi1>, vector<8x128xf32>
      %cst_53 = arith.constant 1.000000e+00 : f32
      %115 = vector.broadcast %cst_53 : f32 to vector<8x128xf32>
      %116 = arith.maximumf %114, %115 : vector<8x128xf32>
      %cst_54 = arith.constant 4.000000e-01 : f32
      %117 = vector.broadcast %cst_54 : f32 to vector<8x128xf32>
      %118 = arith.mulf %75, %117 : vector<8x128xf32>
      %119 = arith.select %100, %118, %75 : vector<8x128xi1>, vector<8x128xf32>
      %cst_55 = arith.constant 9.980000e-01 : f32
      %120 = vector.broadcast %cst_55 : f32 to vector<8x128xf32>
      %121 = arith.mulf %76, %120 : vector<8x128xf32>
      %122 = arith.select %100, %121, %76 : vector<8x128xi1>, vector<8x128xf32>
      %cst_56 = arith.constant 1.000000e+00 : f32
      %123 = vector.broadcast %cst_56 : f32 to vector<8x128xf32>
      %124 = arith.subf %123, %96 : vector<8x128xf32>
      %cst_57 = arith.constant 0.00999999977 : f32
      %125 = vector.broadcast %cst_57 : f32 to vector<8x128xf32>
      %126 = arith.addf %125, %124 : vector<8x128xf32>
      %cst_58 = arith.constant 2.200000e-01 : f32
      %127 = vector.broadcast %cst_58 : f32 to vector<8x128xf32>
      %128 = arith.divf %127, %126 : vector<8x128xf32>
      %129 = arith.mulf %91, %128 : vector<8x128xf32>
      %cst_59 = arith.constant 1.000000e+00 : f32
      %130 = vector.broadcast %cst_59 : f32 to vector<8x128xf32>
      %131 = arith.subf %130, %119 : vector<8x128xf32>
      %132 = arith.subf %131, %122 : vector<8x128xf32>
      %cst_60 = arith.constant 0.000000e+00 : f32
      %133 = vector.broadcast %cst_60 : f32 to vector<8x128xf32>
      %134 = arith.maximumf %133, %129 : vector<8x128xf32>
      %135 = arith.minimumf %132, %134 : vector<8x128xf32>
      %136 = arith.addf %119, %135 : vector<8x128xf32>
      %137 = arith.select %100, %136, %119 : vector<8x128xi1>, vector<8x128xf32>
      %cst_61 = arith.constant 0.00999999977 : f32
      %138 = vector.broadcast %cst_61 : f32 to vector<8x128xf32>
      %139 = arith.mulf %138, %137 : vector<8x128xf32>
      %cst_62 = arith.constant 1.000000e+00 : f32
      %140 = vector.broadcast %cst_62 : f32 to vector<8x128xf32>
      %141 = arith.subf %140, %122 : vector<8x128xf32>
      %142 = arith.minimumf %141, %137 : vector<8x128xf32>
      %cst_63 = arith.constant 0.000000e+00 : f32
      %143 = vector.broadcast %cst_63 : f32 to vector<8x128xf32>
      %144 = arith.maximumf %143, %139 : vector<8x128xf32>
      %145 = arith.minimumf %142, %144 : vector<8x128xf32>
      %cst_64 = arith.constant 0.000000e+00 : f32
      %146 = vector.broadcast %cst_64 : f32 to vector<8x128xf32>
      %147 = arith.select %100, %145, %146 : vector<8x128xi1>, vector<8x128xf32>
      %148 = arith.subf %137, %147 : vector<8x128xf32>
      %149 = arith.addf %122, %147 : vector<8x128xf32>
      %150 = arith.addf %149, %148 : vector<8x128xf32>
      %cst_65 = arith.constant 0.000000e+00 : f32
      %cst_66 = arith.constant 1.000000e+00 : f32
      %151 = vector.broadcast %cst_65 : f32 to vector<8x128xf32>
      %152 = arith.maximumf %151, %150 : vector<8x128xf32>
      %153 = vector.broadcast %cst_66 : f32 to vector<8x128xf32>
      %154 = arith.minimumf %153, %152 : vector<8x128xf32>
      %c0_67 = arith.constant 0 : index
      %c1 = arith.constant 1 : index
      %c0_68 = arith.constant 0 : index
      %155 = vector.load %arg8[%c0_67, %c1, %c0_68] : memref<8x8x128xf32, #tpu.memory_space<vmem>>, vector<8x1x128xf32>
      %156 = vector.shape_cast %155 : vector<8x1x128xf32> to vector<8x128xf32>
      %157 = vector.shape_cast %154 : vector<8x128xf32> to vector<8x1x128xf32>
      tpu.vector_store %arg8[%c0_67, %c1, %c0_68], %157 {strides = array<i32>} : memref<8x8x128xf32, #tpu.memory_space<vmem>>, vector<8x1x128xf32>,
      %c0_69 = arith.constant 0 : index
      %c1_70 = arith.constant 1 : index
      %c0_71 = arith.constant 0 : index
      %158 = vector.load %arg9[%c0_69, %c1_70, %c0_71] : memref<8x8x128xf32, #tpu.memory_space<vmem>>, vector<8x1x128xf32>
      %159 = vector.shape_cast %158 : vector<8x1x128xf32> to vector<8x128xf32>
      %160 = vector.shape_cast %116 : vector<8x128xf32> to vector<8x1x128xf32>
      tpu.vector_store %arg9[%c0_69, %c1_70, %c0_71], %160 {strides = array<i32>} : memref<8x8x128xf32, #tpu.memory_space<vmem>>, vector<8x1x128xf32>,
      %161 = vector.extract_strided_slice %14 {offsets = [0, 2, 0], sizes = [8, 1, 128], strides = [1, 1, 1]} : vector<8x8x128xf32> to vector<8x1x128xf32>
      %162 = vector.shape_cast %161 : vector<8x1x128xf32> to vector<8x128xf32>
      %cst_72 = arith.constant 0.000000e+00 : f32
      %163 = vector.broadcast %cst_72 : f32 to vector<8x128xf32>
      %164 = arith.maximumf %162, %163 : vector<8x128xf32>
      %165 = arith.addf %149, %148 : vector<8x128xf32>
      %cst_73 = arith.constant 0.000000e+00 : f32
      %cst_74 = arith.constant 1.000000e+00 : f32
      %166 = vector.broadcast %cst_73 : f32 to vector<8x128xf32>
      %167 = arith.maximumf %166, %165 : vector<8x128xf32>
      %168 = vector.broadcast %cst_74 : f32 to vector<8x128xf32>
      %169 = arith.minimumf %168, %167 : vector<8x128xf32>
      %cst_75 = arith.constant 0.999998986 : f32
      %170 = vector.broadcast %cst_75 : f32 to vector<8x128xf32>
      %171 = arith.cmpf ogt, %169, %170 : vector<8x128xf32>
      %cst_76 = arith.constant 1.00000095 : f32
      %172 = vector.broadcast %cst_76 : f32 to vector<8x128xf32>
      %173 = arith.cmpf olt, %116, %172 : vector<8x128xf32>
      %cst_77 = arith.constant 1.000000e+00 : f32
      %174 = vector.broadcast %cst_77 : f32 to vector<8x128xf32>
      %175 = arith.subf %174, %116 : vector<8x128xf32>
      %176 = math.exp %175 : vector<8x128xf32>
      %cst_78 = arith.constant 1.000000e+00 : f32
      %177 = vector.broadcast %cst_78 : f32 to vector<8x128xf32>
      %178 = arith.subf %116, %177 : vector<8x128xf32>
      %179 = math.exp %178 : vector<8x128xf32>
      %cst_79 = arith.constant 1.000000e-03 : f32
      %180 = vector.broadcast %cst_79 : f32 to vector<8x128xf32>
      %181 = arith.mulf %180, %164 : vector<8x128xf32>
      %182 = arith.mulf %181, %176 : vector<8x128xf32>
      %cst_80 = arith.constant 5.000000e-03 : f32
      %183 = vector.broadcast %cst_80 : f32 to vector<8x128xf32>
      %184 = arith.mulf %183, %179 : vector<8x128xf32>
      %185 = arith.subf %182, %184 : vector<8x128xf32>
      %186 = arith.addf %116, %185 : vector<8x128xf32>
      %187 = arith.select %171, %186, %116 : vector<8x128xi1>, vector<8x128xf32>
      %cst_81 = arith.constant 1.000000e+00 : f32
      %188 = vector.broadcast %cst_81 : f32 to vector<8x128xf32>
      %189 = arith.maximumf %187, %188 : vector<8x128xf32>
      %cst_82 = arith.constant 4.000000e-01 : f32
      %190 = vector.broadcast %cst_82 : f32 to vector<8x128xf32>
      %191 = arith.mulf %148, %190 : vector<8x128xf32>
      %192 = arith.select %173, %191, %148 : vector<8x128xi1>, vector<8x128xf32>
      %cst_83 = arith.constant 9.980000e-01 : f32
      %193 = vector.broadcast %cst_83 : f32 to vector<8x128xf32>
      %194 = arith.mulf %149, %193 : vector<8x128xf32>
      %195 = arith.select %173, %194, %149 : vector<8x128xi1>, vector<8x128xf32>
      %cst_84 = arith.constant 1.000000e+00 : f32
      %196 = vector.broadcast %cst_84 : f32 to vector<8x128xf32>
      %197 = arith.subf %196, %169 : vector<8x128xf32>
      %cst_85 = arith.constant 0.00999999977 : f32
      %198 = vector.broadcast %cst_85 : f32 to vector<8x128xf32>
      %199 = arith.addf %198, %197 : vector<8x128xf32>
      %cst_86 = arith.constant 2.200000e-01 : f32
      %200 = vector.broadcast %cst_86 : f32 to vector<8x128xf32>
      %201 = arith.divf %200, %199 : vector<8x128xf32>
      %202 = arith.mulf %164, %201 : vector<8x128xf32>
      %cst_87 = arith.constant 1.000000e+00 : f32
      %203 = vector.broadcast %cst_87 : f32 to vector<8x128xf32>
      %204 = arith.subf %203, %192 : vector<8x128xf32>
      %205 = arith.subf %204, %195 : vector<8x128xf32>
      %cst_88 = arith.constant 0.000000e+00 : f32
      %206 = vector.broadcast %cst_88 : f32 to vector<8x128xf32>
      %207 = arith.maximumf %206, %202 : vector<8x128xf32>
      %208 = arith.minimumf %205, %207 : vector<8x128xf32>
      %209 = arith.addf %192, %208 : vector<8x128xf32>
      %210 = arith.select %173, %209, %192 : vector<8x128xi1>, vector<8x128xf32>
      %cst_89 = arith.constant 0.00999999977 : f32
      %211 = vector.broadcast %cst_89 : f32 to vector<8x128xf32>
      %212 = arith.mulf %211, %210 : vector<8x128xf32>
      %cst_90 = arith.constant 1.000000e+00 : f32
      %213 = vector.broadcast %cst_90 : f32 to vector<8x128xf32>
      %214 = arith.subf %213, %195 : vector<8x128xf32>
      %215 = arith.minimumf %214, %210 : vector<8x128xf32>
      %cst_91 = arith.constant 0.000000e+00 : f32
      %216 = vector.broadcast %cst_91 : f32 to vector<8x128xf32>
      %217 = arith.maximumf %216, %212 : vector<8x128xf32>
      %218 = arith.minimumf %215, %217 : vector<8x128xf32>
      %cst_92 = arith.constant 0.000000e+00 : f32
      %219 = vector.broadcast %cst_92 : f32 to vector<8x128xf32>
      %220 = arith.select %173, %218, %219 : vector<8x128xi1>, vector<8x128xf32>
      %221 = arith.subf %210, %220 : vector<8x128xf32>
      %222 = arith.addf %195, %220 : vector<8x128xf32>
      %223 = arith.addf %222, %221 : vector<8x128xf32>
      %cst_93 = arith.constant 0.000000e+00 : f32
      %cst_94 = arith.constant 1.000000e+00 : f32
      %224 = vector.broadcast %cst_93 : f32 to vector<8x128xf32>
      %225 = arith.maximumf %224, %223 : vector<8x128xf32>
      %226 = vector.broadcast %cst_94 : f32 to vector<8x128xf32>
      %227 = arith.minimumf %226, %225 : vector<8x128xf32>
      %c0_95 = arith.constant 0 : index
      %c2 = arith.constant 2 : index
      %c0_96 = arith.constant 0 : index
      %228 = vector.load %arg8[%c0_95, %c2, %c0_96] : memref<8x8x128xf32, #tpu.memory_space<vmem>>, vector<8x1x128xf32>
      %229 = vector.shape_cast %228 : vector<8x1x128xf32> to vector<8x128xf32>
      %230 = vector.shape_cast %227 : vector<8x128xf32> to vector<8x1x128xf32>
      tpu.vector_store %arg8[%c0_95, %c2, %c0_96], %230 {strides = array<i32>} : memref<8x8x128xf32, #tpu.memory_space<vmem>>, vector<8x1x128xf32>,
      %c0_97 = arith.constant 0 : index
      %c2_98 = arith.constant 2 : index
      %c0_99 = arith.constant 0 : index
      %231 = vector.load %arg9[%c0_97, %c2_98, %c0_99] : memref<8x8x128xf32, #tpu.memory_space<vmem>>, vector<8x1x128xf32>
      %232 = vector.shape_cast %231 : vector<8x1x128xf32> to vector<8x128xf32>
      %233 = vector.shape_cast %189 : vector<8x128xf32> to vector<8x1x128xf32>
      tpu.vector_store %arg9[%c0_97, %c2_98, %c0_99], %233 {strides = array<i32>} : memref<8x8x128xf32, #tpu.memory_space<vmem>>, vector<8x1x128xf32>,
      %234 = vector.extract_strided_slice %14 {offsets = [0, 3, 0], sizes = [8, 1, 128], strides = [1, 1, 1]} : vector<8x8x128xf32> to vector<8x1x128xf32>
      %235 = vector.shape_cast %234 : vector<8x1x128xf32> to vector<8x128xf32>
      %cst_100 = arith.constant 0.000000e+00 : f32
      %236 = vector.broadcast %cst_100 : f32 to vector<8x128xf32>
      %237 = arith.maximumf %235, %236 : vector<8x128xf32>
      %238 = arith.addf %222, %221 : vector<8x128xf32>
      %cst_101 = arith.constant 0.000000e+00 : f32
      %cst_102 = arith.constant 1.000000e+00 : f32
      %239 = vector.broadcast %cst_101 : f32 to vector<8x128xf32>
      %240 = arith.maximumf %239, %238 : vector<8x128xf32>
      %241 = vector.broadcast %cst_102 : f32 to vector<8x128xf32>
      %242 = arith.minimumf %241, %240 : vector<8x128xf32>
      %cst_103 = arith.constant 0.999998986 : f32
      %243 = vector.broadcast %cst_103 : f32 to vector<8x128xf32>
      %244 = arith.cmpf ogt, %242, %243 : vector<8x128xf32>
      %cst_104 = arith.constant 1.00000095 : f32
      %245 = vector.broadcast %cst_104 : f32 to vector<8x128xf32>
      %246 = arith.cmpf olt, %189, %245 : vector<8x128xf32>
      %cst_105 = arith.constant 1.000000e+00 : f32
      %247 = vector.broadcast %cst_105 : f32 to vector<8x128xf32>
      %248 = arith.subf %247, %189 : vector<8x128xf32>
      %249 = math.exp %248 : vector<8x128xf32>
      %cst_106 = arith.constant 1.000000e+00 : f32
      %250 = vector.broadcast %cst_106 : f32 to vector<8x128xf32>
      %251 = arith.subf %189, %250 : vector<8x128xf32>
      %252 = math.exp %251 : vector<8x128xf32>
      %cst_107 = arith.constant 1.000000e-03 : f32
      %253 = vector.broadcast %cst_107 : f32 to vector<8x128xf32>
      %254 = arith.mulf %253, %237 : vector<8x128xf32>
      %255 = arith.mulf %254, %249 : vector<8x128xf32>
      %cst_108 = arith.constant 5.000000e-03 : f32
      %256 = vector.broadcast %cst_108 : f32 to vector<8x128xf32>
      %257 = arith.mulf %256, %252 : vector<8x128xf32>
      %258 = arith.subf %255, %257 : vector<8x128xf32>
      %259 = arith.addf %189, %258 : vector<8x128xf32>
      %260 = arith.select %244, %259, %189 : vector<8x128xi1>, vector<8x128xf32>
      %cst_109 = arith.constant 1.000000e+00 : f32
      %261 = vector.broadcast %cst_109 : f32 to vector<8x128xf32>
      %262 = arith.maximumf %260, %261 : vector<8x128xf32>
      %cst_110 = arith.constant 4.000000e-01 : f32
      %263 = vector.broadcast %cst_110 : f32 to vector<8x128xf32>
      %264 = arith.mulf %221, %263 : vector<8x128xf32>
      %265 = arith.select %246, %264, %221 : vector<8x128xi1>, vector<8x128xf32>
      %cst_111 = arith.constant 9.980000e-01 : f32
      %266 = vector.broadcast %cst_111 : f32 to vector<8x128xf32>
      %267 = arith.mulf %222, %266 : vector<8x128xf32>
      %268 = arith.select %246, %267, %222 : vector<8x128xi1>, vector<8x128xf32>
      %cst_112 = arith.constant 1.000000e+00 : f32
      %269 = vector.broadcast %cst_112 : f32 to vector<8x128xf32>
      %270 = arith.subf %269, %242 : vector<8x128xf32>
      %cst_113 = arith.constant 0.00999999977 : f32
      %271 = vector.broadcast %cst_113 : f32 to vector<8x128xf32>
      %272 = arith.addf %271, %270 : vector<8x128xf32>
      %cst_114 = arith.constant 2.200000e-01 : f32
      %273 = vector.broadcast %cst_114 : f32 to vector<8x128xf32>
      %274 = arith.divf %273, %272 : vector<8x128xf32>
      %275 = arith.mulf %237, %274 : vector<8x128xf32>
      %cst_115 = arith.constant 1.000000e+00 : f32
      %276 = vector.broadcast %cst_115 : f32 to vector<8x128xf32>
      %277 = arith.subf %276, %265 : vector<8x128xf32>
      %278 = arith.subf %277, %268 : vector<8x128xf32>
      %cst_116 = arith.constant 0.000000e+00 : f32
      %279 = vector.broadcast %cst_116 : f32 to vector<8x128xf32>
      %280 = arith.maximumf %279, %275 : vector<8x128xf32>
      %281 = arith.minimumf %278, %280 : vector<8x128xf32>
      %282 = arith.addf %265, %281 : vector<8x128xf32>
      %283 = arith.select %246, %282, %265 : vector<8x128xi1>, vector<8x128xf32>
      %cst_117 = arith.constant 0.00999999977 : f32
      %284 = vector.broadcast %cst_117 : f32 to vector<8x128xf32>
      %285 = arith.mulf %284, %283 : vector<8x128xf32>
      %cst_118 = arith.constant 1.000000e+00 : f32
      %286 = vector.broadcast %cst_118 : f32 to vector<8x128xf32>
      %287 = arith.subf %286, %268 : vector<8x128xf32>
      %288 = arith.minimumf %287, %283 : vector<8x128xf32>
      %cst_119 = arith.constant 0.000000e+00 : f32
      %289 = vector.broadcast %cst_119 : f32 to vector<8x128xf32>
      %290 = arith.maximumf %289, %285 : vector<8x128xf32>
      %291 = arith.minimumf %288, %290 : vector<8x128xf32>
      %cst_120 = arith.constant 0.000000e+00 : f32
      %292 = vector.broadcast %cst_120 : f32 to vector<8x128xf32>
      %293 = arith.select %246, %291, %292 : vector<8x128xi1>, vector<8x128xf32>
      %294 = arith.subf %283, %293 : vector<8x128xf32>
      %295 = arith.addf %268, %293 : vector<8x128xf32>
      %296 = arith.addf %295, %294 : vector<8x128xf32>
      %cst_121 = arith.constant 0.000000e+00 : f32
      %cst_122 = arith.constant 1.000000e+00 : f32
      %297 = vector.broadcast %cst_121 : f32 to vector<8x128xf32>
      %298 = arith.maximumf %297, %296 : vector<8x128xf32>
      %299 = vector.broadcast %cst_122 : f32 to vector<8x128xf32>
      %300 = arith.minimumf %299, %298 : vector<8x128xf32>
      %c0_123 = arith.constant 0 : index
      %c3 = arith.constant 3 : index
      %c0_124 = arith.constant 0 : index
      %301 = vector.load %arg8[%c0_123, %c3, %c0_124] : memref<8x8x128xf32, #tpu.memory_space<vmem>>, vector<8x1x128xf32>
      %302 = vector.shape_cast %301 : vector<8x1x128xf32> to vector<8x128xf32>
      %303 = vector.shape_cast %300 : vector<8x128xf32> to vector<8x1x128xf32>
      tpu.vector_store %arg8[%c0_123, %c3, %c0_124], %303 {strides = array<i32>} : memref<8x8x128xf32, #tpu.memory_space<vmem>>, vector<8x1x128xf32>,
      %c0_125 = arith.constant 0 : index
      %c3_126 = arith.constant 3 : index
      %c0_127 = arith.constant 0 : index
      %304 = vector.load %arg9[%c0_125, %c3_126, %c0_127] : memref<8x8x128xf32, #tpu.memory_space<vmem>>, vector<8x1x128xf32>
      %305 = vector.shape_cast %304 : vector<8x1x128xf32> to vector<8x128xf32>
      %306 = vector.shape_cast %262 : vector<8x128xf32> to vector<8x1x128xf32>
      tpu.vector_store %arg9[%c0_125, %c3_126, %c0_127], %306 {strides = array<i32>} : memref<8x8x128xf32, #tpu.memory_space<vmem>>, vector<8x1x128xf32>,
      %307 = vector.extract_strided_slice %14 {offsets = [0, 4, 0], sizes = [8, 1, 128], strides = [1, 1, 1]} : vector<8x8x128xf32> to vector<8x1x128xf32>
      %308 = vector.shape_cast %307 : vector<8x1x128xf32> to vector<8x128xf32>
      %cst_128 = arith.constant 0.000000e+00 : f32
      %309 = vector.broadcast %cst_128 : f32 to vector<8x128xf32>
      %310 = arith.maximumf %308, %309 : vector<8x128xf32>
      %311 = arith.addf %295, %294 : vector<8x128xf32>
      %cst_129 = arith.constant 0.000000e+00 : f32
      %cst_130 = arith.constant 1.000000e+00 : f32
      %312 = vector.broadcast %cst_129 : f32 to vector<8x128xf32>
      %313 = arith.maximumf %312, %311 : vector<8x128xf32>
      %314 = vector.broadcast %cst_130 : f32 to vector<8x128xf32>
      %315 = arith.minimumf %314, %313 : vector<8x128xf32>
      %cst_131 = arith.constant 0.999998986 : f32
      %316 = vector.broadcast %cst_131 : f32 to vector<8x128xf32>
      %317 = arith.cmpf ogt, %315, %316 : vector<8x128xf32>
      %cst_132 = arith.constant 1.00000095 : f32
      %318 = vector.broadcast %cst_132 : f32 to vector<8x128xf32>
      %319 = arith.cmpf olt, %262, %318 : vector<8x128xf32>
      %cst_133 = arith.constant 1.000000e+00 : f32
      %320 = vector.broadcast %cst_133 : f32 to vector<8x128xf32>
      %321 = arith.subf %320, %262 : vector<8x128xf32>
      %322 = math.exp %321 : vector<8x128xf32>
      %cst_134 = arith.constant 1.000000e+00 : f32
      %323 = vector.broadcast %cst_134 : f32 to vector<8x128xf32>
      %324 = arith.subf %262, %323 : vector<8x128xf32>
      %325 = math.exp %324 : vector<8x128xf32>
      %cst_135 = arith.constant 1.000000e-03 : f32
      %326 = vector.broadcast %cst_135 : f32 to vector<8x128xf32>
      %327 = arith.mulf %326, %310 : vector<8x128xf32>
      %328 = arith.mulf %327, %322 : vector<8x128xf32>
      %cst_136 = arith.constant 5.000000e-03 : f32
      %329 = vector.broadcast %cst_136 : f32 to vector<8x128xf32>
      %330 = arith.mulf %329, %325 : vector<8x128xf32>
      %331 = arith.subf %328, %330 : vector<8x128xf32>
      %332 = arith.addf %262, %331 : vector<8x128xf32>
      %333 = arith.select %317, %332, %262 : vector<8x128xi1>, vector<8x128xf32>
      %cst_137 = arith.constant 1.000000e+00 : f32
      %334 = vector.broadcast %cst_137 : f32 to vector<8x128xf32>
      %335 = arith.maximumf %333, %334 : vector<8x128xf32>
      %cst_138 = arith.constant 4.000000e-01 : f32
      %336 = vector.broadcast %cst_138 : f32 to vector<8x128xf32>
      %337 = arith.mulf %294, %336 : vector<8x128xf32>
      %338 = arith.select %319, %337, %294 : vector<8x128xi1>, vector<8x128xf32>
      %cst_139 = arith.constant 9.980000e-01 : f32
      %339 = vector.broadcast %cst_139 : f32 to vector<8x128xf32>
      %340 = arith.mulf %295, %339 : vector<8x128xf32>
      %341 = arith.select %319, %340, %295 : vector<8x128xi1>, vector<8x128xf32>
      %cst_140 = arith.constant 1.000000e+00 : f32
      %342 = vector.broadcast %cst_140 : f32 to vector<8x128xf32>
      %343 = arith.subf %342, %315 : vector<8x128xf32>
      %cst_141 = arith.constant 0.00999999977 : f32
      %344 = vector.broadcast %cst_141 : f32 to vector<8x128xf32>
      %345 = arith.addf %344, %343 : vector<8x128xf32>
      %cst_142 = arith.constant 2.200000e-01 : f32
      %346 = vector.broadcast %cst_142 : f32 to vector<8x128xf32>
      %347 = arith.divf %346, %345 : vector<8x128xf32>
      %348 = arith.mulf %310, %347 : vector<8x128xf32>
      %cst_143 = arith.constant 1.000000e+00 : f32
      %349 = vector.broadcast %cst_143 : f32 to vector<8x128xf32>
      %350 = arith.subf %349, %338 : vector<8x128xf32>
      %351 = arith.subf %350, %341 : vector<8x128xf32>
      %cst_144 = arith.constant 0.000000e+00 : f32
      %352 = vector.broadcast %cst_144 : f32 to vector<8x128xf32>
      %353 = arith.maximumf %352, %348 : vector<8x128xf32>
      %354 = arith.minimumf %351, %353 : vector<8x128xf32>
      %355 = arith.addf %338, %354 : vector<8x128xf32>
      %356 = arith.select %319, %355, %338 : vector<8x128xi1>, vector<8x128xf32>
      %cst_145 = arith.constant 0.00999999977 : f32
      %357 = vector.broadcast %cst_145 : f32 to vector<8x128xf32>
      %358 = arith.mulf %357, %356 : vector<8x128xf32>
      %cst_146 = arith.constant 1.000000e+00 : f32
      %359 = vector.broadcast %cst_146 : f32 to vector<8x128xf32>
      %360 = arith.subf %359, %341 : vector<8x128xf32>
      %361 = arith.minimumf %360, %356 : vector<8x128xf32>
      %cst_147 = arith.constant 0.000000e+00 : f32
      %362 = vector.broadcast %cst_147 : f32 to vector<8x128xf32>
      %363 = arith.maximumf %362, %358 : vector<8x128xf32>
      %364 = arith.minimumf %361, %363 : vector<8x128xf32>
      %cst_148 = arith.constant 0.000000e+00 : f32
      %365 = vector.broadcast %cst_148 : f32 to vector<8x128xf32>
      %366 = arith.select %319, %364, %365 : vector<8x128xi1>, vector<8x128xf32>
      %367 = arith.subf %356, %366 : vector<8x128xf32>
      %368 = arith.addf %341, %366 : vector<8x128xf32>
      %369 = arith.addf %368, %367 : vector<8x128xf32>
      %cst_149 = arith.constant 0.000000e+00 : f32
      %cst_150 = arith.constant 1.000000e+00 : f32
      %370 = vector.broadcast %cst_149 : f32 to vector<8x128xf32>
      %371 = arith.maximumf %370, %369 : vector<8x128xf32>
      %372 = vector.broadcast %cst_150 : f32 to vector<8x128xf32>
      %373 = arith.minimumf %372, %371 : vector<8x128xf32>
      %c0_151 = arith.constant 0 : index
      %c4 = arith.constant 4 : index
      %c0_152 = arith.constant 0 : index
      %374 = vector.load %arg8[%c0_151, %c4, %c0_152] : memref<8x8x128xf32, #tpu.memory_space<vmem>>, vector<8x1x128xf32>
      %375 = vector.shape_cast %374 : vector<8x1x128xf32> to vector<8x128xf32>
      %376 = vector.shape_cast %373 : vector<8x128xf32> to vector<8x1x128xf32>
      tpu.vector_store %arg8[%c0_151, %c4, %c0_152], %376 {strides = array<i32>} : memref<8x8x128xf32, #tpu.memory_space<vmem>>, vector<8x1x128xf32>,
      %c0_153 = arith.constant 0 : index
      %c4_154 = arith.constant 4 : index
      %c0_155 = arith.constant 0 : index
      %377 = vector.load %arg9[%c0_153, %c4_154, %c0_155] : memref<8x8x128xf32, #tpu.memory_space<vmem>>, vector<8x1x128xf32>
      %378 = vector.shape_cast %377 : vector<8x1x128xf32> to vector<8x128xf32>
      %379 = vector.shape_cast %335 : vector<8x128xf32> to vector<8x1x128xf32>
      tpu.vector_store %arg9[%c0_153, %c4_154, %c0_155], %379 {strides = array<i32>} : memref<8x8x128xf32, #tpu.memory_space<vmem>>, vector<8x1x128xf32>,
      %380 = vector.extract_strided_slice %14 {offsets = [0, 5, 0], sizes = [8, 1, 128], strides = [1, 1, 1]} : vector<8x8x128xf32> to vector<8x1x128xf32>
      %381 = vector.shape_cast %380 : vector<8x1x128xf32> to vector<8x128xf32>
      %cst_156 = arith.constant 0.000000e+00 : f32
      %382 = vector.broadcast %cst_156 : f32 to vector<8x128xf32>
      %383 = arith.maximumf %381, %382 : vector<8x128xf32>
      %384 = arith.addf %368, %367 : vector<8x128xf32>
      %cst_157 = arith.constant 0.000000e+00 : f32
      %cst_158 = arith.constant 1.000000e+00 : f32
      %385 = vector.broadcast %cst_157 : f32 to vector<8x128xf32>
      %386 = arith.maximumf %385, %384 : vector<8x128xf32>
      %387 = vector.broadcast %cst_158 : f32 to vector<8x128xf32>
      %388 = arith.minimumf %387, %386 : vector<8x128xf32>
      %cst_159 = arith.constant 0.999998986 : f32
      %389 = vector.broadcast %cst_159 : f32 to vector<8x128xf32>
      %390 = arith.cmpf ogt, %388, %389 : vector<8x128xf32>
      %cst_160 = arith.constant 1.00000095 : f32
      %391 = vector.broadcast %cst_160 : f32 to vector<8x128xf32>
      %392 = arith.cmpf olt, %335, %391 : vector<8x128xf32>
      %cst_161 = arith.constant 1.000000e+00 : f32
      %393 = vector.broadcast %cst_161 : f32 to vector<8x128xf32>
      %394 = arith.subf %393, %335 : vector<8x128xf32>
      %395 = math.exp %394 : vector<8x128xf32>
      %cst_162 = arith.constant 1.000000e+00 : f32
      %396 = vector.broadcast %cst_162 : f32 to vector<8x128xf32>
      %397 = arith.subf %335, %396 : vector<8x128xf32>
      %398 = math.exp %397 : vector<8x128xf32>
      %cst_163 = arith.constant 1.000000e-03 : f32
      %399 = vector.broadcast %cst_163 : f32 to vector<8x128xf32>
      %400 = arith.mulf %399, %383 : vector<8x128xf32>
      %401 = arith.mulf %400, %395 : vector<8x128xf32>
      %cst_164 = arith.constant 5.000000e-03 : f32
      %402 = vector.broadcast %cst_164 : f32 to vector<8x128xf32>
      %403 = arith.mulf %402, %398 : vector<8x128xf32>
      %404 = arith.subf %401, %403 : vector<8x128xf32>
      %405 = arith.addf %335, %404 : vector<8x128xf32>
      %406 = arith.select %390, %405, %335 : vector<8x128xi1>, vector<8x128xf32>
      %cst_165 = arith.constant 1.000000e+00 : f32
      %407 = vector.broadcast %cst_165 : f32 to vector<8x128xf32>
      %408 = arith.maximumf %406, %407 : vector<8x128xf32>
      %cst_166 = arith.constant 4.000000e-01 : f32
      %409 = vector.broadcast %cst_166 : f32 to vector<8x128xf32>
      %410 = arith.mulf %367, %409 : vector<8x128xf32>
      %411 = arith.select %392, %410, %367 : vector<8x128xi1>, vector<8x128xf32>
      %cst_167 = arith.constant 9.980000e-01 : f32
      %412 = vector.broadcast %cst_167 : f32 to vector<8x128xf32>
      %413 = arith.mulf %368, %412 : vector<8x128xf32>
      %414 = arith.select %392, %413, %368 : vector<8x128xi1>, vector<8x128xf32>
      %cst_168 = arith.constant 1.000000e+00 : f32
      %415 = vector.broadcast %cst_168 : f32 to vector<8x128xf32>
      %416 = arith.subf %415, %388 : vector<8x128xf32>
      %cst_169 = arith.constant 0.00999999977 : f32
      %417 = vector.broadcast %cst_169 : f32 to vector<8x128xf32>
      %418 = arith.addf %417, %416 : vector<8x128xf32>
      %cst_170 = arith.constant 2.200000e-01 : f32
      %419 = vector.broadcast %cst_170 : f32 to vector<8x128xf32>
      %420 = arith.divf %419, %418 : vector<8x128xf32>
      %421 = arith.mulf %383, %420 : vector<8x128xf32>
      %cst_171 = arith.constant 1.000000e+00 : f32
      %422 = vector.broadcast %cst_171 : f32 to vector<8x128xf32>
      %423 = arith.subf %422, %411 : vector<8x128xf32>
      %424 = arith.subf %423, %414 : vector<8x128xf32>
      %cst_172 = arith.constant 0.000000e+00 : f32
      %425 = vector.broadcast %cst_172 : f32 to vector<8x128xf32>
      %426 = arith.maximumf %425, %421 : vector<8x128xf32>
      %427 = arith.minimumf %424, %426 : vector<8x128xf32>
      %428 = arith.addf %411, %427 : vector<8x128xf32>
      %429 = arith.select %392, %428, %411 : vector<8x128xi1>, vector<8x128xf32>
      %cst_173 = arith.constant 0.00999999977 : f32
      %430 = vector.broadcast %cst_173 : f32 to vector<8x128xf32>
      %431 = arith.mulf %430, %429 : vector<8x128xf32>
      %cst_174 = arith.constant 1.000000e+00 : f32
      %432 = vector.broadcast %cst_174 : f32 to vector<8x128xf32>
      %433 = arith.subf %432, %414 : vector<8x128xf32>
      %434 = arith.minimumf %433, %429 : vector<8x128xf32>
      %cst_175 = arith.constant 0.000000e+00 : f32
      %435 = vector.broadcast %cst_175 : f32 to vector<8x128xf32>
      %436 = arith.maximumf %435, %431 : vector<8x128xf32>
      %437 = arith.minimumf %434, %436 : vector<8x128xf32>
      %cst_176 = arith.constant 0.000000e+00 : f32
      %438 = vector.broadcast %cst_176 : f32 to vector<8x128xf32>
      %439 = arith.select %392, %437, %438 : vector<8x128xi1>, vector<8x128xf32>
      %440 = arith.subf %429, %439 : vector<8x128xf32>
      %441 = arith.addf %414, %439 : vector<8x128xf32>
      %442 = arith.addf %441, %440 : vector<8x128xf32>
      %cst_177 = arith.constant 0.000000e+00 : f32
      %cst_178 = arith.constant 1.000000e+00 : f32
      %443 = vector.broadcast %cst_177 : f32 to vector<8x128xf32>
      %444 = arith.maximumf %443, %442 : vector<8x128xf32>
      %445 = vector.broadcast %cst_178 : f32 to vector<8x128xf32>
      %446 = arith.minimumf %445, %444 : vector<8x128xf32>
      %c0_179 = arith.constant 0 : index
      %c5 = arith.constant 5 : index
      %c0_180 = arith.constant 0 : index
      %447 = vector.load %arg8[%c0_179, %c5, %c0_180] : memref<8x8x128xf32, #tpu.memory_space<vmem>>, vector<8x1x128xf32>
      %448 = vector.shape_cast %447 : vector<8x1x128xf32> to vector<8x128xf32>
      %449 = vector.shape_cast %446 : vector<8x128xf32> to vector<8x1x128xf32>
      tpu.vector_store %arg8[%c0_179, %c5, %c0_180], %449 {strides = array<i32>} : memref<8x8x128xf32, #tpu.memory_space<vmem>>, vector<8x1x128xf32>,
      %c0_181 = arith.constant 0 : index
      %c5_182 = arith.constant 5 : index
      %c0_183 = arith.constant 0 : index
      %450 = vector.load %arg9[%c0_181, %c5_182, %c0_183] : memref<8x8x128xf32, #tpu.memory_space<vmem>>, vector<8x1x128xf32>
      %451 = vector.shape_cast %450 : vector<8x1x128xf32> to vector<8x128xf32>
      %452 = vector.shape_cast %408 : vector<8x128xf32> to vector<8x1x128xf32>
      tpu.vector_store %arg9[%c0_181, %c5_182, %c0_183], %452 {strides = array<i32>} : memref<8x8x128xf32, #tpu.memory_space<vmem>>, vector<8x1x128xf32>,
      %453 = vector.extract_strided_slice %14 {offsets = [0, 6, 0], sizes = [8, 1, 128], strides = [1, 1, 1]} : vector<8x8x128xf32> to vector<8x1x128xf32>
      %454 = vector.shape_cast %453 : vector<8x1x128xf32> to vector<8x128xf32>
      %cst_184 = arith.constant 0.000000e+00 : f32
      %455 = vector.broadcast %cst_184 : f32 to vector<8x128xf32>
      %456 = arith.maximumf %454, %455 : vector<8x128xf32>
      %457 = arith.addf %441, %440 : vector<8x128xf32>
      %cst_185 = arith.constant 0.000000e+00 : f32
      %cst_186 = arith.constant 1.000000e+00 : f32
      %458 = vector.broadcast %cst_185 : f32 to vector<8x128xf32>
      %459 = arith.maximumf %458, %457 : vector<8x128xf32>
      %460 = vector.broadcast %cst_186 : f32 to vector<8x128xf32>
      %461 = arith.minimumf %460, %459 : vector<8x128xf32>
      %cst_187 = arith.constant 0.999998986 : f32
      %462 = vector.broadcast %cst_187 : f32 to vector<8x128xf32>
      %463 = arith.cmpf ogt, %461, %462 : vector<8x128xf32>
      %cst_188 = arith.constant 1.00000095 : f32
      %464 = vector.broadcast %cst_188 : f32 to vector<8x128xf32>
      %465 = arith.cmpf olt, %408, %464 : vector<8x128xf32>
      %cst_189 = arith.constant 1.000000e+00 : f32
      %466 = vector.broadcast %cst_189 : f32 to vector<8x128xf32>
      %467 = arith.subf %466, %408 : vector<8x128xf32>
      %468 = math.exp %467 : vector<8x128xf32>
      %cst_190 = arith.constant 1.000000e+00 : f32
      %469 = vector.broadcast %cst_190 : f32 to vector<8x128xf32>
      %470 = arith.subf %408, %469 : vector<8x128xf32>
      %471 = math.exp %470 : vector<8x128xf32>
      %cst_191 = arith.constant 1.000000e-03 : f32
      %472 = vector.broadcast %cst_191 : f32 to vector<8x128xf32>
      %473 = arith.mulf %472, %456 : vector<8x128xf32>
      %474 = arith.mulf %473, %468 : vector<8x128xf32>
      %cst_192 = arith.constant 5.000000e-03 : f32
      %475 = vector.broadcast %cst_192 : f32 to vector<8x128xf32>
      %476 = arith.mulf %475, %471 : vector<8x128xf32>
      %477 = arith.subf %474, %476 : vector<8x128xf32>
      %478 = arith.addf %408, %477 : vector<8x128xf32>
      %479 = arith.select %463, %478, %408 : vector<8x128xi1>, vector<8x128xf32>
      %cst_193 = arith.constant 1.000000e+00 : f32
      %480 = vector.broadcast %cst_193 : f32 to vector<8x128xf32>
      %481 = arith.maximumf %479, %480 : vector<8x128xf32>
      %cst_194 = arith.constant 4.000000e-01 : f32
      %482 = vector.broadcast %cst_194 : f32 to vector<8x128xf32>
      %483 = arith.mulf %440, %482 : vector<8x128xf32>
      %484 = arith.select %465, %483, %440 : vector<8x128xi1>, vector<8x128xf32>
      %cst_195 = arith.constant 9.980000e-01 : f32
      %485 = vector.broadcast %cst_195 : f32 to vector<8x128xf32>
      %486 = arith.mulf %441, %485 : vector<8x128xf32>
      %487 = arith.select %465, %486, %441 : vector<8x128xi1>, vector<8x128xf32>
      %cst_196 = arith.constant 1.000000e+00 : f32
      %488 = vector.broadcast %cst_196 : f32 to vector<8x128xf32>
      %489 = arith.subf %488, %461 : vector<8x128xf32>
      %cst_197 = arith.constant 0.00999999977 : f32
      %490 = vector.broadcast %cst_197 : f32 to vector<8x128xf32>
      %491 = arith.addf %490, %489 : vector<8x128xf32>
      %cst_198 = arith.constant 2.200000e-01 : f32
      %492 = vector.broadcast %cst_198 : f32 to vector<8x128xf32>
      %493 = arith.divf %492, %491 : vector<8x128xf32>
      %494 = arith.mulf %456, %493 : vector<8x128xf32>
      %cst_199 = arith.constant 1.000000e+00 : f32
      %495 = vector.broadcast %cst_199 : f32 to vector<8x128xf32>
      %496 = arith.subf %495, %484 : vector<8x128xf32>
      %497 = arith.subf %496, %487 : vector<8x128xf32>
      %cst_200 = arith.constant 0.000000e+00 : f32
      %498 = vector.broadcast %cst_200 : f32 to vector<8x128xf32>
      %499 = arith.maximumf %498, %494 : vector<8x128xf32>
      %500 = arith.minimumf %497, %499 : vector<8x128xf32>
      %501 = arith.addf %484, %500 : vector<8x128xf32>
      %502 = arith.select %465, %501, %484 : vector<8x128xi1>, vector<8x128xf32>
      %cst_201 = arith.constant 0.00999999977 : f32
      %503 = vector.broadcast %cst_201 : f32 to vector<8x128xf32>
      %504 = arith.mulf %503, %502 : vector<8x128xf32>
      %cst_202 = arith.constant 1.000000e+00 : f32
      %505 = vector.broadcast %cst_202 : f32 to vector<8x128xf32>
      %506 = arith.subf %505, %487 : vector<8x128xf32>
      %507 = arith.minimumf %506, %502 : vector<8x128xf32>
      %cst_203 = arith.constant 0.000000e+00 : f32
      %508 = vector.broadcast %cst_203 : f32 to vector<8x128xf32>
      %509 = arith.maximumf %508, %504 : vector<8x128xf32>
      %510 = arith.minimumf %507, %509 : vector<8x128xf32>
      %cst_204 = arith.constant 0.000000e+00 : f32
      %511 = vector.broadcast %cst_204 : f32 to vector<8x128xf32>
      %512 = arith.select %465, %510, %511 : vector<8x128xi1>, vector<8x128xf32>
      %513 = arith.subf %502, %512 : vector<8x128xf32>
      %514 = arith.addf %487, %512 : vector<8x128xf32>
      %515 = arith.addf %514, %513 : vector<8x128xf32>
      %cst_205 = arith.constant 0.000000e+00 : f32
      %cst_206 = arith.constant 1.000000e+00 : f32
      %516 = vector.broadcast %cst_205 : f32 to vector<8x128xf32>
      %517 = arith.maximumf %516, %515 : vector<8x128xf32>
      %518 = vector.broadcast %cst_206 : f32 to vector<8x128xf32>
      %519 = arith.minimumf %518, %517 : vector<8x128xf32>
      %c0_207 = arith.constant 0 : index
      %c6 = arith.constant 6 : index
      %c0_208 = arith.constant 0 : index
      %520 = vector.load %arg8[%c0_207, %c6, %c0_208] : memref<8x8x128xf32, #tpu.memory_space<vmem>>, vector<8x1x128xf32>
      %521 = vector.shape_cast %520 : vector<8x1x128xf32> to vector<8x128xf32>
      %522 = vector.shape_cast %519 : vector<8x128xf32> to vector<8x1x128xf32>
      tpu.vector_store %arg8[%c0_207, %c6, %c0_208], %522 {strides = array<i32>} : memref<8x8x128xf32, #tpu.memory_space<vmem>>, vector<8x1x128xf32>,
      %c0_209 = arith.constant 0 : index
      %c6_210 = arith.constant 6 : index
      %c0_211 = arith.constant 0 : index
      %523 = vector.load %arg9[%c0_209, %c6_210, %c0_211] : memref<8x8x128xf32, #tpu.memory_space<vmem>>, vector<8x1x128xf32>
      %524 = vector.shape_cast %523 : vector<8x1x128xf32> to vector<8x128xf32>
      %525 = vector.shape_cast %481 : vector<8x128xf32> to vector<8x1x128xf32>
      tpu.vector_store %arg9[%c0_209, %c6_210, %c0_211], %525 {strides = array<i32>} : memref<8x8x128xf32, #tpu.memory_space<vmem>>, vector<8x1x128xf32>,
      %526 = vector.extract_strided_slice %14 {offsets = [0, 7, 0], sizes = [8, 1, 128], strides = [1, 1, 1]} : vector<8x8x128xf32> to vector<8x1x128xf32>
      %527 = vector.shape_cast %526 : vector<8x1x128xf32> to vector<8x128xf32>
      %cst_212 = arith.constant 0.000000e+00 : f32
      %528 = vector.broadcast %cst_212 : f32 to vector<8x128xf32>
      %529 = arith.maximumf %527, %528 : vector<8x128xf32>
      %530 = arith.addf %514, %513 : vector<8x128xf32>
      %cst_213 = arith.constant 0.000000e+00 : f32
      %cst_214 = arith.constant 1.000000e+00 : f32
      %531 = vector.broadcast %cst_213 : f32 to vector<8x128xf32>
      %532 = arith.maximumf %531, %530 : vector<8x128xf32>
      %533 = vector.broadcast %cst_214 : f32 to vector<8x128xf32>
      %534 = arith.minimumf %533, %532 : vector<8x128xf32>
      %cst_215 = arith.constant 0.999998986 : f32
      %535 = vector.broadcast %cst_215 : f32 to vector<8x128xf32>
      %536 = arith.cmpf ogt, %534, %535 : vector<8x128xf32>
      %cst_216 = arith.constant 1.00000095 : f32
      %537 = vector.broadcast %cst_216 : f32 to vector<8x128xf32>
      %538 = arith.cmpf olt, %481, %537 : vector<8x128xf32>
      %cst_217 = arith.constant 1.000000e+00 : f32
      %539 = vector.broadcast %cst_217 : f32 to vector<8x128xf32>
      %540 = arith.subf %539, %481 : vector<8x128xf32>
      %541 = math.exp %540 : vector<8x128xf32>
      %cst_218 = arith.constant 1.000000e+00 : f32
      %542 = vector.broadcast %cst_218 : f32 to vector<8x128xf32>
      %543 = arith.subf %481, %542 : vector<8x128xf32>
      %544 = math.exp %543 : vector<8x128xf32>
      %cst_219 = arith.constant 1.000000e-03 : f32
      %545 = vector.broadcast %cst_219 : f32 to vector<8x128xf32>
      %546 = arith.mulf %545, %529 : vector<8x128xf32>
      %547 = arith.mulf %546, %541 : vector<8x128xf32>
      %cst_220 = arith.constant 5.000000e-03 : f32
      %548 = vector.broadcast %cst_220 : f32 to vector<8x128xf32>
      %549 = arith.mulf %548, %544 : vector<8x128xf32>
      %550 = arith.subf %547, %549 : vector<8x128xf32>
      %551 = arith.addf %481, %550 : vector<8x128xf32>
      %552 = arith.select %536, %551, %481 : vector<8x128xi1>, vector<8x128xf32>
      %cst_221 = arith.constant 1.000000e+00 : f32
      %553 = vector.broadcast %cst_221 : f32 to vector<8x128xf32>
      %554 = arith.maximumf %552, %553 : vector<8x128xf32>
      %cst_222 = arith.constant 4.000000e-01 : f32
      %555 = vector.broadcast %cst_222 : f32 to vector<8x128xf32>
      %556 = arith.mulf %513, %555 : vector<8x128xf32>
      %557 = arith.select %538, %556, %513 : vector<8x128xi1>, vector<8x128xf32>
      %cst_223 = arith.constant 9.980000e-01 : f32
      %558 = vector.broadcast %cst_223 : f32 to vector<8x128xf32>
      %559 = arith.mulf %514, %558 : vector<8x128xf32>
      %560 = arith.select %538, %559, %514 : vector<8x128xi1>, vector<8x128xf32>
      %cst_224 = arith.constant 1.000000e+00 : f32
      %561 = vector.broadcast %cst_224 : f32 to vector<8x128xf32>
      %562 = arith.subf %561, %534 : vector<8x128xf32>
      %cst_225 = arith.constant 0.00999999977 : f32
      %563 = vector.broadcast %cst_225 : f32 to vector<8x128xf32>
      %564 = arith.addf %563, %562 : vector<8x128xf32>
      %cst_226 = arith.constant 2.200000e-01 : f32
      %565 = vector.broadcast %cst_226 : f32 to vector<8x128xf32>
      %566 = arith.divf %565, %564 : vector<8x128xf32>
      %567 = arith.mulf %529, %566 : vector<8x128xf32>
      %cst_227 = arith.constant 1.000000e+00 : f32
      %568 = vector.broadcast %cst_227 : f32 to vector<8x128xf32>
      %569 = arith.subf %568, %557 : vector<8x128xf32>
      %570 = arith.subf %569, %560 : vector<8x128xf32>
      %cst_228 = arith.constant 0.000000e+00 : f32
      %571 = vector.broadcast %cst_228 : f32 to vector<8x128xf32>
      %572 = arith.maximumf %571, %567 : vector<8x128xf32>
      %573 = arith.minimumf %570, %572 : vector<8x128xf32>
      %574 = arith.addf %557, %573 : vector<8x128xf32>
      %575 = arith.select %538, %574, %557 : vector<8x128xi1>, vector<8x128xf32>
      %cst_229 = arith.constant 0.00999999977 : f32
      %576 = vector.broadcast %cst_229 : f32 to vector<8x128xf32>
      %577 = arith.mulf %576, %575 : vector<8x128xf32>
      %cst_230 = arith.constant 1.000000e+00 : f32
      %578 = vector.broadcast %cst_230 : f32 to vector<8x128xf32>
      %579 = arith.subf %578, %560 : vector<8x128xf32>
      %580 = arith.minimumf %579, %575 : vector<8x128xf32>
      %cst_231 = arith.constant 0.000000e+00 : f32
      %581 = vector.broadcast %cst_231 : f32 to vector<8x128xf32>
      %582 = arith.maximumf %581, %577 : vector<8x128xf32>
      %583 = arith.minimumf %580, %582 : vector<8x128xf32>
      %cst_232 = arith.constant 0.000000e+00 : f32
      %584 = vector.broadcast %cst_232 : f32 to vector<8x128xf32>
      %585 = arith.select %538, %583, %584 : vector<8x128xi1>, vector<8x128xf32>
      %586 = arith.subf %575, %585 : vector<8x128xf32>
      %587 = arith.addf %560, %585 : vector<8x128xf32>
      %588 = arith.addf %587, %586 : vector<8x128xf32>
      %cst_233 = arith.constant 0.000000e+00 : f32
      %cst_234 = arith.constant 1.000000e+00 : f32
      %589 = vector.broadcast %cst_233 : f32 to vector<8x128xf32>
      %590 = arith.maximumf %589, %588 : vector<8x128xf32>
      %591 = vector.broadcast %cst_234 : f32 to vector<8x128xf32>
      %592 = arith.minimumf %591, %590 : vector<8x128xf32>
      %c0_235 = arith.constant 0 : index
      %c7 = arith.constant 7 : index
      %c0_236 = arith.constant 0 : index
      %593 = vector.load %arg8[%c0_235, %c7, %c0_236] : memref<8x8x128xf32, #tpu.memory_space<vmem>>, vector<8x1x128xf32>
      %594 = vector.shape_cast %593 : vector<8x1x128xf32> to vector<8x128xf32>
      %595 = vector.shape_cast %592 : vector<8x128xf32> to vector<8x1x128xf32>
      tpu.vector_store %arg8[%c0_235, %c7, %c0_236], %595 {strides = array<i32>} : memref<8x8x128xf32, #tpu.memory_space<vmem>>, vector<8x1x128xf32>,
      %c0_237 = arith.constant 0 : index
      %c7_238 = arith.constant 7 : index
      %c0_239 = arith.constant 0 : index
      %596 = vector.load %arg9[%c0_237, %c7_238, %c0_239] : memref<8x8x128xf32, #tpu.memory_space<vmem>>, vector<8x1x128xf32>
      %597 = vector.shape_cast %596 : vector<8x1x128xf32> to vector<8x128xf32>
      %598 = vector.shape_cast %554 : vector<8x128xf32> to vector<8x1x128xf32>
      tpu.vector_store %arg9[%c0_237, %c7_238, %c0_239], %598 {strides = array<i32>} : memref<8x8x128xf32, #tpu.memory_space<vmem>>, vector<8x1x128xf32>,
      %c0_240 = arith.constant 0 : index
      %c0_241 = arith.constant 0 : index
      %c0_242 = arith.constant 0 : index
      %599 = vector.load %arg8[%c0_240, %c0_241, %c0_242] : memref<8x8x128xf32, #tpu.memory_space<vmem>>, vector<8x8x128xf32>
      %c0_243 = arith.constant 0 : index
      %c0_244 = arith.constant 0 : index
      %c0_245 = arith.constant 0 : index
      %600 = vector.load %arg9[%c0_243, %c0_244, %c0_245] : memref<8x8x128xf32, #tpu.memory_space<vmem>>, vector<8x8x128xf32>
      %cst_246 = arith.constant 1.000000e+07 : f32
      %601 = vector.broadcast %cst_246 : f32 to vector<8x8x128xf32>
      %602 = arith.mulf %601, %599 : vector<8x8x128xf32>
      %603 = arith.mulf %600, %600 : vector<8x8x128xf32>
      %604 = arith.divf %602, %603 : vector<8x8x128xf32>
      %cst_247 = arith.constant 1.000000e+00 : f32
      %605 = vector.broadcast %cst_247 : f32 to vector<8x8x128xf32>
      %606 = arith.subf %605, %599 : vector<8x8x128xf32>
      %cst_248 = arith.constant 5.000000e+00 : f32
      %607 = vector.broadcast %cst_248 : f32 to vector<8x8x128xf32>
      %608 = arith.mulf %606, %607 : vector<8x8x128xf32>
      %609 = math.exp %608 : vector<8x8x128xf32>
      %cst_249 = arith.constant 1.000000e+00 : f32
      %610 = vector.broadcast %cst_249 : f32 to vector<8x8x128xf32>
      %611 = arith.subf %609, %610 : vector<8x8x128xf32>
      %cst_250 = arith.constant 6.78365491E+9 : f32
      %612 = vector.broadcast %cst_250 : f32 to vector<8x8x128xf32>
      %613 = arith.mulf %612, %611 : vector<8x8x128xf32>
      %614 = arith.addf %604, %613 : vector<8x8x128xf32>
      %615 = arith.divf %14, %614 : vector<8x8x128xf32>
      %c0_251 = arith.constant 0 : index
      %616 = arith.index_cast %12 : i32 to index
      %c0_252 = arith.constant 0 : index
      %617 = vector.load %arg4[%c0_251, %616, %c0_252] : memref<8x256x128xf32, #tpu.memory_space<vmem>>, vector<8x8x128xf32>
      tpu.vector_store %arg4[%c0_251, %616, %c0_252], %615 {strides = array<i32>} : memref<8x256x128xf32, #tpu.memory_space<vmem>>, vector<8x8x128xf32>,
      scf.yield %587, %586, %554 : vector<8x128xf32>, vector<8x128xf32>, vector<8x128xf32>
    }
    %c32_i32_7 = arith.constant 32 : i32
    %c0_8 = arith.constant 0 : index
    %c0_9 = arith.constant 0 : index
    %8 = vector.load %arg5[%c0_8, %c0_9] : memref<8x128xf32, #tpu.memory_space<vmem>>, vector<8x128xf32>
    tpu.vector_store %arg5[%c0_8, %c0_9], %7#0 {strides = array<i32>} : memref<8x128xf32, #tpu.memory_space<vmem>>, vector<8x128xf32>,
    %c0_10 = arith.constant 0 : index
    %c0_11 = arith.constant 0 : index
    %9 = vector.load %arg6[%c0_10, %c0_11] : memref<8x128xf32, #tpu.memory_space<vmem>>, vector<8x128xf32>
    tpu.vector_store %arg6[%c0_10, %c0_11], %7#1 {strides = array<i32>} : memref<8x128xf32, #tpu.memory_space<vmem>>, vector<8x128xf32>,
    %c0_12 = arith.constant 0 : index
    %c0_13 = arith.constant 0 : index
    %10 = vector.load %arg7[%c0_12, %c0_13] : memref<8x128xf32, #tpu.memory_space<vmem>>, vector<8x128xf32>
    tpu.vector_store %arg7[%c0_12, %c0_13], %7#2 {strides = array<i32>} : memref<8x128xf32, #tpu.memory_space<vmem>>, vector<8x128xf32>,
    return
  }
  func.func @transform_0(%arg0: i32, %arg1: i32, %arg2: i32) -> (i32, i32, i32) {
    %c0_i32 = arith.constant 0 : i32
    return %arg0, %arg2, %arg1 : i32, i32, i32
  }
  func.func @transform_1(%arg0: i32, %arg1: i32, %arg2: i32) -> (i32, i32, i32) {
    %c0_i32 = arith.constant 0 : i32
    return %arg0, %arg2, %arg1 : i32, i32, i32
  }
}

</mosaic_0001>

<llo_original>
// kernel: memristor_forward.1
$region0: #{memristor_forward.1}
  #allocation0 [shape = 'u32[]', space=smem, size = 0x4, offset = 0x4, fixed_abs, tag = 'smem constant byte address 0x4 - core index']
  #allocation1 [shape = 'u32[144,128]{1,0:T(1,128)}', space=vmem, size = 0x12000, scoped, tag = 'internal scratch']
  #allocation2 [shape = 'f32[8,128]{1,0:T(8,128)}', space=vmem, size = 0x1000, scoped, tag = 'scratch operand']
  #allocation3 [shape = 'f32[8,128]{1,0:T(8,128)}', space=vmem, size = 0x1000, scoped, tag = 'scratch operand']
  #allocation4 [shape = 'f32[8,128]{1,0:T(8,128)}', space=vmem, size = 0x1000, scoped, tag = 'scratch operand']
  #allocation5 [shape = 'f32[8,8,128]{2,1,0:T(8,128)}', space=vmem, size = 0x8000, scoped, tag = 'scratch operand']
  #allocation6 [shape = 'f32[8,8,128]{2,1,0:T(8,128)}', space=vmem, size = 0x8000, scoped, tag = 'scratch operand']
  %s0 = inlined_call_operand.vmem [shape: f32[8,512,128], index: 0, kind: input, shape index: {}]
  %s1 = inlined_call_operand.vmem [shape: f32[8,512,128], index: 1, kind: output, shape index: {}]
  %s2 = sld [smem:[#allocation0]]
  $region120: #{memristor_forward.1} parent=0
    _
  %s4 = ssub.s32 1, %s2
  %s5 = scalar_select 0, %s4, %s2
  $region1: #{memristor_forward.1} parent=0
    #allocation7 [shape = 'u8[2097152]{0}', space=vmem, size = 0x200000, scoped, tag = 'input window, operand 0']
    #allocation8 [shape = 'u8[2097152]{0}', space=vmem, size = 0x200000, scoped, tag = 'output window, operand 0']
    loop: start=0, step=1, limit=4
    $region2: #{memristor_forward.1} parent=1 // loop_pre_header
      _
    $region3: #{memristor_forward.1} parent=1 // loop_header
      %s7 = sphi 0, %s11
      %p8 = scmp.ge.s32.totalorder %s7, 4
      %s14 = sphi 0, %s33
      %s15 = sphi 0, %s29
      %s16 = sphi 0, %s25
      %s17 = sphi 0, %s14
      %s18 = sphi 0, %s15
      %s19 = sphi 0, %s16
      %s20 = sphi 0, %s17
      %s21 = sphi 0, %s18
      %s22 = sphi 0, %s19
      %s40 = sphi 0, %s42
      %s43 = sphi 0, %s40
      %s44 = sphi 0, %s43
      %s60 = sphi 0, %s44
      %s70 = sphi 0, %s72
      %s73 = sphi 0, %s70
      %s74 = sphi 0, %s73
      %s90 = sphi 0, %s74
    $region4: #{memristor_forward.1} parent=1 // loop_header_branch
      %10 = sbr.rel (%p8) target = $region8
    $region5: #{memristor_forward.1} parent=1 // loop_body
      %s12 = ssub.s32 %s7, 1
      %s13 = ssub.s32 %s7, 2
      %s23 = sadd.s32 1, %s16
      %p24 = scmp.ge.s32.totalorder %s23, 2
      %s25 = scalar_select %p24, 0, %s23
      %s26 = sadd.s32 1, %s15
      %s27 = scalar_select %p24, %s26, %s15
      %p28 = scmp.ge.s32.totalorder %s27, 1
      %s29 = scalar_select %p28, 0, %s27
      %s30 = sadd.s32 1, %s14
      %s31 = scalar_select %p28, %s30, %s14
      %p32 = scmp.ge.s32.totalorder %s31, 1
      %s33 = scalar_select %p32, 0, %s31
      %s34 = ssub.s32 %s14, %s33
      %s35 = ssub.s32 %s16, %s25
      %s36 = sor.u32 %s34, %s35
      %s37 = ssub.s32 %s15, %s29
      %s38 = sor.u32 %s36, %s37
      %p39 = scmp.eq.s32.totalorder %s38, 0
      %s41 = sadd.s32 %s40, 1
      %s42 = scalar_select %p39, %s40, %s41
      %p45 = pneg %p39
      %p46 = scmp.eq.s32.totalorder %s7, 1
      %p47 = por %p45, %p46
      %p48 = scmp.ne.s32.totalorder %s40, %s43
      %p49 = scmp.eq.s32.totalorder %s7, 0
      %p50 = por %p48, %p49
      %p51 = scmp.ne.s32.totalorder %s40, %s43
      %p52 = scmp.eq.s32.totalorder %s12, 1
      %p53 = por %p51, %p52
      %p54 = scmp.ne.s32.totalorder %s43, %s44
      %p55 = scmp.eq.s32.totalorder %s12, 0
      %p56 = por %p54, %p55
      %p57 = scmp.ne.s32.totalorder %s43, %s44
      %p58 = scmp.eq.s32.totalorder %s13, 1
      %p59 = por %p57, %p58
      %p61 = scmp.ne.s32.totalorder %s44, %s60
      %p62 = scmp.eq.s32.totalorder %s13, 0
      %p63 = por %p61, %p62
      %s64 = ssub.s32 %s14, %s33
      %s65 = ssub.s32 %s16, %s25
      %s66 = sor.u32 %s64, %s65
      %s67 = ssub.s32 %s15, %s29
      %s68 = sor.u32 %s66, %s67
      %p69 = scmp.eq.s32.totalorder %s68, 0
      %s71 = sadd.s32 %s70, 1
      %s72 = scalar_select %p69, %s70, %s71
      %p75 = pneg %p69
      %p76 = scmp.eq.s32.totalorder %s7, 1
      %p77 = por %p75, %p76
      %p78 = scmp.ne.s32.totalorder %s70, %s73
      %p79 = scmp.eq.s32.totalorder %s7, 0
      %p80 = por %p78, %p79
      %p81 = scmp.ne.s32.totalorder %s70, %s73
      %p82 = scmp.eq.s32.totalorder %s12, 1
      %p83 = por %p81, %p82
      %p84 = scmp.ne.s32.totalorder %s73, %s74
      %p85 = scmp.eq.s32.totalorder %s12, 0
      %p86 = por %p84, %p85
      %p87 = scmp.ne.s32.totalorder %s73, %s74
      %p88 = scmp.eq.s32.totalorder %s13, 1
      %p89 = por %p87, %p88
      %p91 = scmp.ne.s32.totalorder %s74, %s90
      %p92 = scmp.eq.s32.totalorder %s13, 0
      %p93 = por %p91, %p92
      %p94 = scmp.le.s32.totalorder 1, %s7
      %p95 = scmp.lt.s32.totalorder %s7, 3
      %p96 = pnand %p94, %p95
      %p97 = pneg %p96
      // Predicated region
      $region9: #{memristor_forward.1} parent=5 // pred_check
        _
      $region10: #{memristor_forward.1} parent=5 // pred_check_branch
        %99 = sbr.rel (%p96) target = $region12
      $region11: #{memristor_forward.1} parent=5 // pred_region
        %s100 = ssub.s32 %s7, 1
      $region12: #{memristor_forward.1} parent=5 // pred_fallthru
        _
      %p101 = scmp.lt.s32.totalorder %s7, 2
      // Predicated region
      $region13: #{memristor_forward.1} parent=5 // pred_check
        %p102 = pneg %p101
      $region14: #{memristor_forward.1} parent=5 // pred_check_branch
        %104 = sbr.rel (%p102) target = $region16
      $region15: #{memristor_forward.1} parent=5 // pred_region
        // Predicated region
        $region17: #{memristor_forward.1} parent=15 // pred_check
          %p105 = pneg %p50
        $region18: #{memristor_forward.1} parent=15 // pred_check_branch
          %107 = sbr.rel (%p105) target = $region20
        $region19: #{memristor_forward.1} parent=15 // pred_region
          %s108 = sand.u32 %s40, 1
          %s109 = sand.u32 %s40, 1
          %s110 = smul.addr %s109, 2048
          %s111 = scalar_lea.vmem [#allocation7], %s110
          %s112 = smul.u32 8, %s14
          %s113 = smul.u32 32, %s16
          %s114 = sadd.s32 %s15, %s113
          %s115 = smul.addr %s112, 64
          %s116 = sadd.s32 %s114, %s115
          %s117 = smul.addr %s116, 8
          %s118 = scalar_lea.vmem %s0, %s117
          // Predicated region
          $region21: #{memristor_forward.1} parent=19 // pred_check
            _
          $region22: #{memristor_forward.1} parent=19 // pred_check_branch
            %120 = sbr.rel (0) target = $region24
          $region23: #{memristor_forward.1} parent=19 // pred_region
            // Predicated region
            $region25: #{memristor_forward.1} parent=23 // pred_check
              _
            $region26: #{memristor_forward.1} parent=23 // pred_check_branch
              %122 = sbr.rel (0) target = $region28
            $region27: #{memristor_forward.1} parent=23 // pred_region
              // Predicated region
              $region40: #{memristor_forward.1} parent=27 // pred_check
                _
              $region41: #{memristor_forward.1} parent=27 // pred_check_branch
                %648 = sbr.rel (0) target = $region43
              $region42: #{memristor_forward.1} parent=27 // pred_region
                loop: start=0, step=1, limit=1
                $region44: #{memristor_forward.1} parent=42 // loop_pre_header
                  _
                $region45: #{memristor_forward.1} parent=42 // loop_header
                  %s650 = sphi 0, %s654
                  %p651 = scmp.ge.s32.totalorder %s650, 1
                  %s655 = sphi %s118, %s118
                  %s656 = sphi %s111, %s111
                $region46: #{memristor_forward.1} parent=42 // loop_header_branch
                  %653 = sbr.rel (%p651) target = $region50
                $region47: #{memristor_forward.1} parent=42 // loop_body
                  %v657 = vld [vmem:[%s655] sm:$0xff]
                  %658 = vst [vmem:[%s656] sm:$0xff] %v657
                  %v659 = vld [vmem:[%s655 + $0x8] sm:$0xff]
                  %660 = vst [vmem:[%s656 + $0x8] sm:$0xff] %v659
                  %v661 = vld [vmem:[%s655 + $0x10] sm:$0xff]
                  %662 = vst [vmem:[%s656 + $0x10] sm:$0xff] %v661
                  %v663 = vld [vmem:[%s655 + $0x18] sm:$0xff]
                  %664 = vst [vmem:[%s656 + $0x18] sm:$0xff] %v663
                  %v665 = vld [vmem:[%s655 + $0x20] sm:$0xff]
                  %666 = vst [vmem:[%s656 + $0x20] sm:$0xff] %v665
                  %v667 = vld [vmem:[%s655 + $0x28] sm:$0xff]
                  %668 = vst [vmem:[%s656 + $0x28] sm:$0xff] %v667
                  %v669 = vld [vmem:[%s655 + $0x30] sm:$0xff]
                  %670 = vst [vmem:[%s656 + $0x30] sm:$0xff] %v669
                  %v671 = vld [vmem:[%s655 + $0x38] sm:$0xff]
                  %672 = vst [vmem:[%s656 + $0x38] sm:$0xff] %v671
                  %v673 = vld [vmem:[%s655 + $0x40] sm:$0xff]
                  %674 = vst [vmem:[%s656 + $0x40] sm:$0xff] %v673
                  %v675 = vld [vmem:[%s655 + $0x48] sm:$0xff]
                  %676 = vst [vmem:[%s656 + $0x48] sm:$0xff] %v675
                  %v677 = vld [vmem:[%s655 + $0x50] sm:$0xff]
                  %678 = vst [vmem:[%s656 + $0x50] sm:$0xff] %v677
                  %v679 = vld [vmem:[%s655 + $0x58] sm:$0xff]
                  %680 = vst [vmem:[%s656 + $0x58] sm:$0xff] %v679
                  %v681 = vld [vmem:[%s655 + $0x60] sm:$0xff]
                  %682 = vst [vmem:[%s656 + $0x60] sm:$0xff] %v681
                  %v683 = vld [vmem:[%s655 + $0x68] sm:$0xff]
                  %684 = vst [vmem:[%s656 + $0x68] sm:$0xff] %v683
                  %v685 = vld [vmem:[%s655 + $0x70] sm:$0xff]
                  %686 = vst [vmem:[%s656 + $0x70] sm:$0xff] %v685
                  %v687 = vld [vmem:[%s655 + $0x78] sm:$0xff]
                  %688 = vst [vmem:[%s656 + $0x78] sm:$0xff] %v687
                  %v689 = vld [vmem:[%s655 + $0x80] sm:$0xff]
                  %690 = vst [vmem:[%s656 + $0x80] sm:$0xff] %v689
                  %v691 = vld [vmem:[%s655 + $0x88] sm:$0xff]
                  %692 = vst [vmem:[%s656 + $0x88] sm:$0xff] %v691
                  %v693 = vld [vmem:[%s655 + $0x90] sm:$0xff]
                  %694 = vst [vmem:[%s656 + $0x90] sm:$0xff] %v693
                  %v695 = vld [vmem:[%s655 + $0x98] sm:$0xff]
                  %696 = vst [vmem:[%s656 + $0x98] sm:$0xff] %v695
                  %v697 = vld [vmem:[%s655 + $0xa0] sm:$0xff]
                  %698 = vst [vmem:[%s656 + $0xa0] sm:$0xff] %v697
                  %v699 = vld [vmem:[%s655 + $0xa8] sm:$0xff]
                  %700 = vst [vmem:[%s656 + $0xa8] sm:$0xff] %v699
                  %v701 = vld [vmem:[%s655 + $0xb0] sm:$0xff]
                  %702 = vst [vmem:[%s656 + $0xb0] sm:$0xff] %v701
                  %v703 = vld [vmem:[%s655 + $0xb8] sm:$0xff]
                  %704 = vst [vmem:[%s656 + $0xb8] sm:$0xff] %v703
                  %v705 = vld [vmem:[%s655 + $0xc0] sm:$0xff]
                  %706 = vst [vmem:[%s656 + $0xc0] sm:$0xff] %v705
                  %v707 = vld [vmem:[%s655 + $0xc8] sm:$0xff]
                  %708 = vst [vmem:[%s656 + $0xc8] sm:$0xff] %v707
                  %v709 = vld [vmem:[%s655 + $0xd0] sm:$0xff]
                  %710 = vst [vmem:[%s656 + $0xd0] sm:$0xff] %v709
                  %v711 = vld [vmem:[%s655 + $0xd8] sm:$0xff]
                  %712 = vst [vmem:[%s656 + $0xd8] sm:$0xff] %v711
                  %v713 = vld [vmem:[%s655 + $0xe0] sm:$0xff]
                  %714 = vst [vmem:[%s656 + $0xe0] sm:$0xff] %v713
                  %v715 = vld [vmem:[%s655 + $0xe8] sm:$0xff]
                  %716 = vst [vmem:[%s656 + $0xe8] sm:$0xff] %v715
                  %v717 = vld [vmem:[%s655 + $0xf0] sm:$0xff]
                  %718 = vst [vmem:[%s656 + $0xf0] sm:$0xff] %v717
                  %v719 = vld [vmem:[%s655 + $0xf8] sm:$0xff]
                  %720 = vst [vmem:[%s656 + $0xf8] sm:$0xff] %v719
                  %v721 = vld [vmem:[%s655 + $0x200] sm:$0xff]
                  %722 = vst [vmem:[%s656 + $0x100] sm:$0xff] %v721
                  %v723 = vld [vmem:[%s655 + $0x208] sm:$0xff]
                  %724 = vst [vmem:[%s656 + $0x108] sm:$0xff] %v723
                  %v725 = vld [vmem:[%s655 + $0x210] sm:$0xff]
                  %726 = vst [vmem:[%s656 + $0x110] sm:$0xff] %v725
                  %v727 = vld [vmem:[%s655 + $0x218] sm:$0xff]
                  %728 = vst [vmem:[%s656 + $0x118] sm:$0xff] %v727
                  %v729 = vld [vmem:[%s655 + $0x220] sm:$0xff]
                  %730 = vst [vmem:[%s656 + $0x120] sm:$0xff] %v729
                  %v731 = vld [vmem:[%s655 + $0x228] sm:$0xff]
                  %732 = vst [vmem:[%s656 + $0x128] sm:$0xff] %v731
                  %v733 = vld [vmem:[%s655 + $0x230] sm:$0xff]
                  %734 = vst [vmem:[%s656 + $0x130] sm:$0xff] %v733
                  %v735 = vld [vmem:[%s655 + $0x238] sm:$0xff]
                  %736 = vst [vmem:[%s656 + $0x138] sm:$0xff] %v735
                  %v737 = vld [vmem:[%s655 + $0x240] sm:$0xff]
                  %738 = vst [vmem:[%s656 + $0x140] sm:$0xff] %v737
                  %v739 = vld [vmem:[%s655 + $0x248] sm:$0xff]
                  %740 = vst [vmem:[%s656 + $0x148] sm:$0xff] %v739
                  %v741 = vld [vmem:[%s655 + $0x250] sm:$0xff]
                  %742 = vst [vmem:[%s656 + $0x150] sm:$0xff] %v741
                  %v743 = vld [vmem:[%s655 + $0x258] sm:$0xff]
                  %744 = vst [vmem:[%s656 + $0x158] sm:$0xff] %v743
                  %v745 = vld [vmem:[%s655 + $0x260] sm:$0xff]
                  %746 = vst [vmem:[%s656 + $0x160] sm:$0xff] %v745
                  %v747 = vld [vmem:[%s655 + $0x268] sm:$0xff]
                  %748 = vst [vmem:[%s656 + $0x168] sm:$0xff] %v747
                  %v749 = vld [vmem:[%s655 + $0x270] sm:$0xff]
                  %750 = vst [vmem:[%s656 + $0x170] sm:$0xff] %v749
                  %v751 = vld [vmem:[%s655 + $0x278] sm:$0xff]
                  %752 = vst [vmem:[%s656 + $0x178] sm:$0xff] %v751
                  %v753 = vld [vmem:[%s655 + $0x280] sm:$0xff]
                  %754 = vst [vmem:[%s656 + $0x180] sm:$0xff] %v753
                  %v755 = vld [vmem:[%s655 + $0x288] sm:$0xff]
                  %756 = vst [vmem:[%s656 + $0x188] sm:$0xff] %v755
                  %v757 = vld [vmem:[%s655 + $0x290] sm:$0xff]
                  %758 = vst [vmem:[%s656 + $0x190] sm:$0xff] %v757
                  %v759 = vld [vmem:[%s655 + $0x298] sm:$0xff]
                  %760 = vst [vmem:[%s656 + $0x198] sm:$0xff] %v759
                  %v761 = vld [vmem:[%s655 + $0x2a0] sm:$0xff]
                  %762 = vst [vmem:[%s656 + $0x1a0] sm:$0xff] %v761
                  %v763 = vld [vmem:[%s655 + $0x2a8] sm:$0xff]
                  %764 = vst [vmem:[%s656 + $0x1a8] sm:$0xff] %v763
                  %v765 = vld [vmem:[%s655 + $0x2b0] sm:$0xff]
                  %766 = vst [vmem:[%s656 + $0x1b0] sm:$0xff] %v765
                  %v767 = vld [vmem:[%s655 + $0x2b8] sm:$0xff]
                  %768 = vst [vmem:[%s656 + $0x1b8] sm:$0xff] %v767
                  %v769 = vld [vmem:[%s655 + $0x2c0] sm:$0xff]
                  %770 = vst [vmem:[%s656 + $0x1c0] sm:$0xff] %v769
                  %v771 = vld [vmem:[%s655 + $0x2c8] sm:$0xff]
                  %772 = vst [vmem:[%s656 + $0x1c8] sm:$0xff] %v771
                  %v773 = vld [vmem:[%s655 + $0x2d0] sm:$0xff]
                  %774 = vst [vmem:[%s656 + $0x1d0] sm:$0xff] %v773
                  %v775 = vld [vmem:[%s655 + $0x2d8] sm:$0xff]
                  %776 = vst [vmem:[%s656 + $0x1d8] sm:$0xff] %v775
                  %v777 = vld [vmem:[%s655 + $0x2e0] sm:$0xff]
                  %778 = vst [vmem:[%s656 + $0x1e0] sm:$0xff] %v777
                  %v779 = vld [vmem:[%s655 + $0x2e8] sm:$0xff]
                  %780 = vst [vmem:[%s656 + $0x1e8] sm:$0xff] %v779
                  %v781 = vld [vmem:[%s655 + $0x2f0] sm:$0xff]
                  %782 = vst [vmem:[%s656 + $0x1f0] sm:$0xff] %v781
                  %v783 = vld [vmem:[%s655 + $0x2f8] sm:$0xff]
                  %784 = vst [vmem:[%s656 + $0x1f8] sm:$0xff] %v783
                  %v785 = vld [vmem:[%s655 + $0x400] sm:$0xff]
                  %786 = vst [vmem:[%s656 + $0x200] sm:$0xff] %v785
                  %v787 = vld [vmem:[%s655 + $0x408] sm:$0xff]
                  %788 = vst [vmem:[%s656 + $0x208] sm:$0xff] %v787
                  %v789 = vld [vmem:[%s655 + $0x410] sm:$0xff]
                  %790 = vst [vmem:[%s656 + $0x210] sm:$0xff] %v789
                  %v791 = vld [vmem:[%s655 + $0x418] sm:$0xff]
                  %792 = vst [vmem:[%s656 + $0x218] sm:$0xff] %v791
                  %v793 = vld [vmem:[%s655 + $0x420] sm:$0xff]
                  %794 = vst [vmem:[%s656 + $0x220] sm:$0xff] %v793
                  %v795 = vld [vmem:[%s655 + $0x428] sm:$0xff]
                  %796 = vst [vmem:[%s656 + $0x228] sm:$0xff] %v795
                  %v797 = vld [vmem:[%s655 + $0x430] sm:$0xff]
                  %798 = vst [vmem:[%s656 + $0x230] sm:$0xff] %v797
                  %v799 = vld [vmem:[%s655 + $0x438] sm:$0xff]
                  %800 = vst [vmem:[%s656 + $0x238] sm:$0xff] %v799
                  %v801 = vld [vmem:[%s655 + $0x440] sm:$0xff]
                  %802 = vst [vmem:[%s656 + $0x240] sm:$0xff] %v801
                  %v803 = vld [vmem:[%s655 + $0x448] sm:$0xff]
                  %804 = vst [vmem:[%s656 + $0x248] sm:$0xff] %v803
                  %v805 = vld [vmem:[%s655 + $0x450] sm:$0xff]
                  %806 = vst [vmem:[%s656 + $0x250] sm:$0xff] %v805
                  %v807 = vld [vmem:[%s655 + $0x458] sm:$0xff]
                  %808 = vst [vmem:[%s656 + $0x258] sm:$0xff] %v807
                  %v809 = vld [vmem:[%s655 + $0x460] sm:$0xff]
                  %810 = vst [vmem:[%s656 + $0x260] sm:$0xff] %v809
                  %v811 = vld [vmem:[%s655 + $0x468] sm:$0xff]
                  %812 = vst [vmem:[%s656 + $0x268] sm:$0xff] %v811
                  %v813 = vld [vmem:[%s655 + $0x470] sm:$0xff]
                  %814 = vst [vmem:[%s656 + $0x270] sm:$0xff] %v813
                  %v815 = vld [vmem:[%s655 + $0x478] sm:$0xff]
                  %816 = vst [vmem:[%s656 + $0x278] sm:$0xff] %v815
                  %v817 = vld [vmem:[%s655 + $0x480] sm:$0xff]
                  %818 = vst [vmem:[%s656 + $0x280] sm:$0xff] %v817
                  %v819 = vld [vmem:[%s655 + $0x488] sm:$0xff]
                  %820 = vst [vmem:[%s656 + $0x288] sm:$0xff] %v819
                  %v821 = vld [vmem:[%s655 + $0x490] sm:$0xff]
                  %822 = vst [vmem:[%s656 + $0x290] sm:$0xff] %v821
                  %v823 = vld [vmem:[%s655 + $0x498] sm:$0xff]
                  %824 = vst [vmem:[%s656 + $0x298] sm:$0xff] %v823
                  %v825 = vld [vmem:[%s655 + $0x4a0] sm:$0xff]
                  %826 = vst [vmem:[%s656 + $0x2a0] sm:$0xff] %v825
                  %v827 = vld [vmem:[%s655 + $0x4a8] sm:$0xff]
                  %828 = vst [vmem:[%s656 + $0x2a8] sm:$0xff] %v827
                  %v829 = vld [vmem:[%s655 + $0x4b0] sm:$0xff]
                  %830 = vst [vmem:[%s656 + $0x2b0] sm:$0xff] %v829
                  %v831 = vld [vmem:[%s655 + $0x4b8] sm:$0xff]
                  %832 = vst [vmem:[%s656 + $0x2b8] sm:$0xff] %v831
                  %v833 = vld [vmem:[%s655 + $0x4c0] sm:$0xff]
                  %834 = vst [vmem:[%s656 + $0x2c0] sm:$0xff] %v833
                  %v835 = vld [vmem:[%s655 + $0x4c8] sm:$0xff]
                  %836 = vst [vmem:[%s656 + $0x2c8] sm:$0xff] %v835
                  %v837 = vld [vmem:[%s655 + $0x4d0] sm:$0xff]
                  %838 = vst [vmem:[%s656 + $0x2d0] sm:$0xff] %v837
                  %v839 = vld [vmem:[%s655 + $0x4d8] sm:$0xff]
                  %840 = vst [vmem:[%s656 + $0x2d8] sm:$0xff] %v839
                  %v841 = vld [vmem:[%s655 + $0x4e0] sm:$0xff]
                  %842 = vst [vmem:[%s656 + $0x2e0] sm:$0xff] %v841
                  %v843 = vld [vmem:[%s655 + $0x4e8] sm:$0xff]
                  %844 = vst [vmem:[%s656 + $0x2e8] sm:$0xff] %v843
                  %v845 = vld [vmem:[%s655 + $0x4f0] sm:$0xff]
                  %846 = vst [vmem:[%s656 + $0x2f0] sm:$0xff] %v845
                  %v847 = vld [vmem:[%s655 + $0x4f8] sm:$0xff]
                  %848 = vst [vmem:[%s656 + $0x2f8] sm:$0xff] %v847
                  %v849 = vld [vmem:[%s655 + $0x600] sm:$0xff]
                  %850 = vst [vmem:[%s656 + $0x300] sm:$0xff] %v849
                  %v851 = vld [vmem:[%s655 + $0x608] sm:$0xff]
                  %852 = vst [vmem:[%s656 + $0x308] sm:$0xff] %v851
                  %v853 = vld [vmem:[%s655 + $0x610] sm:$0xff]
                  %854 = vst [vmem:[%s656 + $0x310] sm:$0xff] %v853
                  %v855 = vld [vmem:[%s655 + $0x618] sm:$0xff]
                  %856 = vst [vmem:[%s656 + $0x318] sm:$0xff] %v855
                  %v857 = vld [vmem:[%s655 + $0x620] sm:$0xff]
                  %858 = vst [vmem:[%s656 + $0x320] sm:$0xff] %v857
                  %v859 = vld [vmem:[%s655 + $0x628] sm:$0xff]
                  %860 = vst [vmem:[%s656 + $0x328] sm:$0xff] %v859
                  %v861 = vld [vmem:[%s655 + $0x630] sm:$0xff]
                  %862 = vst [vmem:[%s656 + $0x330] sm:$0xff] %v861
                  %v863 = vld [vmem:[%s655 + $0x638] sm:$0xff]
                  %864 = vst [vmem:[%s656 + $0x338] sm:$0xff] %v863
                  %v865 = vld [vmem:[%s655 + $0x640] sm:$0xff]
                  %866 = vst [vmem:[%s656 + $0x340] sm:$0xff] %v865
                  %v867 = vld [vmem:[%s655 + $0x648] sm:$0xff]
                  %868 = vst [vmem:[%s656 + $0x348] sm:$0xff] %v867
                  %v869 = vld [vmem:[%s655 + $0x650] sm:$0xff]
                  %870 = vst [vmem:[%s656 + $0x350] sm:$0xff] %v869
                  %v871 = vld [vmem:[%s655 + $0x658] sm:$0xff]
                  %872 = vst [vmem:[%s656 + $0x358] sm:$0xff] %v871
                  %v873 = vld [vmem:[%s655 + $0x660] sm:$0xff]
                  %874 = vst [vmem:[%s656 + $0x360] sm:$0xff] %v873
                  %v875 = vld [vmem:[%s655 + $0x668] sm:$0xff]
                  %876 = vst [vmem:[%s656 + $0x368] sm:$0xff] %v875
                  %v877 = vld [vmem:[%s655 + $0x670] sm:$0xff]
                  %878 = vst [vmem:[%s656 + $0x370] sm:$0xff] %v877
                  %v879 = vld [vmem:[%s655 + $0x678] sm:$0xff]
                  %880 = vst [vmem:[%s656 + $0x378] sm:$0xff] %v879
                  %v881 = vld [vmem:[%s655 + $0x680] sm:$0xff]
                  %882 = vst [vmem:[%s656 + $0x380] sm:$0xff] %v881
                  %v883 = vld [vmem:[%s655 + $0x688] sm:$0xff]
                  %884 = vst [vmem:[%s656 + $0x388] sm:$0xff] %v883
                  %v885 = vld [vmem:[%s655 + $0x690] sm:$0xff]
                  %886 = vst [vmem:[%s656 + $0x390] sm:$0xff] %v885
                  %v887 = vld [vmem:[%s655 + $0x698] sm:$0xff]
                  %888 = vst [vmem:[%s656 + $0x398] sm:$0xff] %v887
                  %v889 = vld [vmem:[%s655 + $0x6a0] sm:$0xff]
                  %890 = vst [vmem:[%s656 + $0x3a0] sm:$0xff] %v889
                  %v891 = vld [vmem:[%s655 + $0x6a8] sm:$0xff]
                  %892 = vst [vmem:[%s656 + $0x3a8] sm:$0xff] %v891
                  %v893 = vld [vmem:[%s655 + $0x6b0] sm:$0xff]
                  %894 = vst [vmem:[%s656 + $0x3b0] sm:$0xff] %v893
                  %v895 = vld [vmem:[%s655 + $0x6b8] sm:$0xff]
                  %896 = vst [vmem:[%s656 + $0x3b8] sm:$0xff] %v895
                  %v897 = vld [vmem:[%s655 + $0x6c0] sm:$0xff]
                  %898 = vst [vmem:[%s656 + $0x3c0] sm:$0xff] %v897
                  %v899 = vld [vmem:[%s655 + $0x6c8] sm:$0xff]
                  %900 = vst [vmem:[%s656 + $0x3c8] sm:$0xff] %v899
                  %v901 = vld [vmem:[%s655 + $0x6d0] sm:$0xff]
                  %902 = vst [vmem:[%s656 + $0x3d0] sm:$0xff] %v901
                  %v903 = vld [vmem:[%s655 + $0x6d8] sm:$0xff]
                  %904 = vst [vmem:[%s656 + $0x3d8] sm:$0xff] %v903
                  %v905 = vld [vmem:[%s655 + $0x6e0] sm:$0xff]
                  %906 = vst [vmem:[%s656 + $0x3e0] sm:$0xff] %v905
                  %v907 = vld [vmem:[%s655 + $0x6e8] sm:$0xff]
                  %908 = vst [vmem:[%s656 + $0x3e8] sm:$0xff] %v907
                  %v909 = vld [vmem:[%s655 + $0x6f0] sm:$0xff]
                  %910 = vst [vmem:[%s656 + $0x3f0] sm:$0xff] %v909
                  %v911 = vld [vmem:[%s655 + $0x6f8] sm:$0xff]
                  %912 = vst [vmem:[%s656 + $0x3f8] sm:$0xff] %v911
                  %v913 = vld [vmem:[%s655 + $0x800] sm:$0xff]
                  %914 = vst [vmem:[%s656 + $0x400] sm:$0xff] %v913
                  %v915 = vld [vmem:[%s655 + $0x808] sm:$0xff]
                  %916 = vst [vmem:[%s656 + $0x408] sm:$0xff] %v915
                  %v917 = vld [vmem:[%s655 + $0x810] sm:$0xff]
                  %918 = vst [vmem:[%s656 + $0x410] sm:$0xff] %v917
                  %v919 = vld [vmem:[%s655 + $0x818] sm:$0xff]
                  %920 = vst [vmem:[%s656 + $0x418] sm:$0xff] %v919
                  %v921 = vld [vmem:[%s655 + $0x820] sm:$0xff]
                  %922 = vst [vmem:[%s656 + $0x420] sm:$0xff] %v921
                  %v923 = vld [vmem:[%s655 + $0x828] sm:$0xff]
                  %924 = vst [vmem:[%s656 + $0x428] sm:$0xff] %v923
                  %v925 = vld [vmem:[%s655 + $0x830] sm:$0xff]
                  %926 = vst [vmem:[%s656 + $0x430] sm:$0xff] %v925
                  %v927 = vld [vmem:[%s655 + $0x838] sm:$0xff]
                  %928 = vst [vmem:[%s656 + $0x438] sm:$0xff] %v927
                  %v929 = vld [vmem:[%s655 + $0x840] sm:$0xff]
                  %930 = vst [vmem:[%s656 + $0x440] sm:$0xff] %v929
                  %v931 = vld [vmem:[%s655 + $0x848] sm:$0xff]
                  %932 = vst [vmem:[%s656 + $0x448] sm:$0xff] %v931
                  %v933 = vld [vmem:[%s655 + $0x850] sm:$0xff]
                  %934 = vst [vmem:[%s656 + $0x450] sm:$0xff] %v933
                  %v935 = vld [vmem:[%s655 + $0x858] sm:$0xff]
                  %936 = vst [vmem:[%s656 + $0x458] sm:$0xff] %v935
                  %v937 = vld [vmem:[%s655 + $0x860] sm:$0xff]
                  %938 = vst [vmem:[%s656 + $0x460] sm:$0xff] %v937
                  %v939 = vld [vmem:[%s655 + $0x868] sm:$0xff]
                  %940 = vst [vmem:[%s656 + $0x468] sm:$0xff] %v939
                  %v941 = vld [vmem:[%s655 + $0x870] sm:$0xff]
                  %942 = vst [vmem:[%s656 + $0x470] sm:$0xff] %v941
                  %v943 = vld [vmem:[%s655 + $0x878] sm:$0xff]
                  %944 = vst [vmem:[%s656 + $0x478] sm:$0xff] %v943
                  %v945 = vld [vmem:[%s655 + $0x880] sm:$0xff]
                  %946 = vst [vmem:[%s656 + $0x480] sm:$0xff] %v945
                  %v947 = vld [vmem:[%s655 + $0x888] sm:$0xff]
                  %948 = vst [vmem:[%s656 + $0x488] sm:$0xff] %v947
                  %v949 = vld [vmem:[%s655 + $0x890] sm:$0xff]
                  %950 = vst [vmem:[%s656 + $0x490] sm:$0xff] %v949
                  %v951 = vld [vmem:[%s655 + $0x898] sm:$0xff]
                  %952 = vst [vmem:[%s656 + $0x498] sm:$0xff] %v951
                  %v953 = vld [vmem:[%s655 + $0x8a0] sm:$0xff]
                  %954 = vst [vmem:[%s656 + $0x4a0] sm:$0xff] %v953
                  %v955 = vld [vmem:[%s655 + $0x8a8] sm:$0xff]
                  %956 = vst [vmem:[%s656 + $0x4a8] sm:$0xff] %v955
                  %v957 = vld [vmem:[%s655 + $0x8b0] sm:$0xff]
                  %958 = vst [vmem:[%s656 + $0x4b0] sm:$0xff] %v957
                  %v959 = vld [vmem:[%s655 + $0x8b8] sm:$0xff]
                  %960 = vst [vmem:[%s656 + $0x4b8] sm:$0xff] %v959
                  %v961 = vld [vmem:[%s655 + $0x8c0] sm:$0xff]
                  %962 = vst [vmem:[%s656 + $0x4c0] sm:$0xff] %v961
                  %v963 = vld [vmem:[%s655 + $0x8c8] sm:$0xff]
                  %964 = vst [vmem:[%s656 + $0x4c8] sm:$0xff] %v963
                  %v965 = vld [vmem:[%s655 + $0x8d0] sm:$0xff]
                  %966 = vst [vmem:[%s656 + $0x4d0] sm:$0xff] %v965
                  %v967 = vld [vmem:[%s655 + $0x8d8] sm:$0xff]
                  %968 = vst [vmem:[%s656 + $0x4d8] sm:$0xff] %v967
                  %v969 = vld [vmem:[%s655 + $0x8e0] sm:$0xff]
                  %970 = vst [vmem:[%s656 + $0x4e0] sm:$0xff] %v969
                  %v971 = vld [vmem:[%s655 + $0x8e8] sm:$0xff]
                  %972 = vst [vmem:[%s656 + $0x4e8] sm:$0xff] %v971
                  %v973 = vld [vmem:[%s655 + $0x8f0] sm:$0xff]
                  %974 = vst [vmem:[%s656 + $0x4f0] sm:$0xff] %v973
                  %v975 = vld [vmem:[%s655 + $0x8f8] sm:$0xff]
                  %976 = vst [vmem:[%s656 + $0x4f8] sm:$0xff] %v975
                  %v977 = vld [vmem:[%s655 + $0xa00] sm:$0xff]
                  %978 = vst [vmem:[%s656 + $0x500] sm:$0xff] %v977
                  %v979 = vld [vmem:[%s655 + $0xa08] sm:$0xff]
                  %980 = vst [vmem:[%s656 + $0x508] sm:$0xff] %v979
                  %v981 = vld [vmem:[%s655 + $0xa10] sm:$0xff]
                  %982 = vst [vmem:[%s656 + $0x510] sm:$0xff] %v981
                  %v983 = vld [vmem:[%s655 + $0xa18] sm:$0xff]
                  %984 = vst [vmem:[%s656 + $0x518] sm:$0xff] %v983
                  %v985 = vld [vmem:[%s655 + $0xa20] sm:$0xff]
                  %986 = vst [vmem:[%s656 + $0x520] sm:$0xff] %v985
                  %v987 = vld [vmem:[%s655 + $0xa28] sm:$0xff]
                  %988 = vst [vmem:[%s656 + $0x528] sm:$0xff] %v987
                  %v989 = vld [vmem:[%s655 + $0xa30] sm:$0xff]
                  %990 = vst [vmem:[%s656 + $0x530] sm:$0xff] %v989
                  %v991 = vld [vmem:[%s655 + $0xa38] sm:$0xff]
                  %992 = vst [vmem:[%s656 + $0x538] sm:$0xff] %v991
                  %v993 = vld [vmem:[%s655 + $0xa40] sm:$0xff]
                  %994 = vst [vmem:[%s656 + $0x540] sm:$0xff] %v993
                  %v995 = vld [vmem:[%s655 + $0xa48] sm:$0xff]
                  %996 = vst [vmem:[%s656 + $0x548] sm:$0xff] %v995
                  %v997 = vld [vmem:[%s655 + $0xa50] sm:$0xff]
                  %998 = vst [vmem:[%s656 + $0x550] sm:$0xff] %v997
                  %v999 = vld [vmem:[%s655 + $0xa58] sm:$0xff]
                  %1000 = vst [vmem:[%s656 + $0x558] sm:$0xff] %v999
                  %v1001 = vld [vmem:[%s655 + $0xa60] sm:$0xff]
                  %1002 = vst [vmem:[%s656 + $0x560] sm:$0xff] %v1001
                  %v1003 = vld [vmem:[%s655 + $0xa68] sm:$0xff]
                  %1004 = vst [vmem:[%s656 + $0x568] sm:$0xff] %v1003
                  %v1005 = vld [vmem:[%s655 + $0xa70] sm:$0xff]
                  %1006 = vst [vmem:[%s656 + $0x570] sm:$0xff] %v1005
                  %v1007 = vld [vmem:[%s655 + $0xa78] sm:$0xff]
                  %1008 = vst [vmem:[%s656 + $0x578] sm:$0xff] %v1007
                  %v1009 = vld [vmem:[%s655 + $0xa80] sm:$0xff]
                  %1010 = vst [vmem:[%s656 + $0x580] sm:$0xff] %v1009
                  %v1011 = vld [vmem:[%s655 + $0xa88] sm:$0xff]
                  %1012 = vst [vmem:[%s656 + $0x588] sm:$0xff] %v1011
                  %v1013 = vld [vmem:[%s655 + $0xa90] sm:$0xff]
                  %1014 = vst [vmem:[%s656 + $0x590] sm:$0xff] %v1013
                  %v1015 = vld [vmem:[%s655 + $0xa98] sm:$0xff]
                  %1016 = vst [vmem:[%s656 + $0x598] sm:$0xff] %v1015
                  %v1017 = vld [vmem:[%s655 + $0xaa0] sm:$0xff]
                  %1018 = vst [vmem:[%s656 + $0x5a0] sm:$0xff] %v1017
                  %v1019 = vld [vmem:[%s655 + $0xaa8] sm:$0xff]
                  %1020 = vst [vmem:[%s656 + $0x5a8] sm:$0xff] %v1019
                  %v1021 = vld [vmem:[%s655 + $0xab0] sm:$0xff]
                  %1022 = vst [vmem:[%s656 + $0x5b0] sm:$0xff] %v1021
                  %v1023 = vld [vmem:[%s655 + $0xab8] sm:$0xff]
                  %1024 = vst [vmem:[%s656 + $0x5b8] sm:$0xff] %v1023
                  %v1025 = vld [vmem:[%s655 + $0xac0] sm:$0xff]
                  %1026 = vst [vmem:[%s656 + $0x5c0] sm:$0xff] %v1025
                  %v1027 = vld [vmem:[%s655 + $0xac8] sm:$0xff]
                  %1028 = vst [vmem:[%s656 + $0x5c8] sm:$0xff] %v1027
                  %v1029 = vld [vmem:[%s655 + $0xad0] sm:$0xff]
                  %1030 = vst [vmem:[%s656 + $0x5d0] sm:$0xff] %v1029
                  %v1031 = vld [vmem:[%s655 + $0xad8] sm:$0xff]
                  %1032 = vst [vmem:[%s656 + $0x5d8] sm:$0xff] %v1031
                  %v1033 = vld [vmem:[%s655 + $0xae0] sm:$0xff]
                  %1034 = vst [vmem:[%s656 + $0x5e0] sm:$0xff] %v1033
                  %v1035 = vld [vmem:[%s655 + $0xae8] sm:$0xff]
                  %1036 = vst [vmem:[%s656 + $0x5e8] sm:$0xff] %v1035
                  %v1037 = vld [vmem:[%s655 + $0xaf0] sm:$0xff]
                  %1038 = vst [vmem:[%s656 + $0x5f0] sm:$0xff] %v1037
                  %v1039 = vld [vmem:[%s655 + $0xaf8] sm:$0xff]
                  %1040 = vst [vmem:[%s656 + $0x5f8] sm:$0xff] %v1039
                  %v1041 = vld [vmem:[%s655 + $0xc00] sm:$0xff]
                  %1042 = vst [vmem:[%s656 + $0x600] sm:$0xff] %v1041
                  %v1043 = vld [vmem:[%s655 + $0xc08] sm:$0xff]
                  %1044 = vst [vmem:[%s656 + $0x608] sm:$0xff] %v1043
                  %v1045 = vld [vmem:[%s655 + $0xc10] sm:$0xff]
                  %1046 = vst [vmem:[%s656 + $0x610] sm:$0xff] %v1045
                  %v1047 = vld [vmem:[%s655 + $0xc18] sm:$0xff]
                  %1048 = vst [vmem:[%s656 + $0x618] sm:$0xff] %v1047
                  %v1049 = vld [vmem:[%s655 + $0xc20] sm:$0xff]
                  %1050 = vst [vmem:[%s656 + $0x620] sm:$0xff] %v1049
                  %v1051 = vld [vmem:[%s655 + $0xc28] sm:$0xff]
                  %1052 = vst [vmem:[%s656 + $0x628] sm:$0xff] %v1051
                  %v1053 = vld [vmem:[%s655 + $0xc30] sm:$0xff]
                  %1054 = vst [vmem:[%s656 + $0x630] sm:$0xff] %v1053
                  %v1055 = vld [vmem:[%s655 + $0xc38] sm:$0xff]
                  %1056 = vst [vmem:[%s656 + $0x638] sm:$0xff] %v1055
                  %v1057 = vld [vmem:[%s655 + $0xc40] sm:$0xff]
                  %1058 = vst [vmem:[%s656 + $0x640] sm:$0xff] %v1057
                  %v1059 = vld [vmem:[%s655 + $0xc48] sm:$0xff]
                  %1060 = vst [vmem:[%s656 + $0x648] sm:$0xff] %v1059
                  %v1061 = vld [vmem:[%s655 + $0xc50] sm:$0xff]
                  %1062 = vst [vmem:[%s656 + $0x650] sm:$0xff] %v1061
                  %v1063 = vld [vmem:[%s655 + $0xc58] sm:$0xff]
                  %1064 = vst [vmem:[%s656 + $0x658] sm:$0xff] %v1063
                  %v1065 = vld [vmem:[%s655 + $0xc60] sm:$0xff]
                  %1066 = vst [vmem:[%s656 + $0x660] sm:$0xff] %v1065
                  %v1067 = vld [vmem:[%s655 + $0xc68] sm:$0xff]
                  %1068 = vst [vmem:[%s656 + $0x668] sm:$0xff] %v1067
                  %v1069 = vld [vmem:[%s655 + $0xc70] sm:$0xff]
                  %1070 = vst [vmem:[%s656 + $0x670] sm:$0xff] %v1069
                  %v1071 = vld [vmem:[%s655 + $0xc78] sm:$0xff]
                  %1072 = vst [vmem:[%s656 + $0x678] sm:$0xff] %v1071
                  %v1073 = vld [vmem:[%s655 + $0xc80] sm:$0xff]
                  %1074 = vst [vmem:[%s656 + $0x680] sm:$0xff] %v1073
                  %v1075 = vld [vmem:[%s655 + $0xc88] sm:$0xff]
                  %1076 = vst [vmem:[%s656 + $0x688] sm:$0xff] %v1075
                  %v1077 = vld [vmem:[%s655 + $0xc90] sm:$0xff]
                  %1078 = vst [vmem:[%s656 + $0x690] sm:$0xff] %v1077
                  %v1079 = vld [vmem:[%s655 + $0xc98] sm:$0xff]
                  %1080 = vst [vmem:[%s656 + $0x698] sm:$0xff] %v1079
                  %v1081 = vld [vmem:[%s655 + $0xca0] sm:$0xff]
                  %1082 = vst [vmem:[%s656 + $0x6a0] sm:$0xff] %v1081
                  %v1083 = vld [vmem:[%s655 + $0xca8] sm:$0xff]
                  %1084 = vst [vmem:[%s656 + $0x6a8] sm:$0xff] %v1083
                  %v1085 = vld [vmem:[%s655 + $0xcb0] sm:$0xff]
                  %1086 = vst [vmem:[%s656 + $0x6b0] sm:$0xff] %v1085
                  %v1087 = vld [vmem:[%s655 + $0xcb8] sm:$0xff]
                  %1088 = vst [vmem:[%s656 + $0x6b8] sm:$0xff] %v1087
                  %v1089 = vld [vmem:[%s655 + $0xcc0] sm:$0xff]
                  %1090 = vst [vmem:[%s656 + $0x6c0] sm:$0xff] %v1089
                  %v1091 = vld [vmem:[%s655 + $0xcc8] sm:$0xff]
                  %1092 = vst [vmem:[%s656 + $0x6c8] sm:$0xff] %v1091
                  %v1093 = vld [vmem:[%s655 + $0xcd0] sm:$0xff]
                  %1094 = vst [vmem:[%s656 + $0x6d0] sm:$0xff] %v1093
                  %v1095 = vld [vmem:[%s655 + $0xcd8] sm:$0xff]
                  %1096 = vst [vmem:[%s656 + $0x6d8] sm:$0xff] %v1095
                  %v1097 = vld [vmem:[%s655 + $0xce0] sm:$0xff]
                  %1098 = vst [vmem:[%s656 + $0x6e0] sm:$0xff] %v1097
                  %v1099 = vld [vmem:[%s655 + $0xce8] sm:$0xff]
                  %1100 = vst [vmem:[%s656 + $0x6e8] sm:$0xff] %v1099
                  %v1101 = vld [vmem:[%s655 + $0xcf0] sm:$0xff]
                  %1102 = vst [vmem:[%s656 + $0x6f0] sm:$0xff] %v1101
                  %v1103 = vld [vmem:[%s655 + $0xcf8] sm:$0xff]
                  %1104 = vst [vmem:[%s656 + $0x6f8] sm:$0xff] %v1103
                  %v1105 = vld [vmem:[%s655 + $0xe00] sm:$0xff]
                  %1106 = vst [vmem:[%s656 + $0x700] sm:$0xff] %v1105
                  %v1107 = vld [vmem:[%s655 + $0xe08] sm:$0xff]
                  %1108 = vst [vmem:[%s656 + $0x708] sm:$0xff] %v1107
                  %v1109 = vld [vmem:[%s655 + $0xe10] sm:$0xff]
                  %1110 = vst [vmem:[%s656 + $0x710] sm:$0xff] %v1109
                  %v1111 = vld [vmem:[%s655 + $0xe18] sm:$0xff]
                  %1112 = vst [vmem:[%s656 + $0x718] sm:$0xff] %v1111
                  %v1113 = vld [vmem:[%s655 + $0xe20] sm:$0xff]
                  %1114 = vst [vmem:[%s656 + $0x720] sm:$0xff] %v1113
                  %v1115 = vld [vmem:[%s655 + $0xe28] sm:$0xff]
                  %1116 = vst [vmem:[%s656 + $0x728] sm:$0xff] %v1115
                  %v1117 = vld [vmem:[%s655 + $0xe30] sm:$0xff]
                  %1118 = vst [vmem:[%s656 + $0x730] sm:$0xff] %v1117
                  %v1119 = vld [vmem:[%s655 + $0xe38] sm:$0xff]
                  %1120 = vst [vmem:[%s656 + $0x738] sm:$0xff] %v1119
                  %v1121 = vld [vmem:[%s655 + $0xe40] sm:$0xff]
                  %1122 = vst [vmem:[%s656 + $0x740] sm:$0xff] %v1121
                  %v1123 = vld [vmem:[%s655 + $0xe48] sm:$0xff]
                  %1124 = vst [vmem:[%s656 + $0x748] sm:$0xff] %v1123
                  %v1125 = vld [vmem:[%s655 + $0xe50] sm:$0xff]
                  %1126 = vst [vmem:[%s656 + $0x750] sm:$0xff] %v1125
                  %v1127 = vld [vmem:[%s655 + $0xe58] sm:$0xff]
                  %1128 = vst [vmem:[%s656 + $0x758] sm:$0xff] %v1127
                  %v1129 = vld [vmem:[%s655 + $0xe60] sm:$0xff]
                  %1130 = vst [vmem:[%s656 + $0x760] sm:$0xff] %v1129
                  %v1131 = vld [vmem:[%s655 + $0xe68] sm:$0xff]
                  %1132 = vst [vmem:[%s656 + $0x768] sm:$0xff] %v1131
                  %v1133 = vld [vmem:[%s655 + $0xe70] sm:$0xff]
                  %1134 = vst [vmem:[%s656 + $0x770] sm:$0xff] %v1133
                  %v1135 = vld [vmem:[%s655 + $0xe78] sm:$0xff]
                  %1136 = vst [vmem:[%s656 + $0x778] sm:$0xff] %v1135
                  %v1137 = vld [vmem:[%s655 + $0xe80] sm:$0xff]
                  %1138 = vst [vmem:[%s656 + $0x780] sm:$0xff] %v1137
                  %v1139 = vld [vmem:[%s655 + $0xe88] sm:$0xff]
                  %1140 = vst [vmem:[%s656 + $0x788] sm:$0xff] %v1139
                  %v1141 = vld [vmem:[%s655 + $0xe90] sm:$0xff]
                  %1142 = vst [vmem:[%s656 + $0x790] sm:$0xff] %v1141
                  %v1143 = vld [vmem:[%s655 + $0xe98] sm:$0xff]
                  %1144 = vst [vmem:[%s656 + $0x798] sm:$0xff] %v1143
                  %v1145 = vld [vmem:[%s655 + $0xea0] sm:$0xff]
                  %1146 = vst [vmem:[%s656 + $0x7a0] sm:$0xff] %v1145
                  %v1147 = vld [vmem:[%s655 + $0xea8] sm:$0xff]
                  %1148 = vst [vmem:[%s656 + $0x7a8] sm:$0xff] %v1147
                  %v1149 = vld [vmem:[%s655 + $0xeb0] sm:$0xff]
                  %1150 = vst [vmem:[%s656 + $0x7b0] sm:$0xff] %v1149
                  %v1151 = vld [vmem:[%s655 + $0xeb8] sm:$0xff]
                  %1152 = vst [vmem:[%s656 + $0x7b8] sm:$0xff] %v1151
                  %v1153 = vld [vmem:[%s655 + $0xec0] sm:$0xff]
                  %1154 = vst [vmem:[%s656 + $0x7c0] sm:$0xff] %v1153
                  %v1155 = vld [vmem:[%s655 + $0xec8] sm:$0xff]
                  %1156 = vst [vmem:[%s656 + $0x7c8] sm:$0xff] %v1155
                  %v1157 = vld [vmem:[%s655 + $0xed0] sm:$0xff]
                  %1158 = vst [vmem:[%s656 + $0x7d0] sm:$0xff] %v1157
                  %v1159 = vld [vmem:[%s655 + $0xed8] sm:$0xff]
                  %1160 = vst [vmem:[%s656 + $0x7d8] sm:$0xff] %v1159
                  %v1161 = vld [vmem:[%s655 + $0xee0] sm:$0xff]
                  %1162 = vst [vmem:[%s656 + $0x7e0] sm:$0xff] %v1161
                  %v1163 = vld [vmem:[%s655 + $0xee8] sm:$0xff]
                  %1164 = vst [vmem:[%s656 + $0x7e8] sm:$0xff] %v1163
                  %v1165 = vld [vmem:[%s655 + $0xef0] sm:$0xff]
                  %1166 = vst [vmem:[%s656 + $0x7f0] sm:$0xff] %v1165
                  %v1167 = vld [vmem:[%s655 + $0xef8] sm:$0xff]
                  %1168 = vst [vmem:[%s656 + $0x7f8] sm:$0xff] %v1167
                $region48: #{memristor_forward.1} parent=42 // loop_footer
                  %s654 = sadd.s32 1, %s650
                $region49: #{memristor_forward.1} parent=42 // loop_footer_branch
                  %649 = sbr.rel target = $region45
                $region50: #{memristor_forward.1} parent=42 // loop_exit
                  _
              $region43: #{memristor_forward.1} parent=27 // pred_fallthru
                _
              // Predicated region
              $region51: #{memristor_forward.1} parent=27 // pred_check
                _
              $region52: #{memristor_forward.1} parent=27 // pred_check_branch
                %1170 = sbr.rel target = $region54
              $region53: #{memristor_forward.1} parent=27 // pred_region
                _
              $region54: #{memristor_forward.1} parent=27 // pred_fallthru
                _
            $region28: #{memristor_forward.1} parent=23 // pred_fallthru
              _
            // Predicated region
            $region29: #{memristor_forward.1} parent=23 // pred_check
              _
            $region30: #{memristor_forward.1} parent=23 // pred_check_branch
              %124 = sbr.rel target = $region32
            $region31: #{memristor_forward.1} parent=23 // pred_region
              %s126 = ssub.s32 256, 1
              loop: start=0, step=1, limit=1
              $region33: #{memristor_forward.1} parent=31 // loop_pre_header
                _
              $region34: #{memristor_forward.1} parent=31 // loop_header
                %s128 = sphi 0, %s132
                %p129 = scmp.ge.s32.totalorder %s128, 1
                %s133 = sphi %s118, %s118
                %s134 = sphi %s111, %s111
              $region35: #{memristor_forward.1} parent=31 // loop_header_branch
                %131 = sbr.rel (%p129) target = $region39
              $region36: #{memristor_forward.1} parent=31 // loop_body
                %v135 = vld [vmem:[%s133] sm:%s126]
                %136 = vst [vmem:[%s134] sm:%s126] %v135
                %v137 = vld [vmem:[%s133 + $0x8] sm:%s126]
                %138 = vst [vmem:[%s134 + $0x8] sm:%s126] %v137
                %v139 = vld [vmem:[%s133 + $0x10] sm:%s126]
                %140 = vst [vmem:[%s134 + $0x10] sm:%s126] %v139
                %v141 = vld [vmem:[%s133 + $0x18] sm:%s126]
                %142 = vst [vmem:[%s134 + $0x18] sm:%s126] %v141
                %v143 = vld [vmem:[%s133 + $0x20] sm:%s126]
                %144 = vst [vmem:[%s134 + $0x20] sm:%s126] %v143
                %v145 = vld [vmem:[%s133 + $0x28] sm:%s126]
                %146 = vst [vmem:[%s134 + $0x28] sm:%s126] %v145
                %v147 = vld [vmem:[%s133 + $0x30] sm:%s126]
                %148 = vst [vmem:[%s134 + $0x30] sm:%s126] %v147
                %v149 = vld [vmem:[%s133 + $0x38] sm:%s126]
                %150 = vst [vmem:[%s134 + $0x38] sm:%s126] %v149
                %v151 = vld [vmem:[%s133 + $0x40] sm:%s126]
                %152 = vst [vmem:[%s134 + $0x40] sm:%s126] %v151
                %v153 = vld [vmem:[%s133 + $0x48] sm:%s126]
                %154 = vst [vmem:[%s134 + $0x48] sm:%s126] %v153
                %v155 = vld [vmem:[%s133 + $0x50] sm:%s126]
                %156 = vst [vmem:[%s134 + $0x50] sm:%s126] %v155
                %v157 = vld [vmem:[%s133 + $0x58] sm:%s126]
                %158 = vst [vmem:[%s134 + $0x58] sm:%s126] %v157
                %v159 = vld [vmem:[%s133 + $0x60] sm:%s126]
                %160 = vst [vmem:[%s134 + $0x60] sm:%s126] %v159
                %v161 = vld [vmem:[%s133 + $0x68] sm:%s126]
                %162 = vst [vmem:[%s134 + $0x68] sm:%s126] %v161
                %v163 = vld [vmem:[%s133 + $0x70] sm:%s126]
                %164 = vst [vmem:[%s134 + $0x70] sm:%s126] %v163
                %v165 = vld [vmem:[%s133 + $0x78] sm:%s126]
                %166 = vst [vmem:[%s134 + $0x78] sm:%s126] %v165
                %v167 = vld [vmem:[%s133 + $0x80] sm:%s126]
                %168 = vst [vmem:[%s134 + $0x80] sm:%s126] %v167
                %v169 = vld [vmem:[%s133 + $0x88] sm:%s126]
                %170 = vst [vmem:[%s134 + $0x88] sm:%s126] %v169
                %v171 = vld [vmem:[%s133 + $0x90] sm:%s126]
                %172 = vst [vmem:[%s134 + $0x90] sm:%s126] %v171
                %v173 = vld [vmem:[%s133 + $0x98] sm:%s126]
                %174 = vst [vmem:[%s134 + $0x98] sm:%s126] %v173
                %v175 = vld [vmem:[%s133 + $0xa0] sm:%s126]
                %176 = vst [vmem:[%s134 + $0xa0] sm:%s126] %v175
                %v177 = vld [vmem:[%s133 + $0xa8] sm:%s126]
                %178 = vst [vmem:[%s134 + $0xa8] sm:%s126] %v177
                %v179 = vld [vmem:[%s133 + $0xb0] sm:%s126]
                %180 = vst [vmem:[%s134 + $0xb0] sm:%s126] %v179
                %v181 = vld [vmem:[%s133 + $0xb8] sm:%s126]
                %182 = vst [vmem:[%s134 + $0xb8] sm:%s126] %v181
                %v183 = vld [vmem:[%s133 + $0xc0] sm:%s126]
                %184 = vst [vmem:[%s134 + $0xc0] sm:%s126] %v183
                %v185 = vld [vmem:[%s133 + $0xc8] sm:%s126]
                %186 = vst [vmem:[%s134 + $0xc8] sm:%s126] %v185
                %v187 = vld [vmem:[%s133 + $0xd0] sm:%s126]
                %188 = vst [vmem:[%s134 + $0xd0] sm:%s126] %v187
                %v189 = vld [vmem:[%s133 + $0xd8] sm:%s126]
                %190 = vst [vmem:[%s134 + $0xd8] sm:%s126] %v189
                %v191 = vld [vmem:[%s133 + $0xe0] sm:%s126]
                %192 = vst [vmem:[%s134 + $0xe0] sm:%s126] %v191
                %v193 = vld [vmem:[%s133 + $0xe8] sm:%s126]
                %194 = vst [vmem:[%s134 + $0xe8] sm:%s126] %v193
                %v195 = vld [vmem:[%s133 + $0xf0] sm:%s126]
                %196 = vst [vmem:[%s134 + $0xf0] sm:%s126] %v195
                %v197 = vld [vmem:[%s133 + $0xf8] sm:%s126]
                %198 = vst [vmem:[%s134 + $0xf8] sm:%s126] %v197
                %v199 = vld [vmem:[%s133 + $0x200] sm:%s126]
                %200 = vst [vmem:[%s134 + $0x100] sm:%s126] %v199
                %v201 = vld [vmem:[%s133 + $0x208] sm:%s126]
                %202 = vst [vmem:[%s134 + $0x108] sm:%s126] %v201
                %v203 = vld [vmem:[%s133 + $0x210] sm:%s126]
                %204 = vst [vmem:[%s134 + $0x110] sm:%s126] %v203
                %v205 = vld [vmem:[%s133 + $0x218] sm:%s126]
                %206 = vst [vmem:[%s134 + $0x118] sm:%s126] %v205
                %v207 = vld [vmem:[%s133 + $0x220] sm:%s126]
                %208 = vst [vmem:[%s134 + $0x120] sm:%s126] %v207
                %v209 = vld [vmem:[%s133 + $0x228] sm:%s126]
                %210 = vst [vmem:[%s134 + $0x128] sm:%s126] %v209
                %v211 = vld [vmem:[%s133 + $0x230] sm:%s126]
                %212 = vst [vmem:[%s134 + $0x130] sm:%s126] %v211
                %v213 = vld [vmem:[%s133 + $0x238] sm:%s126]
                %214 = vst [vmem:[%s134 + $0x138] sm:%s126] %v213
                %v215 = vld [vmem:[%s133 + $0x240] sm:%s126]
                %216 = vst [vmem:[%s134 + $0x140] sm:%s126] %v215
                %v217 = vld [vmem:[%s133 + $0x248] sm:%s126]
                %218 = vst [vmem:[%s134 + $0x148] sm:%s126] %v217
                %v219 = vld [vmem:[%s133 + $0x250] sm:%s126]
                %220 = vst [vmem:[%s134 + $0x150] sm:%s126] %v219
                %v221 = vld [vmem:[%s133 + $0x258] sm:%s126]
                %222 = vst [vmem:[%s134 + $0x158] sm:%s126] %v221
                %v223 = vld [vmem:[%s133 + $0x260] sm:%s126]
                %224 = vst [vmem:[%s134 + $0x160] sm:%s126] %v223
                %v225 = vld [vmem:[%s133 + $0x268] sm:%s126]
                %226 = vst [vmem:[%s134 + $0x168] sm:%s126] %v225
                %v227 = vld [vmem:[%s133 + $0x270] sm:%s126]
                %228 = vst [vmem:[%s134 + $0x170] sm:%s126] %v227
                %v229 = vld [vmem:[%s133 + $0x278] sm:%s126]
                %230 = vst [vmem:[%s134 + $0x178] sm:%s126] %v229
                %v231 = vld [vmem:[%s133 + $0x280] sm:%s126]
                %232 = vst [vmem:[%s134 + $0x180] sm:%s126] %v231
                %v233 = vld [vmem:[%s133 + $0x288] sm:%s126]
                %234 = vst [vmem:[%s134 + $0x188] sm:%s126] %v233
                %v235 = vld [vmem:[%s133 + $0x290] sm:%s126]
                %236 = vst [vmem:[%s134 + $0x190] sm:%s126] %v235
                %v237 = vld [vmem:[%s133 + $0x298] sm:%s126]
                %238 = vst [vmem:[%s134 + $0x198] sm:%s126] %v237
                %v239 = vld [vmem:[%s133 + $0x2a0] sm:%s126]
                %240 = vst [vmem:[%s134 + $0x1a0] sm:%s126] %v239
                %v241 = vld [vmem:[%s133 + $0x2a8] sm:%s126]
                %242 = vst [vmem:[%s134 + $0x1a8] sm:%s126] %v241
                %v243 = vld [vmem:[%s133 + $0x2b0] sm:%s126]
                %244 = vst [vmem:[%s134 + $0x1b0] sm:%s126] %v243
                %v245 = vld [vmem:[%s133 + $0x2b8] sm:%s126]
                %246 = vst [vmem:[%s134 + $0x1b8] sm:%s126] %v245
                %v247 = vld [vmem:[%s133 + $0x2c0] sm:%s126]
                %248 = vst [vmem:[%s134 + $0x1c0] sm:%s126] %v247
                %v249 = vld [vmem:[%s133 + $0x2c8] sm:%s126]
                %250 = vst [vmem:[%s134 + $0x1c8] sm:%s126] %v249
                %v251 = vld [vmem:[%s133 + $0x2d0] sm:%s126]
                %252 = vst [vmem:[%s134 + $0x1d0] sm:%s126] %v251
                %v253 = vld [vmem:[%s133 + $0x2d8] sm:%s126]
                %254 = vst [vmem:[%s134 + $0x1d8] sm:%s126] %v253
                %v255 = vld [vmem:[%s133 + $0x2e0] sm:%s126]
                %256 = vst [vmem:[%s134 + $0x1e0] sm:%s126] %v255
                %v257 = vld [vmem:[%s133 + $0x2e8] sm:%s126]
                %258 = vst [vmem:[%s134 + $0x1e8] sm:%s126] %v257
                %v259 = vld [vmem:[%s133 + $0x2f0] sm:%s126]
                %260 = vst [vmem:[%s134 + $0x1f0] sm:%s126] %v259
                %v261 = vld [vmem:[%s133 + $0x2f8] sm:%s126]
                %262 = vst [vmem:[%s134 + $0x1f8] sm:%s126] %v261
                %v263 = vld [vmem:[%s133 + $0x400] sm:%s126]
                %264 = vst [vmem:[%s134 + $0x200] sm:%s126] %v263
                %v265 = vld [vmem:[%s133 + $0x408] sm:%s126]
                %266 = vst [vmem:[%s134 + $0x208] sm:%s126] %v265
                %v267 = vld [vmem:[%s133 + $0x410] sm:%s126]
                %268 = vst [vmem:[%s134 + $0x210] sm:%s126] %v267
                %v269 = vld [vmem:[%s133 + $0x418] sm:%s126]
                %270 = vst [vmem:[%s134 + $0x218] sm:%s126] %v269
                %v271 = vld [vmem:[%s133 + $0x420] sm:%s126]
                %272 = vst [vmem:[%s134 + $0x220] sm:%s126] %v271
                %v273 = vld [vmem:[%s133 + $0x428] sm:%s126]
                %274 = vst [vmem:[%s134 + $0x228] sm:%s126] %v273
                %v275 = vld [vmem:[%s133 + $0x430] sm:%s126]
                %276 = vst [vmem:[%s134 + $0x230] sm:%s126] %v275
                %v277 = vld [vmem:[%s133 + $0x438] sm:%s126]
                %278 = vst [vmem:[%s134 + $0x238] sm:%s126] %v277
                %v279 = vld [vmem:[%s133 + $0x440] sm:%s126]
                %280 = vst [vmem:[%s134 + $0x240] sm:%s126] %v279
                %v281 = vld [vmem:[%s133 + $0x448] sm:%s126]
                %282 = vst [vmem:[%s134 + $0x248] sm:%s126] %v281
                %v283 = vld [vmem:[%s133 + $0x450] sm:%s126]
                %284 = vst [vmem:[%s134 + $0x250] sm:%s126] %v283
                %v285 = vld [vmem:[%s133 + $0x458] sm:%s126]
                %286 = vst [vmem:[%s134 + $0x258] sm:%s126] %v285
                %v287 = vld [vmem:[%s133 + $0x460] sm:%s126]
                %288 = vst [vmem:[%s134 + $0x260] sm:%s126] %v287
                %v289 = vld [vmem:[%s133 + $0x468] sm:%s126]
                %290 = vst [vmem:[%s134 + $0x268] sm:%s126] %v289
                %v291 = vld [vmem:[%s133 + $0x470] sm:%s126]
                %292 = vst [vmem:[%s134 + $0x270] sm:%s126] %v291
                %v293 = vld [vmem:[%s133 + $0x478] sm:%s126]
                %294 = vst [vmem:[%s134 + $0x278] sm:%s126] %v293
                %v295 = vld [vmem:[%s133 + $0x480] sm:%s126]
                %296 = vst [vmem:[%s134 + $0x280] sm:%s126] %v295
                %v297 = vld [vmem:[%s133 + $0x488] sm:%s126]
                %298 = vst [vmem:[%s134 + $0x288] sm:%s126] %v297
                %v299 = vld [vmem:[%s133 + $0x490] sm:%s126]
                %300 = vst [vmem:[%s134 + $0x290] sm:%s126] %v299
                %v301 = vld [vmem:[%s133 + $0x498] sm:%s126]
                %302 = vst [vmem:[%s134 + $0x298] sm:%s126] %v301
                %v303 = vld [vmem:[%s133 + $0x4a0] sm:%s126]
                %304 = vst [vmem:[%s134 + $0x2a0] sm:%s126] %v303
                %v305 = vld [vmem:[%s133 + $0x4a8] sm:%s126]
                %306 = vst [vmem:[%s134 + $0x2a8] sm:%s126] %v305
                %v307 = vld [vmem:[%s133 + $0x4b0] sm:%s126]
                %308 = vst [vmem:[%s134 + $0x2b0] sm:%s126] %v307
                %v309 = vld [vmem:[%s133 + $0x4b8] sm:%s126]
                %310 = vst [vmem:[%s134 + $0x2b8] sm:%s126] %v309
                %v311 = vld [vmem:[%s133 + $0x4c0] sm:%s126]
                %312 = vst [vmem:[%s134 + $0x2c0] sm:%s126] %v311
                %v313 = vld [vmem:[%s133 + $0x4c8] sm:%s126]
                %314 = vst [vmem:[%s134 + $0x2c8] sm:%s126] %v313
                %v315 = vld [vmem:[%s133 + $0x4d0] sm:%s126]
                %316 = vst [vmem:[%s134 + $0x2d0] sm:%s126] %v315
                %v317 = vld [vmem:[%s133 + $0x4d8] sm:%s126]
                %318 = vst [vmem:[%s134 + $0x2d8] sm:%s126] %v317
                %v319 = vld [vmem:[%s133 + $0x4e0] sm:%s126]
                %320 = vst [vmem:[%s134 + $0x2e0] sm:%s126] %v319
                %v321 = vld [vmem:[%s133 + $0x4e8] sm:%s126]
                %322 = vst [vmem:[%s134 + $0x2e8] sm:%s126] %v321
                %v323 = vld [vmem:[%s133 + $0x4f0] sm:%s126]
                %324 = vst [vmem:[%s134 + $0x2f0] sm:%s126] %v323
                %v325 = vld [vmem:[%s133 + $0x4f8] sm:%s126]
                %326 = vst [vmem:[%s134 + $0x2f8] sm:%s126] %v325
                %v327 = vld [vmem:[%s133 + $0x600] sm:%s126]
                %328 = vst [vmem:[%s134 + $0x300] sm:%s126] %v327
                %v329 = vld [vmem:[%s133 + $0x608] sm:%s126]
                %330 = vst [vmem:[%s134 + $0x308] sm:%s126] %v329
                %v331 = vld [vmem:[%s133 + $0x610] sm:%s126]
                %332 = vst [vmem:[%s134 + $0x310] sm:%s126] %v331
                %v333 = vld [vmem:[%s133 + $0x618] sm:%s126]
                %334 = vst [vmem:[%s134 + $0x318] sm:%s126] %v333
                %v335 = vld [vmem:[%s133 + $0x620] sm:%s126]
                %336 = vst [vmem:[%s134 + $0x320] sm:%s126] %v335
                %v337 = vld [vmem:[%s133 + $0x628] sm:%s126]
                %338 = vst [vmem:[%s134 + $0x328] sm:%s126] %v337
                %v339 = vld [vmem:[%s133 + $0x630] sm:%s126]
                %340 = vst [vmem:[%s134 + $0x330] sm:%s126] %v339
                %v341 = vld [vmem:[%s133 + $0x638] sm:%s126]
                %342 = vst [vmem:[%s134 + $0x338] sm:%s126] %v341
                %v343 = vld [vmem:[%s133 + $0x640] sm:%s126]
                %344 = vst [vmem:[%s134 + $0x340] sm:%s126] %v343
                %v345 = vld [vmem:[%s133 + $0x648] sm:%s126]
                %346 = vst [vmem:[%s134 + $0x348] sm:%s126] %v345
                %v347 = vld [vmem:[%s133 + $0x650] sm:%s126]
                %348 = vst [vmem:[%s134 + $0x350] sm:%s126] %v347
                %v349 = vld [vmem:[%s133 + $0x658] sm:%s126]
                %350 = vst [vmem:[%s134 + $0x358] sm:%s126] %v349
                %v351 = vld [vmem:[%s133 + $0x660] sm:%s126]
                %352 = vst [vmem:[%s134 + $0x360] sm:%s126] %v351
                %v353 = vld [vmem:[%s133 + $0x668] sm:%s126]
                %354 = vst [vmem:[%s134 + $0x368] sm:%s126] %v353
                %v355 = vld [vmem:[%s133 + $0x670] sm:%s126]
                %356 = vst [vmem:[%s134 + $0x370] sm:%s126] %v355
                %v357 = vld [vmem:[%s133 + $0x678] sm:%s126]
                %358 = vst [vmem:[%s134 + $0x378] sm:%s126] %v357
                %v359 = vld [vmem:[%s133 + $0x680] sm:%s126]
                %360 = vst [vmem:[%s134 + $0x380] sm:%s126] %v359
                %v361 = vld [vmem:[%s133 + $0x688] sm:%s126]
                %362 = vst [vmem:[%s134 + $0x388] sm:%s126] %v361
                %v363 = vld [vmem:[%s133 + $0x690] sm:%s126]
                %364 = vst [vmem:[%s134 + $0x390] sm:%s126] %v363
                %v365 = vld [vmem:[%s133 + $0x698] sm:%s126]
                %366 = vst [vmem:[%s134 + $0x398] sm:%s126] %v365
                %v367 = vld [vmem:[%s133 + $0x6a0] sm:%s126]
                %368 = vst [vmem:[%s134 + $0x3a0] sm:%s126] %v367
                %v369 = vld [vmem:[%s133 + $0x6a8] sm:%s126]
                %370 = vst [vmem:[%s134 + $0x3a8] sm:%s126] %v369
                %v371 = vld [vmem:[%s133 + $0x6b0] sm:%s126]
                %372 = vst [vmem:[%s134 + $0x3b0] sm:%s126] %v371
                %v373 = vld [vmem:[%s133 + $0x6b8] sm:%s126]
                %374 = vst [vmem:[%s134 + $0x3b8] sm:%s126] %v373
                %v375 = vld [vmem:[%s133 + $0x6c0] sm:%s126]
                %376 = vst [vmem:[%s134 + $0x3c0] sm:%s126] %v375
                %v377 = vld [vmem:[%s133 + $0x6c8] sm:%s126]
                %378 = vst [vmem:[%s134 + $0x3c8] sm:%s126] %v377
                %v379 = vld [vmem:[%s133 + $0x6d0] sm:%s126]
                %380 = vst [vmem:[%s134 + $0x3d0] sm:%s126] %v379
                %v381 = vld [vmem:[%s133 + $0x6d8] sm:%s126]
                %382 = vst [vmem:[%s134 + $0x3d8] sm:%s126] %v381
                %v383 = vld [vmem:[%s133 + $0x6e0] sm:%s126]
                %384 = vst [vmem:[%s134 + $0x3e0] sm:%s126] %v383
                %v385 = vld [vmem:[%s133 + $0x6e8] sm:%s126]
                %386 = vst [vmem:[%s134 + $0x3e8] sm:%s126] %v385
                %v387 = vld [vmem:[%s133 + $0x6f0] sm:%s126]
                %388 = vst [vmem:[%s134 + $0x3f0] sm:%s126] %v387
                %v389 = vld [vmem:[%s133 + $0x6f8] sm:%s126]
                %390 = vst [vmem:[%s134 + $0x3f8] sm:%s126] %v389
                %v391 = vld [vmem:[%s133 + $0x800] sm:%s126]
                %392 = vst [vmem:[%s134 + $0x400] sm:%s126] %v391
                %v393 = vld [vmem:[%s133 + $0x808] sm:%s126]
                %394 = vst [vmem:[%s134 + $0x408] sm:%s126] %v393
                %v395 = vld [vmem:[%s133 + $0x810] sm:%s126]
                %396 = vst [vmem:[%s134 + $0x410] sm:%s126] %v395
                %v397 = vld [vmem:[%s133 + $0x818] sm:%s126]
                %398 = vst [vmem:[%s134 + $0x418] sm:%s126] %v397
                %v399 = vld [vmem:[%s133 + $0x820] sm:%s126]
                %400 = vst [vmem:[%s134 + $0x420] sm:%s126] %v399
                %v401 = vld [vmem:[%s133 + $0x828] sm:%s126]
                %402 = vst [vmem:[%s134 + $0x428] sm:%s126] %v401
                %v403 = vld [vmem:[%s133 + $0x830] sm:%s126]
                %404 = vst [vmem:[%s134 + $0x430] sm:%s126] %v403
                %v405 = vld [vmem:[%s133 + $0x838] sm:%s126]
                %406 = vst [vmem:[%s134 + $0x438] sm:%s126] %v405
                %v407 = vld [vmem:[%s133 + $0x840] sm:%s126]
                %408 = vst [vmem:[%s134 + $0x440] sm:%s126] %v407
                %v409 = vld [vmem:[%s133 + $0x848] sm:%s126]
                %410 = vst [vmem:[%s134 + $0x448] sm:%s126] %v409
                %v411 = vld [vmem:[%s133 + $0x850] sm:%s126]
                %412 = vst [vmem:[%s134 + $0x450] sm:%s126] %v411
                %v413 = vld [vmem:[%s133 + $0x858] sm:%s126]
                %414 = vst [vmem:[%s134 + $0x458] sm:%s126] %v413
                %v415 = vld [vmem:[%s133 + $0x860] sm:%s126]
                %416 = vst [vmem:[%s134 + $0x460] sm:%s126] %v415
                %v417 = vld [vmem:[%s133 + $0x868] sm:%s126]
                %418 = vst [vmem:[%s134 + $0x468] sm:%s126] %v417
                %v419 = vld [vmem:[%s133 + $0x870] sm:%s126]
                %420 = vst [vmem:[%s134 + $0x470] sm:%s126] %v419
                %v421 = vld [vmem:[%s133 + $0x878] sm:%s126]
                %422 = vst [vmem:[%s134 + $0x478] sm:%s126] %v421
                %v423 = vld [vmem:[%s133 + $0x880] sm:%s126]
                %424 = vst [vmem:[%s134 + $0x480] sm:%s126] %v423
                %v425 = vld [vmem:[%s133 + $0x888] sm:%s126]
                %426 = vst [vmem:[%s134 + $0x488] sm:%s126] %v425
                %v427 = vld [vmem:[%s133 + $0x890] sm:%s126]
                %428 = vst [vmem:[%s134 + $0x490] sm:%s126] %v427
                %v429 = vld [vmem:[%s133 + $0x898] sm:%s126]
                %430 = vst [vmem:[%s134 + $0x498] sm:%s126] %v429
                %v431 = vld [vmem:[%s133 + $0x8a0] sm:%s126]
                %432 = vst [vmem:[%s134 + $0x4a0] sm:%s126] %v431
                %v433 = vld [vmem:[%s133 + $0x8a8] sm:%s126]
                %434 = vst [vmem:[%s134 + $0x4a8] sm:%s126] %v433
                %v435 = vld [vmem:[%s133 + $0x8b0] sm:%s126]
                %436 = vst [vmem:[%s134 + $0x4b0] sm:%s126] %v435
                %v437 = vld [vmem:[%s133 + $0x8b8] sm:%s126]
                %438 = vst [vmem:[%s134 + $0x4b8] sm:%s126] %v437
                %v439 = vld [vmem:[%s133 + $0x8c0] sm:%s126]
                %440 = vst [vmem:[%s134 + $0x4c0] sm:%s126] %v439
                %v441 = vld [vmem:[%s133 + $0x8c8] sm:%s126]
                %442 = vst [vmem:[%s134 + $0x4c8] sm:%s126] %v441
                %v443 = vld [vmem:[%s133 + $0x8d0] sm:%s126]
                %444 = vst [vmem:[%s134 + $0x4d0] sm:%s126] %v443
                %v445 = vld [vmem:[%s133 + $0x8d8] sm:%s126]
                %446 = vst [vmem:[%s134 + $0x4d8] sm:%s126] %v445
                %v447 = vld [vmem:[%s133 + $0x8e0] sm:%s126]
                %448 = vst [vmem:[%s134 + $0x4e0] sm:%s126] %v447
                %v449 = vld [vmem:[%s133 + $0x8e8] sm:%s126]
                %450 = vst [vmem:[%s134 + $0x4e8] sm:%s126] %v449
                %v451 = vld [vmem:[%s133 + $0x8f0] sm:%s126]
                %452 = vst [vmem:[%s134 + $0x4f0] sm:%s126] %v451
                %v453 = vld [vmem:[%s133 + $0x8f8] sm:%s126]
                %454 = vst [vmem:[%s134 + $0x4f8] sm:%s126] %v453
                %v455 = vld [vmem:[%s133 + $0xa00] sm:%s126]
                %456 = vst [vmem:[%s134 + $0x500] sm:%s126] %v455
                %v457 = vld [vmem:[%s133 + $0xa08] sm:%s126]
                %458 = vst [vmem:[%s134 + $0x508] sm:%s126] %v457
                %v459 = vld [vmem:[%s133 + $0xa10] sm:%s126]
                %460 = vst [vmem:[%s134 + $0x510] sm:%s126] %v459
                %v461 = vld [vmem:[%s133 + $0xa18] sm:%s126]
                %462 = vst [vmem:[%s134 + $0x518] sm:%s126] %v461
                %v463 = vld [vmem:[%s133 + $0xa20] sm:%s126]
                %464 = vst [vmem:[%s134 + $0x520] sm:%s126] %v463
                %v465 = vld [vmem:[%s133 + $0xa28] sm:%s126]
                %466 = vst [vmem:[%s134 + $0x528] sm:%s126] %v465
                %v467 = vld [vmem:[%s133 + $0xa30] sm:%s126]
                %468 = vst [vmem:[%s134 + $0x530] sm:%s126] %v467
                %v469 = vld [vmem:[%s133 + $0xa38] sm:%s126]
                %470 = vst [vmem:[%s134 + $0x538] sm:%s126] %v469
                %v471 = vld [vmem:[%s133 + $0xa40] sm:%s126]
                %472 = vst [vmem:[%s134 + $0x540] sm:%s126] %v471
                %v473 = vld [vmem:[%s133 + $0xa48] sm:%s126]
                %474 = vst [vmem:[%s134 + $0x548] sm:%s126] %v473
                %v475 = vld [vmem:[%s133 + $0xa50] sm:%s126]
                %476 = vst [vmem:[%s134 + $0x550] sm:%s126] %v475
                %v477 = vld [vmem:[%s133 + $0xa58] sm:%s126]
                %478 = vst [vmem:[%s134 + $0x558] sm:%s126] %v477
                %v479 = vld [vmem:[%s133 + $0xa60] sm:%s126]
                %480 = vst [vmem:[%s134 + $0x560] sm:%s126] %v479
                %v481 = vld [vmem:[%s133 + $0xa68] sm:%s126]
                %482 = vst [vmem:[%s134 + $0x568] sm:%s126] %v481
                %v483 = vld [vmem:[%s133 + $0xa70] sm:%s126]
                %484 = vst [vmem:[%s134 + $0x570] sm:%s126] %v483
                %v485 = vld [vmem:[%s133 + $0xa78] sm:%s126]
                %486 = vst [vmem:[%s134 + $0x578] sm:%s126] %v485
                %v487 = vld [vmem:[%s133 + $0xa80] sm:%s126]
                %488 = vst [vmem:[%s134 + $0x580] sm:%s126] %v487
                %v489 = vld [vmem:[%s133 + $0xa88] sm:%s126]
                %490 = vst [vmem:[%s134 + $0x588] sm:%s126] %v489
                %v491 = vld [vmem:[%s133 + $0xa90] sm:%s126]
                %492 = vst [vmem:[%s134 + $0x590] sm:%s126] %v491
                %v493 = vld [vmem:[%s133 + $0xa98] sm:%s126]
                %494 = vst [vmem:[%s134 + $0x598] sm:%s126] %v493
                %v495 = vld [vmem:[%s133 + $0xaa0] sm:%s126]
                %496 = vst [vmem:[%s134 + $0x5a0] sm:%s126] %v495
                %v497 = vld [vmem:[%s133 + $0xaa8] sm:%s126]
                %498 = vst [vmem:[%s134 + $0x5a8] sm:%s126] %v497
                %v499 = vld [vmem:[%s133 + $0xab0] sm:%s126]
                %500 = vst [vmem:[%s134 + $0x5b0] sm:%s126] %v499
                %v501 = vld [vmem:[%s133 + $0xab8] sm:%s126]
                %502 = vst [vmem:[%s134 + $0x5b8] sm:%s126] %v501
                %v503 = vld [vmem:[%s133 + $0xac0] sm:%s126]
                %504 = vst [vmem:[%s134 + $0x5c0] sm:%s126] %v503
                %v505 = vld [vmem:[%s133 + $0xac8] sm:%s126]
                %506 = vst [vmem:[%s134 + $0x5c8] sm:%s126] %v505
                %v507 = vld [vmem:[%s133 + $0xad0] sm:%s126]
                %508 = vst [vmem:[%s134 + $0x5d0] sm:%s126] %v507
                %v509 = vld [vmem:[%s133 + $0xad8] sm:%s126]
                %510 = vst [vmem:[%s134 + $0x5d8] sm:%s126] %v509
                %v511 = vld [vmem:[%s133 + $0xae0] sm:%s126]
                %512 = vst [vmem:[%s134 + $0x5e0] sm:%s126] %v511
                %v513 = vld [vmem:[%s133 + $0xae8] sm:%s126]
                %514 = vst [vmem:[%s134 + $0x5e8] sm:%s126] %v513
                %v515 = vld [vmem:[%s133 + $0xaf0] sm:%s126]
                %516 = vst [vmem:[%s134 + $0x5f0] sm:%s126] %v515
                %v517 = vld [vmem:[%s133 + $0xaf8] sm:%s126]
                %518 = vst [vmem:[%s134 + $0x5f8] sm:%s126] %v517
                %v519 = vld [vmem:[%s133 + $0xc00] sm:%s126]
                %520 = vst [vmem:[%s134 + $0x600] sm:%s126] %v519
                %v521 = vld [vmem:[%s133 + $0xc08] sm:%s126]
                %522 = vst [vmem:[%s134 + $0x608] sm:%s126] %v521
                %v523 = vld [vmem:[%s133 + $0xc10] sm:%s126]
                %524 = vst [vmem:[%s134 + $0x610] sm:%s126] %v523
                %v525 = vld [vmem:[%s133 + $0xc18] sm:%s126]
                %526 = vst [vmem:[%s134 + $0x618] sm:%s126] %v525
                %v527 = vld [vmem:[%s133 + $0xc20] sm:%s126]
                %528 = vst [vmem:[%s134 + $0x620] sm:%s126] %v527
                %v529 = vld [vmem:[%s133 + $0xc28] sm:%s126]
                %530 = vst [vmem:[%s134 + $0x628] sm:%s126] %v529
                %v531 = vld [vmem:[%s133 + $0xc30] sm:%s126]
                %532 = vst [vmem:[%s134 + $0x630] sm:%s126] %v531
                %v533 = vld [vmem:[%s133 + $0xc38] sm:%s126]
                %534 = vst [vmem:[%s134 + $0x638] sm:%s126] %v533
                %v535 = vld [vmem:[%s133 + $0xc40] sm:%s126]
                %536 = vst [vmem:[%s134 + $0x640] sm:%s126] %v535
                %v537 = vld [vmem:[%s133 + $0xc48] sm:%s126]
                %538 = vst [vmem:[%s134 + $0x648] sm:%s126] %v537
                %v539 = vld [vmem:[%s133 + $0xc50] sm:%s126]
                %540 = vst [vmem:[%s134 + $0x650] sm:%s126] %v539
                %v541 = vld [vmem:[%s133 + $0xc58] sm:%s126]
                %542 = vst [vmem:[%s134 + $0x658] sm:%s126] %v541
                %v543 = vld [vmem:[%s133 + $0xc60] sm:%s126]
                %544 = vst [vmem:[%s134 + $0x660] sm:%s126] %v543
                %v545 = vld [vmem:[%s133 + $0xc68] sm:%s126]
                %546 = vst [vmem:[%s134 + $0x668] sm:%s126] %v545
                %v547 = vld [vmem:[%s133 + $0xc70] sm:%s126]
                %548 = vst [vmem:[%s134 + $0x670] sm:%s126] %v547
                %v549 = vld [vmem:[%s133 + $0xc78] sm:%s126]
                %550 = vst [vmem:[%s134 + $0x678] sm:%s126] %v549
                %v551 = vld [vmem:[%s133 + $0xc80] sm:%s126]
                %552 = vst [vmem:[%s134 + $0x680] sm:%s126] %v551
                %v553 = vld [vmem:[%s133 + $0xc88] sm:%s126]
                %554 = vst [vmem:[%s134 + $0x688] sm:%s126] %v553
                %v555 = vld [vmem:[%s133 + $0xc90] sm:%s126]
                %556 = vst [vmem:[%s134 + $0x690] sm:%s126] %v555
                %v557 = vld [vmem:[%s133 + $0xc98] sm:%s126]
                %558 = vst [vmem:[%s134 + $0x698] sm:%s126] %v557
                %v559 = vld [vmem:[%s133 + $0xca0] sm:%s126]
                %560 = vst [vmem:[%s134 + $0x6a0] sm:%s126] %v559
                %v561 = vld [vmem:[%s133 + $0xca8] sm:%s126]
                %562 = vst [vmem:[%s134 + $0x6a8] sm:%s126] %v561
                %v563 = vld [vmem:[%s133 + $0xcb0] sm:%s126]
                %564 = vst [vmem:[%s134 + $0x6b0] sm:%s126] %v563
                %v565 = vld [vmem:[%s133 + $0xcb8] sm:%s126]
                %566 = vst [vmem:[%s134 + $0x6b8] sm:%s126] %v565
                %v567 = vld [vmem:[%s133 + $0xcc0] sm:%s126]
                %568 = vst [vmem:[%s134 + $0x6c0] sm:%s126] %v567
                %v569 = vld [vmem:[%s133 + $0xcc8] sm:%s126]
                %570 = vst [vmem:[%s134 + $0x6c8] sm:%s126] %v569
                %v571 = vld [vmem:[%s133 + $0xcd0] sm:%s126]
                %572 = vst [vmem:[%s134 + $0x6d0] sm:%s126] %v571
                %v573 = vld [vmem:[%s133 + $0xcd8] sm:%s126]
                %574 = vst [vmem:[%s134 + $0x6d8] sm:%s126] %v573
                %v575 = vld [vmem:[%s133 + $0xce0] sm:%s126]
                %576 = vst [vmem:[%s134 + $0x6e0] sm:%s126] %v575
                %v577 = vld [vmem:[%s133 + $0xce8] sm:%s126]
                %578 = vst [vmem:[%s134 + $0x6e8] sm:%s126] %v577
                %v579 = vld [vmem:[%s133 + $0xcf0] sm:%s126]
                %580 = vst [vmem:[%s134 + $0x6f0] sm:%s126] %v579
                %v581 = vld [vmem:[%s133 + $0xcf8] sm:%s126]
                %582 = vst [vmem:[%s134 + $0x6f8] sm:%s126] %v581
                %v583 = vld [vmem:[%s133 + $0xe00] sm:%s126]
                %584 = vst [vmem:[%s134 + $0x700] sm:%s126] %v583
                %v585 = vld [vmem:[%s133 + $0xe08] sm:%s126]
                %586 = vst [vmem:[%s134 + $0x708] sm:%s126] %v585
                %v587 = vld [vmem:[%s133 + $0xe10] sm:%s126]
                %588 = vst [vmem:[%s134 + $0x710] sm:%s126] %v587
                %v589 = vld [vmem:[%s133 + $0xe18] sm:%s126]
                %590 = vst [vmem:[%s134 + $0x718] sm:%s126] %v589
                %v591 = vld [vmem:[%s133 + $0xe20] sm:%s126]
                %592 = vst [vmem:[%s134 + $0x720] sm:%s126] %v591
                %v593 = vld [vmem:[%s133 + $0xe28] sm:%s126]
                %594 = vst [vmem:[%s134 + $0x728] sm:%s126] %v593
                %v595 = vld [vmem:[%s133 + $0xe30] sm:%s126]
                %596 = vst [vmem:[%s134 + $0x730] sm:%s126] %v595
                %v597 = vld [vmem:[%s133 + $0xe38] sm:%s126]
                %598 = vst [vmem:[%s134 + $0x738] sm:%s126] %v597
                %v599 = vld [vmem:[%s133 + $0xe40] sm:%s126]
                %600 = vst [vmem:[%s134 + $0x740] sm:%s126] %v599
                %v601 = vld [vmem:[%s133 + $0xe48] sm:%s126]
                %602 = vst [vmem:[%s134 + $0x748] sm:%s126] %v601
                %v603 = vld [vmem:[%s133 + $0xe50] sm:%s126]
                %604 = vst [vmem:[%s134 + $0x750] sm:%s126] %v603
                %v605 = vld [vmem:[%s133 + $0xe58] sm:%s126]
                %606 = vst [vmem:[%s134 + $0x758] sm:%s126] %v605
                %v607 = vld [vmem:[%s133 + $0xe60] sm:%s126]
                %608 = vst [vmem:[%s134 + $0x760] sm:%s126] %v607
                %v609 = vld [vmem:[%s133 + $0xe68] sm:%s126]
                %610 = vst [vmem:[%s134 + $0x768] sm:%s126] %v609
                %v611 = vld [vmem:[%s133 + $0xe70] sm:%s126]
                %612 = vst [vmem:[%s134 + $0x770] sm:%s126] %v611
                %v613 = vld [vmem:[%s133 + $0xe78] sm:%s126]
                %614 = vst [vmem:[%s134 + $0x778] sm:%s126] %v613
                %v615 = vld [vmem:[%s133 + $0xe80] sm:%s126]
                %616 = vst [vmem:[%s134 + $0x780] sm:%s126] %v615
                %v617 = vld [vmem:[%s133 + $0xe88] sm:%s126]
                %618 = vst [vmem:[%s134 + $0x788] sm:%s126] %v617
                %v619 = vld [vmem:[%s133 + $0xe90] sm:%s126]
                %620 = vst [vmem:[%s134 + $0x790] sm:%s126] %v619
                %v621 = vld [vmem:[%s133 + $0xe98] sm:%s126]
                %622 = vst [vmem:[%s134 + $0x798] sm:%s126] %v621
                %v623 = vld [vmem:[%s133 + $0xea0] sm:%s126]
                %624 = vst [vmem:[%s134 + $0x7a0] sm:%s126] %v623
                %v625 = vld [vmem:[%s133 + $0xea8] sm:%s126]
                %626 = vst [vmem:[%s134 + $0x7a8] sm:%s126] %v625
                %v627 = vld [vmem:[%s133 + $0xeb0] sm:%s126]
                %628 = vst [vmem:[%s134 + $0x7b0] sm:%s126] %v627
                %v629 = vld [vmem:[%s133 + $0xeb8] sm:%s126]
                %630 = vst [vmem:[%s134 + $0x7b8] sm:%s126] %v629
                %v631 = vld [vmem:[%s133 + $0xec0] sm:%s126]
                %632 = vst [vmem:[%s134 + $0x7c0] sm:%s126] %v631
                %v633 = vld [vmem:[%s133 + $0xec8] sm:%s126]
                %634 = vst [vmem:[%s134 + $0x7c8] sm:%s126] %v633
                %v635 = vld [vmem:[%s133 + $0xed0] sm:%s126]
                %636 = vst [vmem:[%s134 + $0x7d0] sm:%s126] %v635
                %v637 = vld [vmem:[%s133 + $0xed8] sm:%s126]
                %638 = vst [vmem:[%s134 + $0x7d8] sm:%s126] %v637
                %v639 = vld [vmem:[%s133 + $0xee0] sm:%s126]
                %640 = vst [vmem:[%s134 + $0x7e0] sm:%s126] %v639
                %v641 = vld [vmem:[%s133 + $0xee8] sm:%s126]
                %642 = vst [vmem:[%s134 + $0x7e8] sm:%s126] %v641
                %v643 = vld [vmem:[%s133 + $0xef0] sm:%s126]
                %644 = vst [vmem:[%s134 + $0x7f0] sm:%s126] %v643
                %v645 = vld [vmem:[%s133 + $0xef8] sm:%s126]
                %646 = vst [vmem:[%s134 + $0x7f8] sm:%s126] %v645
              $region37: #{memristor_forward.1} parent=31 // loop_footer
                %s132 = sadd.s32 1, %s128
              $region38: #{memristor_forward.1} parent=31 // loop_footer_branch
                %127 = sbr.rel target = $region34
              $region39: #{memristor_forward.1} parent=31 // loop_exit
                _
            $region32: #{memristor_forward.1} parent=23 // pred_fallthru
              _
          $region24: #{memristor_forward.1} parent=19 // pred_fallthru
            _
          %1171 = vnop
        $region20: #{memristor_forward.1} parent=15 // pred_fallthru
          _
      $region16: #{memristor_forward.1} parent=5 // pred_fallthru
        _
      %p1172 = scmp.le.s32.totalorder 1, %s7
      %p1173 = scmp.lt.s32.totalorder %s7, 3
      %p1174 = pnand %p1172, %p1173
      %p1175 = pneg %p1174
      // Predicated region
      $region55: #{memristor_forward.1} parent=5 // pred_check
        _
      $region56: #{memristor_forward.1} parent=5 // pred_check_branch
        %1177 = sbr.rel (%p1174) target = $region58
      $region57: #{memristor_forward.1} parent=5 // pred_region
        %s1178 = ssub.s32 %s7, 1
        %s1179 = sand.u32 %s43, 1
        %s1180 = sand.u32 %s43, 1
        %s1181 = smul.addr %s1180, 2048
        %s1182 = scalar_lea.vmem [#allocation7], %s1181
        // Predicated region
        $region59: #{memristor_forward.1} parent=57 // pred_check
          %p1183 = pneg %p56
        $region60: #{memristor_forward.1} parent=57 // pred_check_branch
          %1185 = sbr.rel (%p1183) target = $region62
        $region61: #{memristor_forward.1} parent=57 // pred_region
          _
        $region62: #{memristor_forward.1} parent=57 // pred_fallthru
          _
        %s1186 = sand.u32 %s43, 1
        %s1187 = sand.u32 %s43, 1
        %s1188 = smul.addr %s1187, 2048
        %s1189 = scalar_lea.vmem [#allocation7], %s1188
        %p1190 = pneg %p56
        %p1191 = pneg %p53
        %p1192 = pneg %p86
        %p1193 = pneg %p83
        %s1194 = sand.u32 %s73, 1
        %s1195 = sand.u32 %s73, 1
        %s1196 = smul.addr %s1195, 2048
        %s1197 = scalar_lea.vmem [#allocation8], %s1196
        %s1198 = smul.u32 8, %s17
        %s1199 = smul.u32 32, %s19
        %s1200 = smul.u32 8, %s17
        %s1201 = smul.u32 32, %s19
        %p1202 = scmp.eq.s32.totalorder %s19, 0
        // Predicated region
        $region63: #{memristor_forward.1} parent=57 // pred_check
          %p1203 = pneg %p1202
        $region64: #{memristor_forward.1} parent=57 // pred_check_branch
          %1205 = sbr.rel (%p1203) target = $region66
        $region65: #{memristor_forward.1} parent=57 // pred_region
          %1206 = vst [vmem:[#allocation2] sm:$0xff] 0.0
          %1207 = vst [vmem:[#allocation3] sm:$0xff] 0.0
          %1208 = vst [vmem:[#allocation4] sm:$0xff] 0.0
        $region66: #{memristor_forward.1} parent=57 // pred_fallthru
          _
        %v1209 = vld [vmem:[#allocation2] sm:$0xff]
        %v1210 = vld [vmem:[#allocation3] sm:$0xff]
        %v1211 = vld [vmem:[#allocation4] sm:$0xff]
        loop: start=0, step=1, limit=32
        $region67: #{memristor_forward.1} parent=57 // loop_pre_header
          _
        $region68: #{memristor_forward.1} parent=57 // loop_header
          %s1213 = sphi 0, %s1217
          %p1214 = scmp.ge.s32.totalorder %s1213, 32
          %v1218 = vphi %v1209, %v3473
          %v1219 = vphi %v1210, %v3472
          %v1220 = vphi %v1211, %v3397
        $region69: #{memristor_forward.1} parent=57 // loop_header_branch
          %1216 = sbr.rel (%p1214) target = $region73
        $region70: #{memristor_forward.1} parent=57 // loop_body
          %s1221 = smul.u32 %s1213, 8
          %s1222 = scalar_lea.vmem %s1182, %s1221 [#allocation7]
          %v1223 = vld [vmem:[%s1222] sm:$0xff]
          %v1224 = vld [vmem:[%s1222 + $0x100] sm:$0xff]
          %v1225 = vld [vmem:[%s1222 + $0x200] sm:$0xff]
          %v1226 = vld [vmem:[%s1222 + $0x300] sm:$0xff]
          %v1227 = vld [vmem:[%s1222 + $0x400] sm:$0xff]
          %v1228 = vld [vmem:[%s1222 + $0x500] sm:$0xff]
          %v1229 = vld [vmem:[%s1222 + $0x600] sm:$0xff]
          %v1230 = vld [vmem:[%s1222 + $0x700] sm:$0xff]
          %v1231 = vmax.f32 %v1223, 0.0
          %v1232 = vmax.f32 %v1224, 0.0
          %v1233 = vmax.f32 %v1225, 0.0
          %v1234 = vmax.f32 %v1226, 0.0
          %v1235 = vmax.f32 %v1227, 0.0
          %v1236 = vmax.f32 %v1228, 0.0
          %v1237 = vmax.f32 %v1229, 0.0
          %v1238 = vmax.f32 %v1230, 0.0
          %v1239 = vadd.f32 %v1218, %v1219
          %v1240 = vmax.f32 %v1239, 0.0
          %v1241 = vmin.f32 %v1240, 1.0
          %vm1242 = vcmp.gt.f32.partialorder %v1241, 0.999999
          %vm1243 = vcmp.lt.f32.partialorder %v1220, 1.000001
          %v1244 = vsub.f32 1.0, %v1220
          %v1245 = vmul.f32 %v1244, 1.442695
          %v1246 = vpow.pop %v1245
          %v1247 = vsub.f32 %v1220, 1.0
          %v1248 = vmul.f32 %v1247, 1.442695
          %v1249 = vpow.pop %v1248
          %v1250 = vmul.f32 %v1231, 0.001
          %v1251 = vmul.f32 %v1232, 0.001
          %v1252 = vmul.f32 %v1233, 0.001
          %v1253 = vmul.f32 %v1234, 0.001
          %v1254 = vmul.f32 %v1235, 0.001
          %v1255 = vmul.f32 %v1236, 0.001
          %v1256 = vmul.f32 %v1237, 0.001
          %v1257 = vmul.f32 %v1238, 0.001
          %v1259 = vrot.slane %v1246, 1
          %v1260 = vrot.slane %v1246, 2
          %v1261 = vrot.slane %v1246, 3
          %v1262 = vrot.slane %v1246, 4
          %v1263 = vrot.slane %v1246, 5
          %v1264 = vrot.slane %v1246, 6
          %v1265 = vrot.slane %v1246, 7
          %v1274 = vmul.f32 %v1250, %v1246
          %v1275 = vmul.f32 %v1251, %v1259
          %v1276 = vmul.f32 %v1252, %v1260
          %v1277 = vmul.f32 %v1253, %v1261
          %v1278 = vmul.f32 %v1254, %v1262
          %v1279 = vmul.f32 %v1255, %v1263
          %v1280 = vmul.f32 %v1256, %v1264
          %v1281 = vmul.f32 %v1257, %v1265
          %v1282 = vmul.f32 %v1249, 0.005
          %v1284 = vrot.slane %v1282, 1
          %v1285 = vrot.slane %v1282, 2
          %v1286 = vrot.slane %v1282, 3
          %v1287 = vrot.slane %v1282, 4
          %v1288 = vrot.slane %v1282, 5
          %v1289 = vrot.slane %v1282, 6
          %v1290 = vrot.slane %v1282, 7
          %v1299 = vsub.f32 %v1274, %v1282
          %v1300 = vsub.f32 %v1275, %v1284
          %v1301 = vsub.f32 %v1276, %v1285
          %v1302 = vsub.f32 %v1277, %v1286
          %v1303 = vsub.f32 %v1278, %v1287
          %v1304 = vsub.f32 %v1279, %v1288
          %v1305 = vsub.f32 %v1280, %v1289
          %v1306 = vsub.f32 %v1281, %v1290
          %v1315 = vrot.slane %v1300, 7
          %vm1316 = vcmask 1041409
          %v1317 = vsel %vm1316, %v1315, %v1299
          %v1318 = vrot.slane %v1301, 6
          %vm1319 = vcmask 1042434
          %v1320 = vsel %vm1319, %v1318, %v1317
          %v1321 = vrot.slane %v1302, 5
          %vm1322 = vcmask 1043459
          %v1323 = vsel %vm1322, %v1321, %v1320
          %v1324 = vrot.slane %v1303, 4
          %vm1325 = vcmask 1044484
          %v1326 = vsel %vm1325, %v1324, %v1323
          %v1327 = vrot.slane %v1304, 3
          %vm1328 = vcmask 1045509
          %v1329 = vsel %vm1328, %v1327, %v1326
          %v1330 = vrot.slane %v1305, 2
          %vm1331 = vcmask 1046534
          %v1332 = vsel %vm1331, %v1330, %v1329
          %v1333 = vrot.slane %v1306, 1
          %vm1334 = vcmask 1047559
          %v1335 = vsel %vm1334, %v1333, %v1332
          %v1337 = vadd.f32 %v1220, %v1335
          %v1338 = vsel %vm1242, %v1337, %v1220
          %v1339 = vmax.f32 %v1338, 1.0
          %v1340 = vmul.f32 %v1219, 0.4
          %v1341 = vsel %vm1243, %v1340, %v1219
          %v1342 = vmul.f32 %v1218, 0.998
          %v1343 = vsel %vm1243, %v1342, %v1218
          %v1344 = vsub.f32 1.0, %v1241
          %v1345 = vadd.f32 %v1344, 0.01
          %v1346 = vrcp.pop %v1345
          %v1347 = vmul.f32 0.22, %v1346
          %v1349 = vrot.slane %v1347, 1
          %v1350 = vrot.slane %v1347, 2
          %v1351 = vrot.slane %v1347, 3
          %v1352 = vrot.slane %v1347, 4
          %v1353 = vrot.slane %v1347, 5
          %v1354 = vrot.slane %v1347, 6
          %v1355 = vrot.slane %v1347, 7
          %v1364 = vmul.f32 %v1231, %v1347
          %v1365 = vmul.f32 %v1232, %v1349
          %v1366 = vmul.f32 %v1233, %v1350
          %v1367 = vmul.f32 %v1234, %v1351
          %v1368 = vmul.f32 %v1235, %v1352
          %v1369 = vmul.f32 %v1236, %v1353
          %v1370 = vmul.f32 %v1237, %v1354
          %v1371 = vmul.f32 %v1238, %v1355
          %v1372 = vsub.f32 1.0, %v1341
          %v1373 = vsub.f32 %v1372, %v1343
          %v1374 = vmax.f32 %v1364, 0.0
          %v1375 = vmax.f32 %v1365, 0.0
          %v1376 = vmax.f32 %v1366, 0.0
          %v1377 = vmax.f32 %v1367, 0.0
          %v1378 = vmax.f32 %v1368, 0.0
          %v1379 = vmax.f32 %v1369, 0.0
          %v1380 = vmax.f32 %v1370, 0.0
          %v1381 = vmax.f32 %v1371, 0.0
          %v1390 = vrot.slane %v1375, 7
          %v1391 = vsel %vm1316, %v1390, %v1374
          %v1392 = vrot.slane %v1376, 6
          %v1393 = vsel %vm1319, %v1392, %v1391
          %v1394 = vrot.slane %v1377, 5
          %v1395 = vsel %vm1322, %v1394, %v1393
          %v1396 = vrot.slane %v1378, 4
          %v1397 = vsel %vm1325, %v1396, %v1395
          %v1398 = vrot.slane %v1379, 3
          %v1399 = vsel %vm1328, %v1398, %v1397
          %v1400 = vrot.slane %v1380, 2
          %v1401 = vsel %vm1331, %v1400, %v1399
          %v1402 = vrot.slane %v1381, 1
          %v1403 = vsel %vm1334, %v1402, %v1401
          %v1405 = vmin.f32 %v1373, %v1403
          %v1406 = vadd.f32 %v1341, %v1405
          %v1407 = vsel %vm1243, %v1406, %v1219
          %v1408 = vmul.f32 %v1407, 0.01
          %v1409 = vsub.f32 1.0, %v1343
          %v1410 = vmin.f32 %v1409, %v1407
          %v1411 = vmax.f32 %v1408, 0.0
          %v1412 = vmin.f32 %v1410, %v1411
          %v1413 = vsel %vm1243, %v1412, 0.0
          %v1414 = vsub.f32 %v1407, %v1413
          %v1415 = vadd.f32 %v1343, %v1413
          %v1416 = vadd.f32 %v1415, %v1414
          %v1417 = vmax.f32 %v1416, 0.0
          %v1418 = vmin.f32 %v1417, 1.0
          %v1420 = vcombine.high %v1418, %v1418
          %v1422 = vunpack.c.l.s4 1966171168
          %v1423 = vunpack.c.0.s8 %v1422
          %v1424 = vlaneseq
          %v1425 = vshrl.u32 %v1424, 7
          %v1426 = vsub.s32 %v1423, %v1425
          %v1427 = vrot.slane %v1418, %v1426
          %v1429 = vunpack.c.l.s4 1966171168
          %v1430 = vunpack.c.0.s8 %v1429
          %v1431 = vlaneseq
          %v1432 = vshrl.u32 %v1431, 7
          %v1433 = vsub.s32 %v1430, %v1432
          %v1434 = vrot.slane %v1420, %v1433
          %v1435 = vcombine.high %v1427, %v1427
          %v1436 = vcombine.high %v1434, %v1434
          %v1438 = vunpack.c.l.s4 1966171168
          %v1439 = vunpack.c.0.s8 %v1438
          %v1440 = vlaneseq
          %v1441 = vshrl.u32 %v1440, 7
          %v1442 = vsub.s32 %v1439, %v1441
          %v1443 = vrot.slane %v1427, %v1442
          %v1445 = vunpack.c.l.s4 1966171168
          %v1446 = vunpack.c.0.s8 %v1445
          %v1447 = vlaneseq
          %v1448 = vshrl.u32 %v1447, 7
          %v1449 = vsub.s32 %v1446, %v1448
          %v1450 = vrot.slane %v1434, %v1449
          %v1452 = vunpack.c.l.s4 1966171168
          %v1453 = vunpack.c.0.s8 %v1452
          %v1454 = vlaneseq
          %v1455 = vshrl.u32 %v1454, 7
          %v1456 = vsub.s32 %v1453, %v1455
          %v1457 = vrot.slane %v1435, %v1456
          %v1459 = vunpack.c.l.s4 1966171168
          %v1460 = vunpack.c.0.s8 %v1459
          %v1461 = vlaneseq
          %v1462 = vshrl.u32 %v1461, 7
          %v1463 = vsub.s32 %v1460, %v1462
          %v1464 = vrot.slane %v1436, %v1463
          %v1465 = vcombine.high %v1443, %v1443
          %v1466 = vcombine.high %v1450, %v1450
          %v1467 = vcombine.high %v1457, %v1457
          %v1468 = vcombine.high %v1464, %v1464
          %1477 = vst [vmem:[#allocation5] sm:$0x1] %v1443
          %1478 = vst [vmem:[#allocation5 + $0x8] sm:$0x1] %v1457
          %1479 = vst [vmem:[#allocation5 + $0x10] sm:$0x1] %v1465
          %1480 = vst [vmem:[#allocation5 + $0x18] sm:$0x1] %v1467
          %1481 = vst [vmem:[#allocation5 + $0x20] sm:$0x1] %v1450
          %1482 = vst [vmem:[#allocation5 + $0x28] sm:$0x1] %v1464
          %1483 = vst [vmem:[#allocation5 + $0x30] sm:$0x1] %v1466
          %1484 = vst [vmem:[#allocation5 + $0x38] sm:$0x1] %v1468
          %v1486 = vcombine.high %v1339, %v1339
          %v1488 = vunpack.c.l.s4 1966171168
          %v1489 = vunpack.c.0.s8 %v1488
          %v1490 = vlaneseq
          %v1491 = vshrl.u32 %v1490, 7
          %v1492 = vsub.s32 %v1489, %v1491
          %v1493 = vrot.slane %v1339, %v1492
          %v1495 = vunpack.c.l.s4 1966171168
          %v1496 = vunpack.c.0.s8 %v1495
          %v1497 = vlaneseq
          %v1498 = vshrl.u32 %v1497, 7
          %v1499 = vsub.s32 %v1496, %v1498
          %v1500 = vrot.slane %v1486, %v1499
          %v1501 = vcombine.high %v1493, %v1493
          %v1502 = vcombine.high %v1500, %v1500
          %v1504 = vunpack.c.l.s4 1966171168
          %v1505 = vunpack.c.0.s8 %v1504
          %v1506 = vlaneseq
          %v1507 = vshrl.u32 %v1506, 7
          %v1508 = vsub.s32 %v1505, %v1507
          %v1509 = vrot.slane %v1493, %v1508
          %v1511 = vunpack.c.l.s4 1966171168
          %v1512 = vunpack.c.0.s8 %v1511
          %v1513 = vlaneseq
          %v1514 = vshrl.u32 %v1513, 7
          %v1515 = vsub.s32 %v1512, %v1514
          %v1516 = vrot.slane %v1500, %v1515
          %v1518 = vunpack.c.l.s4 1966171168
          %v1519 = vunpack.c.0.s8 %v1518
          %v1520 = vlaneseq
          %v1521 = vshrl.u32 %v1520, 7
          %v1522 = vsub.s32 %v1519, %v1521
          %v1523 = vrot.slane %v1501, %v1522
          %v1525 = vunpack.c.l.s4 1966171168
          %v1526 = vunpack.c.0.s8 %v1525
          %v1527 = vlaneseq
          %v1528 = vshrl.u32 %v1527, 7
          %v1529 = vsub.s32 %v1526, %v1528
          %v1530 = vrot.slane %v1502, %v1529
          %v1531 = vcombine.high %v1509, %v1509
          %v1532 = vcombine.high %v1516, %v1516
          %v1533 = vcombine.high %v1523, %v1523
          %v1534 = vcombine.high %v1530, %v1530
          %1543 = vst [vmem:[#allocation6] sm:$0x1] %v1509
          %1544 = vst [vmem:[#allocation6 + $0x8] sm:$0x1] %v1523
          %1545 = vst [vmem:[#allocation6 + $0x10] sm:$0x1] %v1531
          %1546 = vst [vmem:[#allocation6 + $0x18] sm:$0x1] %v1533
          %1547 = vst [vmem:[#allocation6 + $0x20] sm:$0x1] %v1516
          %1548 = vst [vmem:[#allocation6 + $0x28] sm:$0x1] %v1530
          %1549 = vst [vmem:[#allocation6 + $0x30] sm:$0x1] %v1532
          %1550 = vst [vmem:[#allocation6 + $0x38] sm:$0x1] %v1534
          %vm1551 = vcmp.gt.f32.partialorder %v1418, 0.999999
          %vm1552 = vcmp.lt.f32.partialorder %v1339, 1.000001
          %v1553 = vsub.f32 1.0, %v1339
          %v1554 = vmul.f32 %v1553, 1.442695
          %v1555 = vpow.pop %v1554
          %v1556 = vsub.f32 %v1339, 1.0
          %v1557 = vmul.f32 %v1556, 1.442695
          %v1558 = vpow.pop %v1557
          %v1560 = vrot.slane %v1555, 7
          %v1561 = vrot.slane %v1555, 1
          %v1562 = vrot.slane %v1555, 2
          %v1563 = vrot.slane %v1555, 3
          %v1564 = vrot.slane %v1555, 4
          %v1565 = vrot.slane %v1555, 5
          %v1566 = vrot.slane %v1555, 6
          %v1575 = vmul.f32 %v1250, %v1560
          %v1576 = vmul.f32 %v1251, %v1555
          %v1577 = vmul.f32 %v1252, %v1561
          %v1578 = vmul.f32 %v1253, %v1562
          %v1579 = vmul.f32 %v1254, %v1563
          %v1580 = vmul.f32 %v1255, %v1564
          %v1581 = vmul.f32 %v1256, %v1565
          %v1582 = vmul.f32 %v1257, %v1566
          %v1583 = vmul.f32 %v1558, 0.005
          %v1585 = vrot.slane %v1583, 7
          %v1586 = vrot.slane %v1583, 1
          %v1587 = vrot.slane %v1583, 2
          %v1588 = vrot.slane %v1583, 3
          %v1589 = vrot.slane %v1583, 4
          %v1590 = vrot.slane %v1583, 5
          %v1591 = vrot.slane %v1583, 6
          %v1600 = vsub.f32 %v1575, %v1585
          %v1601 = vsub.f32 %v1576, %v1583
          %v1602 = vsub.f32 %v1577, %v1586
          %v1603 = vsub.f32 %v1578, %v1587
          %v1604 = vsub.f32 %v1579, %v1588
          %v1605 = vsub.f32 %v1580, %v1589
          %v1606 = vsub.f32 %v1581, %v1590
          %v1607 = vsub.f32 %v1582, %v1591
          %v1616 = vrot.slane %v1600, 1
          %v1617 = vsel %vm1316, %v1601, %v1616
          %v1618 = vrot.slane %v1602, 7
          %v1619 = vsel %vm1319, %v1618, %v1617
          %v1620 = vrot.slane %v1603, 6
          %v1621 = vsel %vm1322, %v1620, %v1619
          %v1622 = vrot.slane %v1604, 5
          %v1623 = vsel %vm1325, %v1622, %v1621
          %v1624 = vrot.slane %v1605, 4
          %v1625 = vsel %vm1328, %v1624, %v1623
          %v1626 = vrot.slane %v1606, 3
          %v1627 = vsel %vm1331, %v1626, %v1625
          %v1628 = vrot.slane %v1607, 2
          %v1629 = vsel %vm1334, %v1628, %v1627
          %v1631 = vadd.f32 %v1339, %v1629
          %v1632 = vsel %vm1551, %v1631, %v1339
          %v1633 = vmax.f32 %v1632, 1.0
          %v1634 = vmul.f32 %v1414, 0.4
          %v1635 = vsel %vm1552, %v1634, %v1414
          %v1636 = vmul.f32 %v1415, 0.998
          %v1637 = vsel %vm1552, %v1636, %v1415
          %v1638 = vsub.f32 1.0, %v1418
          %v1639 = vadd.f32 %v1638, 0.01
          %v1640 = vrcp.pop %v1639
          %v1641 = vmul.f32 0.22, %v1640
          %v1643 = vrot.slane %v1641, 7
          %v1644 = vrot.slane %v1641, 1
          %v1645 = vrot.slane %v1641, 2
          %v1646 = vrot.slane %v1641, 3
          %v1647 = vrot.slane %v1641, 4
          %v1648 = vrot.slane %v1641, 5
          %v1649 = vrot.slane %v1641, 6
          %v1658 = vmul.f32 %v1231, %v1643
          %v1659 = vmul.f32 %v1232, %v1641
          %v1660 = vmul.f32 %v1233, %v1644
          %v1661 = vmul.f32 %v1234, %v1645
          %v1662 = vmul.f32 %v1235, %v1646
          %v1663 = vmul.f32 %v1236, %v1647
          %v1664 = vmul.f32 %v1237, %v1648
          %v1665 = vmul.f32 %v1238, %v1649
          %v1666 = vsub.f32 1.0, %v1635
          %v1667 = vsub.f32 %v1666, %v1637
          %v1668 = vmax.f32 %v1658, 0.0
          %v1669 = vmax.f32 %v1659, 0.0
          %v1670 = vmax.f32 %v1660, 0.0
          %v1671 = vmax.f32 %v1661, 0.0
          %v1672 = vmax.f32 %v1662, 0.0
          %v1673 = vmax.f32 %v1663, 0.0
          %v1674 = vmax.f32 %v1664, 0.0
          %v1675 = vmax.f32 %v1665, 0.0
          %v1684 = vrot.slane %v1668, 1
          %v1685 = vsel %vm1316, %v1669, %v1684
          %v1686 = vrot.slane %v1670, 7
          %v1687 = vsel %vm1319, %v1686, %v1685
          %v1688 = vrot.slane %v1671, 6
          %v1689 = vsel %vm1322, %v1688, %v1687
          %v1690 = vrot.slane %v1672, 5
          %v1691 = vsel %vm1325, %v1690, %v1689
          %v1692 = vrot.slane %v1673, 4
          %v1693 = vsel %vm1328, %v1692, %v1691
          %v1694 = vrot.slane %v1674, 3
          %v1695 = vsel %vm1331, %v1694, %v1693
          %v1696 = vrot.slane %v1675, 2
          %v1697 = vsel %vm1334, %v1696, %v1695
          %v1699 = vmin.f32 %v1667, %v1697
          %v1700 = vadd.f32 %v1635, %v1699
          %v1701 = vsel %vm1552, %v1700, %v1414
          %v1702 = vmul.f32 %v1701, 0.01
          %v1703 = vsub.f32 1.0, %v1637
          %v1704 = vmin.f32 %v1703, %v1701
          %v1705 = vmax.f32 %v1702, 0.0
          %v1706 = vmin.f32 %v1704, %v1705
          %v1707 = vsel %vm1552, %v1706, 0.0
          %v1708 = vsub.f32 %v1701, %v1707
          %v1709 = vadd.f32 %v1637, %v1707
          %v1710 = vadd.f32 %v1709, %v1708
          %v1711 = vmax.f32 %v1710, 0.0
          %v1712 = vmin.f32 %v1711, 1.0
          %v1714 = vcombine.high %v1712, %v1712
          %v1716 = vunpack.c.l.s4 1966171168
          %v1717 = vunpack.c.0.s8 %v1716
          %v1718 = vlaneseq
          %v1719 = vshrl.u32 %v1718, 7
          %v1720 = vsub.s32 %v1717, %v1719
          %v1721 = vrot.slane %v1712, %v1720
          %v1723 = vunpack.c.l.s4 1966171168
          %v1724 = vunpack.c.0.s8 %v1723
          %v1725 = vlaneseq
          %v1726 = vshrl.u32 %v1725, 7
          %v1727 = vsub.s32 %v1724, %v1726
          %v1728 = vrot.slane %v1714, %v1727
          %v1729 = vcombine.high %v1721, %v1721
          %v1730 = vcombine.high %v1728, %v1728
          %v1732 = vunpack.c.l.s4 1966171168
          %v1733 = vunpack.c.0.s8 %v1732
          %v1734 = vlaneseq
          %v1735 = vshrl.u32 %v1734, 7
          %v1736 = vsub.s32 %v1733, %v1735
          %v1737 = vrot.slane %v1721, %v1736
          %v1739 = vunpack.c.l.s4 1966171168
          %v1740 = vunpack.c.0.s8 %v1739
          %v1741 = vlaneseq
          %v1742 = vshrl.u32 %v1741, 7
          %v1743 = vsub.s32 %v1740, %v1742
          %v1744 = vrot.slane %v1728, %v1743
          %v1746 = vunpack.c.l.s4 1966171168
          %v1747 = vunpack.c.0.s8 %v1746
          %v1748 = vlaneseq
          %v1749 = vshrl.u32 %v1748, 7
          %v1750 = vsub.s32 %v1747, %v1749
          %v1751 = vrot.slane %v1729, %v1750
          %v1753 = vunpack.c.l.s4 1966171168
          %v1754 = vunpack.c.0.s8 %v1753
          %v1755 = vlaneseq
          %v1756 = vshrl.u32 %v1755, 7
          %v1757 = vsub.s32 %v1754, %v1756
          %v1758 = vrot.slane %v1730, %v1757
          %v1759 = vcombine.high %v1737, %v1737
          %v1760 = vcombine.high %v1744, %v1744
          %v1761 = vcombine.high %v1751, %v1751
          %v1762 = vcombine.high %v1758, %v1758
          %1771 = vst [vmem:[#allocation5 + $0x1] sm:$0x1] %v1737
          %1772 = vst [vmem:[#allocation5 + $0x9] sm:$0x1] %v1751
          %1773 = vst [vmem:[#allocation5 + $0x11] sm:$0x1] %v1759
          %1774 = vst [vmem:[#allocation5 + $0x19] sm:$0x1] %v1761
          %1775 = vst [vmem:[#allocation5 + $0x21] sm:$0x1] %v1744
          %1776 = vst [vmem:[#allocation5 + $0x29] sm:$0x1] %v1758
          %1777 = vst [vmem:[#allocation5 + $0x31] sm:$0x1] %v1760
          %1778 = vst [vmem:[#allocation5 + $0x39] sm:$0x1] %v1762
          %v1780 = vcombine.high %v1633, %v1633
          %v1782 = vunpack.c.l.s4 1966171168
          %v1783 = vunpack.c.0.s8 %v1782
          %v1784 = vlaneseq
          %v1785 = vshrl.u32 %v1784, 7
          %v1786 = vsub.s32 %v1783, %v1785
          %v1787 = vrot.slane %v1633, %v1786
          %v1789 = vunpack.c.l.s4 1966171168
          %v1790 = vunpack.c.0.s8 %v1789
          %v1791 = vlaneseq
          %v1792 = vshrl.u32 %v1791, 7
          %v1793 = vsub.s32 %v1790, %v1792
          %v1794 = vrot.slane %v1780, %v1793
          %v1795 = vcombine.high %v1787, %v1787
          %v1796 = vcombine.high %v1794, %v1794
          %v1798 = vunpack.c.l.s4 1966171168
          %v1799 = vunpack.c.0.s8 %v1798
          %v1800 = vlaneseq
          %v1801 = vshrl.u32 %v1800, 7
          %v1802 = vsub.s32 %v1799, %v1801
          %v1803 = vrot.slane %v1787, %v1802
          %v1805 = vunpack.c.l.s4 1966171168
          %v1806 = vunpack.c.0.s8 %v1805
          %v1807 = vlaneseq
          %v1808 = vshrl.u32 %v1807, 7
          %v1809 = vsub.s32 %v1806, %v1808
          %v1810 = vrot.slane %v1794, %v1809
          %v1812 = vunpack.c.l.s4 1966171168
          %v1813 = vunpack.c.0.s8 %v1812
          %v1814 = vlaneseq
          %v1815 = vshrl.u32 %v1814, 7
          %v1816 = vsub.s32 %v1813, %v1815
          %v1817 = vrot.slane %v1795, %v1816
          %v1819 = vunpack.c.l.s4 1966171168
          %v1820 = vunpack.c.0.s8 %v1819
          %v1821 = vlaneseq
          %v1822 = vshrl.u32 %v1821, 7
          %v1823 = vsub.s32 %v1820, %v1822
          %v1824 = vrot.slane %v1796, %v1823
          %v1825 = vcombine.high %v1803, %v1803
          %v1826 = vcombine.high %v1810, %v1810
          %v1827 = vcombine.high %v1817, %v1817
          %v1828 = vcombine.high %v1824, %v1824
          %1837 = vst [vmem:[#allocation6 + $0x1] sm:$0x1] %v1803
          %1838 = vst [vmem:[#allocation6 + $0x9] sm:$0x1] %v1817
          %1839 = vst [vmem:[#allocation6 + $0x11] sm:$0x1] %v1825
          %1840 = vst [vmem:[#allocation6 + $0x19] sm:$0x1] %v1827
          %1841 = vst [vmem:[#allocation6 + $0x21] sm:$0x1] %v1810
          %1842 = vst [vmem:[#allocation6 + $0x29] sm:$0x1] %v1824
          %1843 = vst [vmem:[#allocation6 + $0x31] sm:$0x1] %v1826
          %1844 = vst [vmem:[#allocation6 + $0x39] sm:$0x1] %v1828
          %vm1845 = vcmp.gt.f32.partialorder %v1712, 0.999999
          %vm1846 = vcmp.lt.f32.partialorder %v1633, 1.000001
          %v1847 = vsub.f32 1.0, %v1633
          %v1848 = vmul.f32 %v1847, 1.442695
          %v1849 = vpow.pop %v1848
          %v1850 = vsub.f32 %v1633, 1.0
          %v1851 = vmul.f32 %v1850, 1.442695
          %v1852 = vpow.pop %v1851
          %v1854 = vrot.slane %v1849, 6
          %v1855 = vrot.slane %v1849, 7
          %v1856 = vrot.slane %v1849, 1
          %v1857 = vrot.slane %v1849, 2
          %v1858 = vrot.slane %v1849, 3
          %v1859 = vrot.slane %v1849, 4
          %v1860 = vrot.slane %v1849, 5
          %v1869 = vmul.f32 %v1250, %v1854
          %v1870 = vmul.f32 %v1251, %v1855
          %v1871 = vmul.f32 %v1252, %v1849
          %v1872 = vmul.f32 %v1253, %v1856
          %v1873 = vmul.f32 %v1254, %v1857
          %v1874 = vmul.f32 %v1255, %v1858
          %v1875 = vmul.f32 %v1256, %v1859
          %v1876 = vmul.f32 %v1257, %v1860
          %v1877 = vmul.f32 %v1852, 0.005
          %v1879 = vrot.slane %v1877, 6
          %v1880 = vrot.slane %v1877, 7
          %v1881 = vrot.slane %v1877, 1
          %v1882 = vrot.slane %v1877, 2
          %v1883 = vrot.slane %v1877, 3
          %v1884 = vrot.slane %v1877, 4
          %v1885 = vrot.slane %v1877, 5
          %v1894 = vsub.f32 %v1869, %v1879
          %v1895 = vsub.f32 %v1870, %v1880
          %v1896 = vsub.f32 %v1871, %v1877
          %v1897 = vsub.f32 %v1872, %v1881
          %v1898 = vsub.f32 %v1873, %v1882
          %v1899 = vsub.f32 %v1874, %v1883
          %v1900 = vsub.f32 %v1875, %v1884
          %v1901 = vsub.f32 %v1876, %v1885
          %v1910 = vrot.slane %v1894, 2
          %v1911 = vrot.slane %v1895, 1
          %v1912 = vsel %vm1316, %v1911, %v1910
          %v1913 = vsel %vm1319, %v1896, %v1912
          %v1914 = vrot.slane %v1897, 7
          %v1915 = vsel %vm1322, %v1914, %v1913
          %v1916 = vrot.slane %v1898, 6
          %v1917 = vsel %vm1325, %v1916, %v1915
          %v1918 = vrot.slane %v1899, 5
          %v1919 = vsel %vm1328, %v1918, %v1917
          %v1920 = vrot.slane %v1900, 4
          %v1921 = vsel %vm1331, %v1920, %v1919
          %v1922 = vrot.slane %v1901, 3
          %v1923 = vsel %vm1334, %v1922, %v1921
          %v1925 = vadd.f32 %v1633, %v1923
          %v1926 = vsel %vm1845, %v1925, %v1633
          %v1927 = vmax.f32 %v1926, 1.0
          %v1928 = vmul.f32 %v1708, 0.4
          %v1929 = vsel %vm1846, %v1928, %v1708
          %v1930 = vmul.f32 %v1709, 0.998
          %v1931 = vsel %vm1846, %v1930, %v1709
          %v1932 = vsub.f32 1.0, %v1712
          %v1933 = vadd.f32 %v1932, 0.01
          %v1934 = vrcp.pop %v1933
          %v1935 = vmul.f32 0.22, %v1934
          %v1937 = vrot.slane %v1935, 6
          %v1938 = vrot.slane %v1935, 7
          %v1939 = vrot.slane %v1935, 1
          %v1940 = vrot.slane %v1935, 2
          %v1941 = vrot.slane %v1935, 3
          %v1942 = vrot.slane %v1935, 4
          %v1943 = vrot.slane %v1935, 5
          %v1952 = vmul.f32 %v1231, %v1937
          %v1953 = vmul.f32 %v1232, %v1938
          %v1954 = vmul.f32 %v1233, %v1935
          %v1955 = vmul.f32 %v1234, %v1939
          %v1956 = vmul.f32 %v1235, %v1940
          %v1957 = vmul.f32 %v1236, %v1941
          %v1958 = vmul.f32 %v1237, %v1942
          %v1959 = vmul.f32 %v1238, %v1943
          %v1960 = vsub.f32 1.0, %v1929
          %v1961 = vsub.f32 %v1960, %v1931
          %v1962 = vmax.f32 %v1952, 0.0
          %v1963 = vmax.f32 %v1953, 0.0
          %v1964 = vmax.f32 %v1954, 0.0
          %v1965 = vmax.f32 %v1955, 0.0
          %v1966 = vmax.f32 %v1956, 0.0
          %v1967 = vmax.f32 %v1957, 0.0
          %v1968 = vmax.f32 %v1958, 0.0
          %v1969 = vmax.f32 %v1959, 0.0
          %v1978 = vrot.slane %v1962, 2
          %v1979 = vrot.slane %v1963, 1
          %v1980 = vsel %vm1316, %v1979, %v1978
          %v1981 = vsel %vm1319, %v1964, %v1980
          %v1982 = vrot.slane %v1965, 7
          %v1983 = vsel %vm1322, %v1982, %v1981
          %v1984 = vrot.slane %v1966, 6
          %v1985 = vsel %vm1325, %v1984, %v1983
          %v1986 = vrot.slane %v1967, 5
          %v1987 = vsel %vm1328, %v1986, %v1985
          %v1988 = vrot.slane %v1968, 4
          %v1989 = vsel %vm1331, %v1988, %v1987
          %v1990 = vrot.slane %v1969, 3
          %v1991 = vsel %vm1334, %v1990, %v1989
          %v1993 = vmin.f32 %v1961, %v1991
          %v1994 = vadd.f32 %v1929, %v1993
          %v1995 = vsel %vm1846, %v1994, %v1708
          %v1996 = vmul.f32 %v1995, 0.01
          %v1997 = vsub.f32 1.0, %v1931
          %v1998 = vmin.f32 %v1997, %v1995
          %v1999 = vmax.f32 %v1996, 0.0
          %v2000 = vmin.f32 %v1998, %v1999
          %v2001 = vsel %vm1846, %v2000, 0.0
          %v2002 = vsub.f32 %v1995, %v2001
          %v2003 = vadd.f32 %v1931, %v2001
          %v2004 = vadd.f32 %v2003, %v2002
          %v2005 = vmax.f32 %v2004, 0.0
          %v2006 = vmin.f32 %v2005, 1.0
          %v2008 = vcombine.high %v2006, %v2006
          %v2010 = vunpack.c.l.s4 1966171168
          %v2011 = vunpack.c.0.s8 %v2010
          %v2012 = vlaneseq
          %v2013 = vshrl.u32 %v2012, 7
          %v2014 = vsub.s32 %v2011, %v2013
          %v2015 = vrot.slane %v2006, %v2014
          %v2017 = vunpack.c.l.s4 1966171168
          %v2018 = vunpack.c.0.s8 %v2017
          %v2019 = vlaneseq
          %v2020 = vshrl.u32 %v2019, 7
          %v2021 = vsub.s32 %v2018, %v2020
          %v2022 = vrot.slane %v2008, %v2021
          %v2023 = vcombine.high %v2015, %v2015
          %v2024 = vcombine.high %v2022, %v2022
          %v2026 = vunpack.c.l.s4 1966171168
          %v2027 = vunpack.c.0.s8 %v2026
          %v2028 = vlaneseq
          %v2029 = vshrl.u32 %v2028, 7
          %v2030 = vsub.s32 %v2027, %v2029
          %v2031 = vrot.slane %v2015, %v2030
          %v2033 = vunpack.c.l.s4 1966171168
          %v2034 = vunpack.c.0.s8 %v2033
          %v2035 = vlaneseq
          %v2036 = vshrl.u32 %v2035, 7
          %v2037 = vsub.s32 %v2034, %v2036
          %v2038 = vrot.slane %v2022, %v2037
          %v2040 = vunpack.c.l.s4 1966171168
          %v2041 = vunpack.c.0.s8 %v2040
          %v2042 = vlaneseq
          %v2043 = vshrl.u32 %v2042, 7
          %v2044 = vsub.s32 %v2041, %v2043
          %v2045 = vrot.slane %v2023, %v2044
          %v2047 = vunpack.c.l.s4 1966171168
          %v2048 = vunpack.c.0.s8 %v2047
          %v2049 = vlaneseq
          %v2050 = vshrl.u32 %v2049, 7
          %v2051 = vsub.s32 %v2048, %v2050
          %v2052 = vrot.slane %v2024, %v2051
          %v2053 = vcombine.high %v2031, %v2031
          %v2054 = vcombine.high %v2038, %v2038
          %v2055 = vcombine.high %v2045, %v2045
          %v2056 = vcombine.high %v2052, %v2052
          %2065 = vst [vmem:[#allocation5 + $0x2] sm:$0x1] %v2031
          %2066 = vst [vmem:[#allocation5 + $0xa] sm:$0x1] %v2045
          %2067 = vst [vmem:[#allocation5 + $0x12] sm:$0x1] %v2053
          %2068 = vst [vmem:[#allocation5 + $0x1a] sm:$0x1] %v2055
          %2069 = vst [vmem:[#allocation5 + $0x22] sm:$0x1] %v2038
          %2070 = vst [vmem:[#allocation5 + $0x2a] sm:$0x1] %v2052
          %2071 = vst [vmem:[#allocation5 + $0x32] sm:$0x1] %v2054
          %2072 = vst [vmem:[#allocation5 + $0x3a] sm:$0x1] %v2056
          %v2074 = vcombine.high %v1927, %v1927
          %v2076 = vunpack.c.l.s4 1966171168
          %v2077 = vunpack.c.0.s8 %v2076
          %v2078 = vlaneseq
          %v2079 = vshrl.u32 %v2078, 7
          %v2080 = vsub.s32 %v2077, %v2079
          %v2081 = vrot.slane %v1927, %v2080
          %v2083 = vunpack.c.l.s4 1966171168
          %v2084 = vunpack.c.0.s8 %v2083
          %v2085 = vlaneseq
          %v2086 = vshrl.u32 %v2085, 7
          %v2087 = vsub.s32 %v2084, %v2086
          %v2088 = vrot.slane %v2074, %v2087
          %v2089 = vcombine.high %v2081, %v2081
          %v2090 = vcombine.high %v2088, %v2088
          %v2092 = vunpack.c.l.s4 1966171168
          %v2093 = vunpack.c.0.s8 %v2092
          %v2094 = vlaneseq
          %v2095 = vshrl.u32 %v2094, 7
          %v2096 = vsub.s32 %v2093, %v2095
          %v2097 = vrot.slane %v2081, %v2096
          %v2099 = vunpack.c.l.s4 1966171168
          %v2100 = vunpack.c.0.s8 %v2099
          %v2101 = vlaneseq
          %v2102 = vshrl.u32 %v2101, 7
          %v2103 = vsub.s32 %v2100, %v2102
          %v2104 = vrot.slane %v2088, %v2103
          %v2106 = vunpack.c.l.s4 1966171168
          %v2107 = vunpack.c.0.s8 %v2106
          %v2108 = vlaneseq
          %v2109 = vshrl.u32 %v2108, 7
          %v2110 = vsub.s32 %v2107, %v2109
          %v2111 = vrot.slane %v2089, %v2110
          %v2113 = vunpack.c.l.s4 1966171168
          %v2114 = vunpack.c.0.s8 %v2113
          %v2115 = vlaneseq
          %v2116 = vshrl.u32 %v2115, 7
          %v2117 = vsub.s32 %v2114, %v2116
          %v2118 = vrot.slane %v2090, %v2117
          %v2119 = vcombine.high %v2097, %v2097
          %v2120 = vcombine.high %v2104, %v2104
          %v2121 = vcombine.high %v2111, %v2111
          %v2122 = vcombine.high %v2118, %v2118
          %2131 = vst [vmem:[#allocation6 + $0x2] sm:$0x1] %v2097
          %2132 = vst [vmem:[#allocation6 + $0xa] sm:$0x1] %v2111
          %2133 = vst [vmem:[#allocation6 + $0x12] sm:$0x1] %v2119
          %2134 = vst [vmem:[#allocation6 + $0x1a] sm:$0x1] %v2121
          %2135 = vst [vmem:[#allocation6 + $0x22] sm:$0x1] %v2104
          %2136 = vst [vmem:[#allocation6 + $0x2a] sm:$0x1] %v2118
          %2137 = vst [vmem:[#allocation6 + $0x32] sm:$0x1] %v2120
          %2138 = vst [vmem:[#allocation6 + $0x3a] sm:$0x1] %v2122
          %vm2139 = vcmp.gt.f32.partialorder %v2006, 0.999999
          %vm2140 = vcmp.lt.f32.partialorder %v1927, 1.000001
          %v2141 = vsub.f32 1.0, %v1927
          %v2142 = vmul.f32 %v2141, 1.442695
          %v2143 = vpow.pop %v2142
          %v2144 = vsub.f32 %v1927, 1.0
          %v2145 = vmul.f32 %v2144, 1.442695
          %v2146 = vpow.pop %v2145
          %v2148 = vrot.slane %v2143, 5
          %v2149 = vrot.slane %v2143, 6
          %v2150 = vrot.slane %v2143, 7
          %v2151 = vrot.slane %v2143, 1
          %v2152 = vrot.slane %v2143, 2
          %v2153 = vrot.slane %v2143, 3
          %v2154 = vrot.slane %v2143, 4
          %v2163 = vmul.f32 %v1250, %v2148
          %v2164 = vmul.f32 %v1251, %v2149
          %v2165 = vmul.f32 %v1252, %v2150
          %v2166 = vmul.f32 %v1253, %v2143
          %v2167 = vmul.f32 %v1254, %v2151
          %v2168 = vmul.f32 %v1255, %v2152
          %v2169 = vmul.f32 %v1256, %v2153
          %v2170 = vmul.f32 %v1257, %v2154
          %v2171 = vmul.f32 %v2146, 0.005
          %v2173 = vrot.slane %v2171, 5
          %v2174 = vrot.slane %v2171, 6
          %v2175 = vrot.slane %v2171, 7
          %v2176 = vrot.slane %v2171, 1
          %v2177 = vrot.slane %v2171, 2
          %v2178 = vrot.slane %v2171, 3
          %v2179 = vrot.slane %v2171, 4
          %v2188 = vsub.f32 %v2163, %v2173
          %v2189 = vsub.f32 %v2164, %v2174
          %v2190 = vsub.f32 %v2165, %v2175
          %v2191 = vsub.f32 %v2166, %v2171
          %v2192 = vsub.f32 %v2167, %v2176
          %v2193 = vsub.f32 %v2168, %v2177
          %v2194 = vsub.f32 %v2169, %v2178
          %v2195 = vsub.f32 %v2170, %v2179
          %v2204 = vrot.slane %v2188, 3
          %v2205 = vrot.slane %v2189, 2
          %v2206 = vsel %vm1316, %v2205, %v2204
          %v2207 = vrot.slane %v2190, 1
          %v2208 = vsel %vm1319, %v2207, %v2206
          %v2209 = vsel %vm1322, %v2191, %v2208
          %v2210 = vrot.slane %v2192, 7
          %v2211 = vsel %vm1325, %v2210, %v2209
          %v2212 = vrot.slane %v2193, 6
          %v2213 = vsel %vm1328, %v2212, %v2211
          %v2214 = vrot.slane %v2194, 5
          %v2215 = vsel %vm1331, %v2214, %v2213
          %v2216 = vrot.slane %v2195, 4
          %v2217 = vsel %vm1334, %v2216, %v2215
          %v2219 = vadd.f32 %v1927, %v2217
          %v2220 = vsel %vm2139, %v2219, %v1927
          %v2221 = vmax.f32 %v2220, 1.0
          %v2222 = vmul.f32 %v2002, 0.4
          %v2223 = vsel %vm2140, %v2222, %v2002
          %v2224 = vmul.f32 %v2003, 0.998
          %v2225 = vsel %vm2140, %v2224, %v2003
          %v2226 = vsub.f32 1.0, %v2006
          %v2227 = vadd.f32 %v2226, 0.01
          %v2228 = vrcp.pop %v2227
          %v2229 = vmul.f32 0.22, %v2228
          %v2231 = vrot.slane %v2229, 5
          %v2232 = vrot.slane %v2229, 6
          %v2233 = vrot.slane %v2229, 7
          %v2234 = vrot.slane %v2229, 1
          %v2235 = vrot.slane %v2229, 2
          %v2236 = vrot.slane %v2229, 3
          %v2237 = vrot.slane %v2229, 4
          %v2246 = vmul.f32 %v1231, %v2231
          %v2247 = vmul.f32 %v1232, %v2232
          %v2248 = vmul.f32 %v1233, %v2233
          %v2249 = vmul.f32 %v1234, %v2229
          %v2250 = vmul.f32 %v1235, %v2234
          %v2251 = vmul.f32 %v1236, %v2235
          %v2252 = vmul.f32 %v1237, %v2236
          %v2253 = vmul.f32 %v1238, %v2237
          %v2254 = vsub.f32 1.0, %v2223
          %v2255 = vsub.f32 %v2254, %v2225
          %v2256 = vmax.f32 %v2246, 0.0
          %v2257 = vmax.f32 %v2247, 0.0
          %v2258 = vmax.f32 %v2248, 0.0
          %v2259 = vmax.f32 %v2249, 0.0
          %v2260 = vmax.f32 %v2250, 0.0
          %v2261 = vmax.f32 %v2251, 0.0
          %v2262 = vmax.f32 %v2252, 0.0
          %v2263 = vmax.f32 %v2253, 0.0
          %v2272 = vrot.slane %v2256, 3
          %v2273 = vrot.slane %v2257, 2
          %v2274 = vsel %vm1316, %v2273, %v2272
          %v2275 = vrot.slane %v2258, 1
          %v2276 = vsel %vm1319, %v2275, %v2274
          %v2277 = vsel %vm1322, %v2259, %v2276
          %v2278 = vrot.slane %v2260, 7
          %v2279 = vsel %vm1325, %v2278, %v2277
          %v2280 = vrot.slane %v2261, 6
          %v2281 = vsel %vm1328, %v2280, %v2279
          %v2282 = vrot.slane %v2262, 5
          %v2283 = vsel %vm1331, %v2282, %v2281
          %v2284 = vrot.slane %v2263, 4
          %v2285 = vsel %vm1334, %v2284, %v2283
          %v2287 = vmin.f32 %v2255, %v2285
          %v2288 = vadd.f32 %v2223, %v2287
          %v2289 = vsel %vm2140, %v2288, %v2002
          %v2290 = vmul.f32 %v2289, 0.01
          %v2291 = vsub.f32 1.0, %v2225
          %v2292 = vmin.f32 %v2291, %v2289
          %v2293 = vmax.f32 %v2290, 0.0
          %v2294 = vmin.f32 %v2292, %v2293
          %v2295 = vsel %vm2140, %v2294, 0.0
          %v2296 = vsub.f32 %v2289, %v2295
          %v2297 = vadd.f32 %v2225, %v2295
          %v2298 = vadd.f32 %v2297, %v2296
          %v2299 = vmax.f32 %v2298, 0.0
          %v2300 = vmin.f32 %v2299, 1.0
          %v2302 = vcombine.high %v2300, %v2300
          %v2304 = vunpack.c.l.s4 1966171168
          %v2305 = vunpack.c.0.s8 %v2304
          %v2306 = vlaneseq
          %v2307 = vshrl.u32 %v2306, 7
          %v2308 = vsub.s32 %v2305, %v2307
          %v2309 = vrot.slane %v2300, %v2308
          %v2311 = vunpack.c.l.s4 1966171168
          %v2312 = vunpack.c.0.s8 %v2311
          %v2313 = vlaneseq
          %v2314 = vshrl.u32 %v2313, 7
          %v2315 = vsub.s32 %v2312, %v2314
          %v2316 = vrot.slane %v2302, %v2315
          %v2317 = vcombine.high %v2309, %v2309
          %v2318 = vcombine.high %v2316, %v2316
          %v2320 = vunpack.c.l.s4 1966171168
          %v2321 = vunpack.c.0.s8 %v2320
          %v2322 = vlaneseq
          %v2323 = vshrl.u32 %v2322, 7
          %v2324 = vsub.s32 %v2321, %v2323
          %v2325 = vrot.slane %v2309, %v2324
          %v2327 = vunpack.c.l.s4 1966171168
          %v2328 = vunpack.c.0.s8 %v2327
          %v2329 = vlaneseq
          %v2330 = vshrl.u32 %v2329, 7
          %v2331 = vsub.s32 %v2328, %v2330
          %v2332 = vrot.slane %v2316, %v2331
          %v2334 = vunpack.c.l.s4 1966171168
          %v2335 = vunpack.c.0.s8 %v2334
          %v2336 = vlaneseq
          %v2337 = vshrl.u32 %v2336, 7
          %v2338 = vsub.s32 %v2335, %v2337
          %v2339 = vrot.slane %v2317, %v2338
          %v2341 = vunpack.c.l.s4 1966171168
          %v2342 = vunpack.c.0.s8 %v2341
          %v2343 = vlaneseq
          %v2344 = vshrl.u32 %v2343, 7
          %v2345 = vsub.s32 %v2342, %v2344
          %v2346 = vrot.slane %v2318, %v2345
          %v2347 = vcombine.high %v2325, %v2325
          %v2348 = vcombine.high %v2332, %v2332
          %v2349 = vcombine.high %v2339, %v2339
          %v2350 = vcombine.high %v2346, %v2346
          %2359 = vst [vmem:[#allocation5 + $0x3] sm:$0x1] %v2325
          %2360 = vst [vmem:[#allocation5 + $0xb] sm:$0x1] %v2339
          %2361 = vst [vmem:[#allocation5 + $0x13] sm:$0x1] %v2347
          %2362 = vst [vmem:[#allocation5 + $0x1b] sm:$0x1] %v2349
          %2363 = vst [vmem:[#allocation5 + $0x23] sm:$0x1] %v2332
          %2364 = vst [vmem:[#allocation5 + $0x2b] sm:$0x1] %v2346
          %2365 = vst [vmem:[#allocation5 + $0x33] sm:$0x1] %v2348
          %2366 = vst [vmem:[#allocation5 + $0x3b] sm:$0x1] %v2350
          %v2368 = vcombine.high %v2221, %v2221
          %v2370 = vunpack.c.l.s4 1966171168
          %v2371 = vunpack.c.0.s8 %v2370
          %v2372 = vlaneseq
          %v2373 = vshrl.u32 %v2372, 7
          %v2374 = vsub.s32 %v2371, %v2373
          %v2375 = vrot.slane %v2221, %v2374
          %v2377 = vunpack.c.l.s4 1966171168
          %v2378 = vunpack.c.0.s8 %v2377
          %v2379 = vlaneseq
          %v2380 = vshrl.u32 %v2379, 7
          %v2381 = vsub.s32 %v2378, %v2380
          %v2382 = vrot.slane %v2368, %v2381
          %v2383 = vcombine.high %v2375, %v2375
          %v2384 = vcombine.high %v2382, %v2382
          %v2386 = vunpack.c.l.s4 1966171168
          %v2387 = vunpack.c.0.s8 %v2386
          %v2388 = vlaneseq
          %v2389 = vshrl.u32 %v2388, 7
          %v2390 = vsub.s32 %v2387, %v2389
          %v2391 = vrot.slane %v2375, %v2390
          %v2393 = vunpack.c.l.s4 1966171168
          %v2394 = vunpack.c.0.s8 %v2393
          %v2395 = vlaneseq
          %v2396 = vshrl.u32 %v2395, 7
          %v2397 = vsub.s32 %v2394, %v2396
          %v2398 = vrot.slane %v2382, %v2397
          %v2400 = vunpack.c.l.s4 1966171168
          %v2401 = vunpack.c.0.s8 %v2400
          %v2402 = vlaneseq
          %v2403 = vshrl.u32 %v2402, 7
          %v2404 = vsub.s32 %v2401, %v2403
          %v2405 = vrot.slane %v2383, %v2404
          %v2407 = vunpack.c.l.s4 1966171168
          %v2408 = vunpack.c.0.s8 %v2407
          %v2409 = vlaneseq
          %v2410 = vshrl.u32 %v2409, 7
          %v2411 = vsub.s32 %v2408, %v2410
          %v2412 = vrot.slane %v2384, %v2411
          %v2413 = vcombine.high %v2391, %v2391
          %v2414 = vcombine.high %v2398, %v2398
          %v2415 = vcombine.high %v2405, %v2405
          %v2416 = vcombine.high %v2412, %v2412
          %2425 = vst [vmem:[#allocation6 + $0x3] sm:$0x1] %v2391
          %2426 = vst [vmem:[#allocation6 + $0xb] sm:$0x1] %v2405
          %2427 = vst [vmem:[#allocation6 + $0x13] sm:$0x1] %v2413
          %2428 = vst [vmem:[#allocation6 + $0x1b] sm:$0x1] %v2415
          %2429 = vst [vmem:[#allocation6 + $0x23] sm:$0x1] %v2398
          %2430 = vst [vmem:[#allocation6 + $0x2b] sm:$0x1] %v2412
          %2431 = vst [vmem:[#allocation6 + $0x33] sm:$0x1] %v2414
          %2432 = vst [vmem:[#allocation6 + $0x3b] sm:$0x1] %v2416
          %vm2433 = vcmp.gt.f32.partialorder %v2300, 0.999999
          %vm2434 = vcmp.lt.f32.partialorder %v2221, 1.000001
          %v2435 = vsub.f32 1.0, %v2221
          %v2436 = vmul.f32 %v2435, 1.442695
          %v2437 = vpow.pop %v2436
          %v2438 = vsub.f32 %v2221, 1.0
          %v2439 = vmul.f32 %v2438, 1.442695
          %v2440 = vpow.pop %v2439
          %v2442 = vrot.slane %v2437, 4
          %v2443 = vrot.slane %v2437, 5
          %v2444 = vrot.slane %v2437, 6
          %v2445 = vrot.slane %v2437, 7
          %v2446 = vrot.slane %v2437, 1
          %v2447 = vrot.slane %v2437, 2
          %v2448 = vrot.slane %v2437, 3
          %v2457 = vmul.f32 %v1250, %v2442
          %v2458 = vmul.f32 %v1251, %v2443
          %v2459 = vmul.f32 %v1252, %v2444
          %v2460 = vmul.f32 %v1253, %v2445
          %v2461 = vmul.f32 %v1254, %v2437
          %v2462 = vmul.f32 %v1255, %v2446
          %v2463 = vmul.f32 %v1256, %v2447
          %v2464 = vmul.f32 %v1257, %v2448
          %v2465 = vmul.f32 %v2440, 0.005
          %v2467 = vrot.slane %v2465, 4
          %v2468 = vrot.slane %v2465, 5
          %v2469 = vrot.slane %v2465, 6
          %v2470 = vrot.slane %v2465, 7
          %v2471 = vrot.slane %v2465, 1
          %v2472 = vrot.slane %v2465, 2
          %v2473 = vrot.slane %v2465, 3
          %v2482 = vsub.f32 %v2457, %v2467
          %v2483 = vsub.f32 %v2458, %v2468
          %v2484 = vsub.f32 %v2459, %v2469
          %v2485 = vsub.f32 %v2460, %v2470
          %v2486 = vsub.f32 %v2461, %v2465
          %v2487 = vsub.f32 %v2462, %v2471
          %v2488 = vsub.f32 %v2463, %v2472
          %v2489 = vsub.f32 %v2464, %v2473
          %v2498 = vrot.slane %v2482, 4
          %v2499 = vrot.slane %v2483, 3
          %v2500 = vsel %vm1316, %v2499, %v2498
          %v2501 = vrot.slane %v2484, 2
          %v2502 = vsel %vm1319, %v2501, %v2500
          %v2503 = vrot.slane %v2485, 1
          %v2504 = vsel %vm1322, %v2503, %v2502
          %v2505 = vsel %vm1325, %v2486, %v2504
          %v2506 = vrot.slane %v2487, 7
          %v2507 = vsel %vm1328, %v2506, %v2505
          %v2508 = vrot.slane %v2488, 6
          %v2509 = vsel %vm1331, %v2508, %v2507
          %v2510 = vrot.slane %v2489, 5
          %v2511 = vsel %vm1334, %v2510, %v2509
          %v2513 = vadd.f32 %v2221, %v2511
          %v2514 = vsel %vm2433, %v2513, %v2221
          %v2515 = vmax.f32 %v2514, 1.0
          %v2516 = vmul.f32 %v2296, 0.4
          %v2517 = vsel %vm2434, %v2516, %v2296
          %v2518 = vmul.f32 %v2297, 0.998
          %v2519 = vsel %vm2434, %v2518, %v2297
          %v2520 = vsub.f32 1.0, %v2300
          %v2521 = vadd.f32 %v2520, 0.01
          %v2522 = vrcp.pop %v2521
          %v2523 = vmul.f32 0.22, %v2522
          %v2525 = vrot.slane %v2523, 4
          %v2526 = vrot.slane %v2523, 5
          %v2527 = vrot.slane %v2523, 6
          %v2528 = vrot.slane %v2523, 7
          %v2529 = vrot.slane %v2523, 1
          %v2530 = vrot.slane %v2523, 2
          %v2531 = vrot.slane %v2523, 3
          %v2540 = vmul.f32 %v1231, %v2525
          %v2541 = vmul.f32 %v1232, %v2526
          %v2542 = vmul.f32 %v1233, %v2527
          %v2543 = vmul.f32 %v1234, %v2528
          %v2544 = vmul.f32 %v1235, %v2523
          %v2545 = vmul.f32 %v1236, %v2529
          %v2546 = vmul.f32 %v1237, %v2530
          %v2547 = vmul.f32 %v1238, %v2531
          %v2548 = vsub.f32 1.0, %v2517
          %v2549 = vsub.f32 %v2548, %v2519
          %v2550 = vmax.f32 %v2540, 0.0
          %v2551 = vmax.f32 %v2541, 0.0
          %v2552 = vmax.f32 %v2542, 0.0
          %v2553 = vmax.f32 %v2543, 0.0
          %v2554 = vmax.f32 %v2544, 0.0
          %v2555 = vmax.f32 %v2545, 0.0
          %v2556 = vmax.f32 %v2546, 0.0
          %v2557 = vmax.f32 %v2547, 0.0
          %v2566 = vrot.slane %v2550, 4
          %v2567 = vrot.slane %v2551, 3
          %v2568 = vsel %vm1316, %v2567, %v2566
          %v2569 = vrot.slane %v2552, 2
          %v2570 = vsel %vm1319, %v2569, %v2568
          %v2571 = vrot.slane %v2553, 1
          %v2572 = vsel %vm1322, %v2571, %v2570
          %v2573 = vsel %vm1325, %v2554, %v2572
          %v2574 = vrot.slane %v2555, 7
          %v2575 = vsel %vm1328, %v2574, %v2573
          %v2576 = vrot.slane %v2556, 6
          %v2577 = vsel %vm1331, %v2576, %v2575
          %v2578 = vrot.slane %v2557, 5
          %v2579 = vsel %vm1334, %v2578, %v2577
          %v2581 = vmin.f32 %v2549, %v2579
          %v2582 = vadd.f32 %v2517, %v2581
          %v2583 = vsel %vm2434, %v2582, %v2296
          %v2584 = vmul.f32 %v2583, 0.01
          %v2585 = vsub.f32 1.0, %v2519
          %v2586 = vmin.f32 %v2585, %v2583
          %v2587 = vmax.f32 %v2584, 0.0
          %v2588 = vmin.f32 %v2586, %v2587
          %v2589 = vsel %vm2434, %v2588, 0.0
          %v2590 = vsub.f32 %v2583, %v2589
          %v2591 = vadd.f32 %v2519, %v2589
          %v2592 = vadd.f32 %v2591, %v2590
          %v2593 = vmax.f32 %v2592, 0.0
          %v2594 = vmin.f32 %v2593, 1.0
          %v2596 = vcombine.high %v2594, %v2594
          %v2598 = vunpack.c.l.s4 1966171168
          %v2599 = vunpack.c.0.s8 %v2598
          %v2600 = vlaneseq
          %v2601 = vshrl.u32 %v2600, 7
          %v2602 = vsub.s32 %v2599, %v2601
          %v2603 = vrot.slane %v2594, %v2602
          %v2605 = vunpack.c.l.s4 1966171168
          %v2606 = vunpack.c.0.s8 %v2605
          %v2607 = vlaneseq
          %v2608 = vshrl.u32 %v2607, 7
          %v2609 = vsub.s32 %v2606, %v2608
          %v2610 = vrot.slane %v2596, %v2609
          %v2611 = vcombine.high %v2603, %v2603
          %v2612 = vcombine.high %v2610, %v2610
          %v2614 = vunpack.c.l.s4 1966171168
          %v2615 = vunpack.c.0.s8 %v2614
          %v2616 = vlaneseq
          %v2617 = vshrl.u32 %v2616, 7
          %v2618 = vsub.s32 %v2615, %v2617
          %v2619 = vrot.slane %v2603, %v2618
          %v2621 = vunpack.c.l.s4 1966171168
          %v2622 = vunpack.c.0.s8 %v2621
          %v2623 = vlaneseq
          %v2624 = vshrl.u32 %v2623, 7
          %v2625 = vsub.s32 %v2622, %v2624
          %v2626 = vrot.slane %v2610, %v2625
          %v2628 = vunpack.c.l.s4 1966171168
          %v2629 = vunpack.c.0.s8 %v2628
          %v2630 = vlaneseq
          %v2631 = vshrl.u32 %v2630, 7
          %v2632 = vsub.s32 %v2629, %v2631
          %v2633 = vrot.slane %v2611, %v2632
          %v2635 = vunpack.c.l.s4 1966171168
          %v2636 = vunpack.c.0.s8 %v2635
          %v2637 = vlaneseq
          %v2638 = vshrl.u32 %v2637, 7
          %v2639 = vsub.s32 %v2636, %v2638
          %v2640 = vrot.slane %v2612, %v2639
          %v2641 = vcombine.high %v2619, %v2619
          %v2642 = vcombine.high %v2626, %v2626
          %v2643 = vcombine.high %v2633, %v2633
          %v2644 = vcombine.high %v2640, %v2640
          %2653 = vst [vmem:[#allocation5 + $0x4] sm:$0x1] %v2619
          %2654 = vst [vmem:[#allocation5 + $0xc] sm:$0x1] %v2633
          %2655 = vst [vmem:[#allocation5 + $0x14] sm:$0x1] %v2641
          %2656 = vst [vmem:[#allocation5 + $0x1c] sm:$0x1] %v2643
          %2657 = vst [vmem:[#allocation5 + $0x24] sm:$0x1] %v2626
          %2658 = vst [vmem:[#allocation5 + $0x2c] sm:$0x1] %v2640
          %2659 = vst [vmem:[#allocation5 + $0x34] sm:$0x1] %v2642
          %2660 = vst [vmem:[#allocation5 + $0x3c] sm:$0x1] %v2644
          %v2662 = vcombine.high %v2515, %v2515
          %v2664 = vunpack.c.l.s4 1966171168
          %v2665 = vunpack.c.0.s8 %v2664
          %v2666 = vlaneseq
          %v2667 = vshrl.u32 %v2666, 7
          %v2668 = vsub.s32 %v2665, %v2667
          %v2669 = vrot.slane %v2515, %v2668
          %v2671 = vunpack.c.l.s4 1966171168
          %v2672 = vunpack.c.0.s8 %v2671
          %v2673 = vlaneseq
          %v2674 = vshrl.u32 %v2673, 7
          %v2675 = vsub.s32 %v2672, %v2674
          %v2676 = vrot.slane %v2662, %v2675
          %v2677 = vcombine.high %v2669, %v2669
          %v2678 = vcombine.high %v2676, %v2676
          %v2680 = vunpack.c.l.s4 1966171168
          %v2681 = vunpack.c.0.s8 %v2680
          %v2682 = vlaneseq
          %v2683 = vshrl.u32 %v2682, 7
          %v2684 = vsub.s32 %v2681, %v2683
          %v2685 = vrot.slane %v2669, %v2684
          %v2687 = vunpack.c.l.s4 1966171168
          %v2688 = vunpack.c.0.s8 %v2687
          %v2689 = vlaneseq
          %v2690 = vshrl.u32 %v2689, 7
          %v2691 = vsub.s32 %v2688, %v2690
          %v2692 = vrot.slane %v2676, %v2691
          %v2694 = vunpack.c.l.s4 1966171168
          %v2695 = vunpack.c.0.s8 %v2694
          %v2696 = vlaneseq
          %v2697 = vshrl.u32 %v2696, 7
          %v2698 = vsub.s32 %v2695, %v2697
          %v2699 = vrot.slane %v2677, %v2698
          %v2701 = vunpack.c.l.s4 1966171168
          %v2702 = vunpack.c.0.s8 %v2701
          %v2703 = vlaneseq
          %v2704 = vshrl.u32 %v2703, 7
          %v2705 = vsub.s32 %v2702, %v2704
          %v2706 = vrot.slane %v2678, %v2705
          %v2707 = vcombine.high %v2685, %v2685
          %v2708 = vcombine.high %v2692, %v2692
          %v2709 = vcombine.high %v2699, %v2699
          %v2710 = vcombine.high %v2706, %v2706
          %2719 = vst [vmem:[#allocation6 + $0x4] sm:$0x1] %v2685
          %2720 = vst [vmem:[#allocation6 + $0xc] sm:$0x1] %v2699
          %2721 = vst [vmem:[#allocation6 + $0x14] sm:$0x1] %v2707
          %2722 = vst [vmem:[#allocation6 + $0x1c] sm:$0x1] %v2709
          %2723 = vst [vmem:[#allocation6 + $0x24] sm:$0x1] %v2692
          %2724 = vst [vmem:[#allocation6 + $0x2c] sm:$0x1] %v2706
          %2725 = vst [vmem:[#allocation6 + $0x34] sm:$0x1] %v2708
          %2726 = vst [vmem:[#allocation6 + $0x3c] sm:$0x1] %v2710
          %vm2727 = vcmp.gt.f32.partialorder %v2594, 0.999999
          %vm2728 = vcmp.lt.f32.partialorder %v2515, 1.000001
          %v2729 = vsub.f32 1.0, %v2515
          %v2730 = vmul.f32 %v2729, 1.442695
          %v2731 = vpow.pop %v2730
          %v2732 = vsub.f32 %v2515, 1.0
          %v2733 = vmul.f32 %v2732, 1.442695
          %v2734 = vpow.pop %v2733
          %v2736 = vrot.slane %v2731, 3
          %v2737 = vrot.slane %v2731, 4
          %v2738 = vrot.slane %v2731, 5
          %v2739 = vrot.slane %v2731, 6
          %v2740 = vrot.slane %v2731, 7
          %v2741 = vrot.slane %v2731, 1
          %v2742 = vrot.slane %v2731, 2
          %v2751 = vmul.f32 %v1250, %v2736
          %v2752 = vmul.f32 %v1251, %v2737
          %v2753 = vmul.f32 %v1252, %v2738
          %v2754 = vmul.f32 %v1253, %v2739
          %v2755 = vmul.f32 %v1254, %v2740
          %v2756 = vmul.f32 %v1255, %v2731
          %v2757 = vmul.f32 %v1256, %v2741
          %v2758 = vmul.f32 %v1257, %v2742
          %v2759 = vmul.f32 %v2734, 0.005
          %v2761 = vrot.slane %v2759, 3
          %v2762 = vrot.slane %v2759, 4
          %v2763 = vrot.slane %v2759, 5
          %v2764 = vrot.slane %v2759, 6
          %v2765 = vrot.slane %v2759, 7
          %v2766 = vrot.slane %v2759, 1
          %v2767 = vrot.slane %v2759, 2
          %v2776 = vsub.f32 %v2751, %v2761
          %v2777 = vsub.f32 %v2752, %v2762
          %v2778 = vsub.f32 %v2753, %v2763
          %v2779 = vsub.f32 %v2754, %v2764
          %v2780 = vsub.f32 %v2755, %v2765
          %v2781 = vsub.f32 %v2756, %v2759
          %v2782 = vsub.f32 %v2757, %v2766
          %v2783 = vsub.f32 %v2758, %v2767
          %v2792 = vrot.slane %v2776, 5
          %v2793 = vrot.slane %v2777, 4
          %v2794 = vsel %vm1316, %v2793, %v2792
          %v2795 = vrot.slane %v2778, 3
          %v2796 = vsel %vm1319, %v2795, %v2794
          %v2797 = vrot.slane %v2779, 2
          %v2798 = vsel %vm1322, %v2797, %v2796
          %v2799 = vrot.slane %v2780, 1
          %v2800 = vsel %vm1325, %v2799, %v2798
          %v2801 = vsel %vm1328, %v2781, %v2800
          %v2802 = vrot.slane %v2782, 7
          %v2803 = vsel %vm1331, %v2802, %v2801
          %v2804 = vrot.slane %v2783, 6
          %v2805 = vsel %vm1334, %v2804, %v2803
          %v2807 = vadd.f32 %v2515, %v2805
          %v2808 = vsel %vm2727, %v2807, %v2515
          %v2809 = vmax.f32 %v2808, 1.0
          %v2810 = vmul.f32 %v2590, 0.4
          %v2811 = vsel %vm2728, %v2810, %v2590
          %v2812 = vmul.f32 %v2591, 0.998
          %v2813 = vsel %vm2728, %v2812, %v2591
          %v2814 = vsub.f32 1.0, %v2594
          %v2815 = vadd.f32 %v2814, 0.01
          %v2816 = vrcp.pop %v2815
          %v2817 = vmul.f32 0.22, %v2816
          %v2819 = vrot.slane %v2817, 3
          %v2820 = vrot.slane %v2817, 4
          %v2821 = vrot.slane %v2817, 5
          %v2822 = vrot.slane %v2817, 6
          %v2823 = vrot.slane %v2817, 7
          %v2824 = vrot.slane %v2817, 1
          %v2825 = vrot.slane %v2817, 2
          %v2834 = vmul.f32 %v1231, %v2819
          %v2835 = vmul.f32 %v1232, %v2820
          %v2836 = vmul.f32 %v1233, %v2821
          %v2837 = vmul.f32 %v1234, %v2822
          %v2838 = vmul.f32 %v1235, %v2823
          %v2839 = vmul.f32 %v1236, %v2817
          %v2840 = vmul.f32 %v1237, %v2824
          %v2841 = vmul.f32 %v1238, %v2825
          %v2842 = vsub.f32 1.0, %v2811
          %v2843 = vsub.f32 %v2842, %v2813
          %v2844 = vmax.f32 %v2834, 0.0
          %v2845 = vmax.f32 %v2835, 0.0
          %v2846 = vmax.f32 %v2836, 0.0
          %v2847 = vmax.f32 %v2837, 0.0
          %v2848 = vmax.f32 %v2838, 0.0
          %v2849 = vmax.f32 %v2839, 0.0
          %v2850 = vmax.f32 %v2840, 0.0
          %v2851 = vmax.f32 %v2841, 0.0
          %v2860 = vrot.slane %v2844, 5
          %v2861 = vrot.slane %v2845, 4
          %v2862 = vsel %vm1316, %v2861, %v2860
          %v2863 = vrot.slane %v2846, 3
          %v2864 = vsel %vm1319, %v2863, %v2862
          %v2865 = vrot.slane %v2847, 2
          %v2866 = vsel %vm1322, %v2865, %v2864
          %v2867 = vrot.slane %v2848, 1
          %v2868 = vsel %vm1325, %v2867, %v2866
          %v2869 = vsel %vm1328, %v2849, %v2868
          %v2870 = vrot.slane %v2850, 7
          %v2871 = vsel %vm1331, %v2870, %v2869
          %v2872 = vrot.slane %v2851, 6
          %v2873 = vsel %vm1334, %v2872, %v2871
          %v2875 = vmin.f32 %v2843, %v2873
          %v2876 = vadd.f32 %v2811, %v2875
          %v2877 = vsel %vm2728, %v2876, %v2590
          %v2878 = vmul.f32 %v2877, 0.01
          %v2879 = vsub.f32 1.0, %v2813
          %v2880 = vmin.f32 %v2879, %v2877
          %v2881 = vmax.f32 %v2878, 0.0
          %v2882 = vmin.f32 %v2880, %v2881
          %v2883 = vsel %vm2728, %v2882, 0.0
          %v2884 = vsub.f32 %v2877, %v2883
          %v2885 = vadd.f32 %v2813, %v2883
          %v2886 = vadd.f32 %v2885, %v2884
          %v2887 = vmax.f32 %v2886, 0.0
          %v2888 = vmin.f32 %v2887, 1.0
          %v2890 = vcombine.high %v2888, %v2888
          %v2892 = vunpack.c.l.s4 1966171168
          %v2893 = vunpack.c.0.s8 %v2892
          %v2894 = vlaneseq
          %v2895 = vshrl.u32 %v2894, 7
          %v2896 = vsub.s32 %v2893, %v2895
          %v2897 = vrot.slane %v2888, %v2896
          %v2899 = vunpack.c.l.s4 1966171168
          %v2900 = vunpack.c.0.s8 %v2899
          %v2901 = vlaneseq
          %v2902 = vshrl.u32 %v2901, 7
          %v2903 = vsub.s32 %v2900, %v2902
          %v2904 = vrot.slane %v2890, %v2903
          %v2905 = vcombine.high %v2897, %v2897
          %v2906 = vcombine.high %v2904, %v2904
          %v2908 = vunpack.c.l.s4 1966171168
          %v2909 = vunpack.c.0.s8 %v2908
          %v2910 = vlaneseq
          %v2911 = vshrl.u32 %v2910, 7
          %v2912 = vsub.s32 %v2909, %v2911
          %v2913 = vrot.slane %v2897, %v2912
          %v2915 = vunpack.c.l.s4 1966171168
          %v2916 = vunpack.c.0.s8 %v2915
          %v2917 = vlaneseq
          %v2918 = vshrl.u32 %v2917, 7
          %v2919 = vsub.s32 %v2916, %v2918
          %v2920 = vrot.slane %v2904, %v2919
          %v2922 = vunpack.c.l.s4 1966171168
          %v2923 = vunpack.c.0.s8 %v2922
          %v2924 = vlaneseq
          %v2925 = vshrl.u32 %v2924, 7
          %v2926 = vsub.s32 %v2923, %v2925
          %v2927 = vrot.slane %v2905, %v2926
          %v2929 = vunpack.c.l.s4 1966171168
          %v2930 = vunpack.c.0.s8 %v2929
          %v2931 = vlaneseq
          %v2932 = vshrl.u32 %v2931, 7
          %v2933 = vsub.s32 %v2930, %v2932
          %v2934 = vrot.slane %v2906, %v2933
          %v2935 = vcombine.high %v2913, %v2913
          %v2936 = vcombine.high %v2920, %v2920
          %v2937 = vcombine.high %v2927, %v2927
          %v2938 = vcombine.high %v2934, %v2934
          %2947 = vst [vmem:[#allocation5 + $0x5] sm:$0x1] %v2913
          %2948 = vst [vmem:[#allocation5 + $0xd] sm:$0x1] %v2927
          %2949 = vst [vmem:[#allocation5 + $0x15] sm:$0x1] %v2935
          %2950 = vst [vmem:[#allocation5 + $0x1d] sm:$0x1] %v2937
          %2951 = vst [vmem:[#allocation5 + $0x25] sm:$0x1] %v2920
          %2952 = vst [vmem:[#allocation5 + $0x2d] sm:$0x1] %v2934
          %2953 = vst [vmem:[#allocation5 + $0x35] sm:$0x1] %v2936
          %2954 = vst [vmem:[#allocation5 + $0x3d] sm:$0x1] %v2938
          %v2956 = vcombine.high %v2809, %v2809
          %v2958 = vunpack.c.l.s4 1966171168
          %v2959 = vunpack.c.0.s8 %v2958
          %v2960 = vlaneseq
          %v2961 = vshrl.u32 %v2960, 7
          %v2962 = vsub.s32 %v2959, %v2961
          %v2963 = vrot.slane %v2809, %v2962
          %v2965 = vunpack.c.l.s4 1966171168
          %v2966 = vunpack.c.0.s8 %v2965
          %v2967 = vlaneseq
          %v2968 = vshrl.u32 %v2967, 7
          %v2969 = vsub.s32 %v2966, %v2968
          %v2970 = vrot.slane %v2956, %v2969
          %v2971 = vcombine.high %v2963, %v2963
          %v2972 = vcombine.high %v2970, %v2970
          %v2974 = vunpack.c.l.s4 1966171168
          %v2975 = vunpack.c.0.s8 %v2974
          %v2976 = vlaneseq
          %v2977 = vshrl.u32 %v2976, 7
          %v2978 = vsub.s32 %v2975, %v2977
          %v2979 = vrot.slane %v2963, %v2978
          %v2981 = vunpack.c.l.s4 1966171168
          %v2982 = vunpack.c.0.s8 %v2981
          %v2983 = vlaneseq
          %v2984 = vshrl.u32 %v2983, 7
          %v2985 = vsub.s32 %v2982, %v2984
          %v2986 = vrot.slane %v2970, %v2985
          %v2988 = vunpack.c.l.s4 1966171168
          %v2989 = vunpack.c.0.s8 %v2988
          %v2990 = vlaneseq
          %v2991 = vshrl.u32 %v2990, 7
          %v2992 = vsub.s32 %v2989, %v2991
          %v2993 = vrot.slane %v2971, %v2992
          %v2995 = vunpack.c.l.s4 1966171168
          %v2996 = vunpack.c.0.s8 %v2995
          %v2997 = vlaneseq
          %v2998 = vshrl.u32 %v2997, 7
          %v2999 = vsub.s32 %v2996, %v2998
          %v3000 = vrot.slane %v2972, %v2999
          %v3001 = vcombine.high %v2979, %v2979
          %v3002 = vcombine.high %v2986, %v2986
          %v3003 = vcombine.high %v2993, %v2993
          %v3004 = vcombine.high %v3000, %v3000
          %3013 = vst [vmem:[#allocation6 + $0x5] sm:$0x1] %v2979
          %3014 = vst [vmem:[#allocation6 + $0xd] sm:$0x1] %v2993
          %3015 = vst [vmem:[#allocation6 + $0x15] sm:$0x1] %v3001
          %3016 = vst [vmem:[#allocation6 + $0x1d] sm:$0x1] %v3003
          %3017 = vst [vmem:[#allocation6 + $0x25] sm:$0x1] %v2986
          %3018 = vst [vmem:[#allocation6 + $0x2d] sm:$0x1] %v3000
          %3019 = vst [vmem:[#allocation6 + $0x35] sm:$0x1] %v3002
          %3020 = vst [vmem:[#allocation6 + $0x3d] sm:$0x1] %v3004
          %vm3021 = vcmp.gt.f32.partialorder %v2888, 0.999999
          %vm3022 = vcmp.lt.f32.partialorder %v2809, 1.000001
          %v3023 = vsub.f32 1.0, %v2809
          %v3024 = vmul.f32 %v3023, 1.442695
          %v3025 = vpow.pop %v3024
          %v3026 = vsub.f32 %v2809, 1.0
          %v3027 = vmul.f32 %v3026, 1.442695
          %v3028 = vpow.pop %v3027
          %v3030 = vrot.slane %v3025, 2
          %v3031 = vrot.slane %v3025, 3
          %v3032 = vrot.slane %v3025, 4
          %v3033 = vrot.slane %v3025, 5
          %v3034 = vrot.slane %v3025, 6
          %v3035 = vrot.slane %v3025, 7
          %v3036 = vrot.slane %v3025, 1
          %v3045 = vmul.f32 %v1250, %v3030
          %v3046 = vmul.f32 %v1251, %v3031
          %v3047 = vmul.f32 %v1252, %v3032
          %v3048 = vmul.f32 %v1253, %v3033
          %v3049 = vmul.f32 %v1254, %v3034
          %v3050 = vmul.f32 %v1255, %v3035
          %v3051 = vmul.f32 %v1256, %v3025
          %v3052 = vmul.f32 %v1257, %v3036
          %v3053 = vmul.f32 %v3028, 0.005
          %v3055 = vrot.slane %v3053, 2
          %v3056 = vrot.slane %v3053, 3
          %v3057 = vrot.slane %v3053, 4
          %v3058 = vrot.slane %v3053, 5
          %v3059 = vrot.slane %v3053, 6
          %v3060 = vrot.slane %v3053, 7
          %v3061 = vrot.slane %v3053, 1
          %v3070 = vsub.f32 %v3045, %v3055
          %v3071 = vsub.f32 %v3046, %v3056
          %v3072 = vsub.f32 %v3047, %v3057
          %v3073 = vsub.f32 %v3048, %v3058
          %v3074 = vsub.f32 %v3049, %v3059
          %v3075 = vsub.f32 %v3050, %v3060
          %v3076 = vsub.f32 %v3051, %v3053
          %v3077 = vsub.f32 %v3052, %v3061
          %v3086 = vrot.slane %v3070, 6
          %v3087 = vrot.slane %v3071, 5
          %v3088 = vsel %vm1316, %v3087, %v3086
          %v3089 = vrot.slane %v3072, 4
          %v3090 = vsel %vm1319, %v3089, %v3088
          %v3091 = vrot.slane %v3073, 3
          %v3092 = vsel %vm1322, %v3091, %v3090
          %v3093 = vrot.slane %v3074, 2
          %v3094 = vsel %vm1325, %v3093, %v3092
          %v3095 = vrot.slane %v3075, 1
          %v3096 = vsel %vm1328, %v3095, %v3094
          %v3097 = vsel %vm1331, %v3076, %v3096
          %v3098 = vrot.slane %v3077, 7
          %v3099 = vsel %vm1334, %v3098, %v3097
          %v3101 = vadd.f32 %v2809, %v3099
          %v3102 = vsel %vm3021, %v3101, %v2809
          %v3103 = vmax.f32 %v3102, 1.0
          %v3104 = vmul.f32 %v2884, 0.4
          %v3105 = vsel %vm3022, %v3104, %v2884
          %v3106 = vmul.f32 %v2885, 0.998
          %v3107 = vsel %vm3022, %v3106, %v2885
          %v3108 = vsub.f32 1.0, %v2888
          %v3109 = vadd.f32 %v3108, 0.01
          %v3110 = vrcp.pop %v3109
          %v3111 = vmul.f32 0.22, %v3110
          %v3113 = vrot.slane %v3111, 2
          %v3114 = vrot.slane %v3111, 3
          %v3115 = vrot.slane %v3111, 4
          %v3116 = vrot.slane %v3111, 5
          %v3117 = vrot.slane %v3111, 6
          %v3118 = vrot.slane %v3111, 7
          %v3119 = vrot.slane %v3111, 1
          %v3128 = vmul.f32 %v1231, %v3113
          %v3129 = vmul.f32 %v1232, %v3114
          %v3130 = vmul.f32 %v1233, %v3115
          %v3131 = vmul.f32 %v1234, %v3116
          %v3132 = vmul.f32 %v1235, %v3117
          %v3133 = vmul.f32 %v1236, %v3118
          %v3134 = vmul.f32 %v1237, %v3111
          %v3135 = vmul.f32 %v1238, %v3119
          %v3136 = vsub.f32 1.0, %v3105
          %v3137 = vsub.f32 %v3136, %v3107
          %v3138 = vmax.f32 %v3128, 0.0
          %v3139 = vmax.f32 %v3129, 0.0
          %v3140 = vmax.f32 %v3130, 0.0
          %v3141 = vmax.f32 %v3131, 0.0
          %v3142 = vmax.f32 %v3132, 0.0
          %v3143 = vmax.f32 %v3133, 0.0
          %v3144 = vmax.f32 %v3134, 0.0
          %v3145 = vmax.f32 %v3135, 0.0
          %v3154 = vrot.slane %v3138, 6
          %v3155 = vrot.slane %v3139, 5
          %v3156 = vsel %vm1316, %v3155, %v3154
          %v3157 = vrot.slane %v3140, 4
          %v3158 = vsel %vm1319, %v3157, %v3156
          %v3159 = vrot.slane %v3141, 3
          %v3160 = vsel %vm1322, %v3159, %v3158
          %v3161 = vrot.slane %v3142, 2
          %v3162 = vsel %vm1325, %v3161, %v3160
          %v3163 = vrot.slane %v3143, 1
          %v3164 = vsel %vm1328, %v3163, %v3162
          %v3165 = vsel %vm1331, %v3144, %v3164
          %v3166 = vrot.slane %v3145, 7
          %v3167 = vsel %vm1334, %v3166, %v3165
          %v3169 = vmin.f32 %v3137, %v3167
          %v3170 = vadd.f32 %v3105, %v3169
          %v3171 = vsel %vm3022, %v3170, %v2884
          %v3172 = vmul.f32 %v3171, 0.01
          %v3173 = vsub.f32 1.0, %v3107
          %v3174 = vmin.f32 %v3173, %v3171
          %v3175 = vmax.f32 %v3172, 0.0
          %v3176 = vmin.f32 %v3174, %v3175
          %v3177 = vsel %vm3022, %v3176, 0.0
          %v3178 = vsub.f32 %v3171, %v3177
          %v3179 = vadd.f32 %v3107, %v3177
          %v3180 = vadd.f32 %v3179, %v3178
          %v3181 = vmax.f32 %v3180, 0.0
          %v3182 = vmin.f32 %v3181, 1.0
          %v3184 = vcombine.high %v3182, %v3182
          %v3186 = vunpack.c.l.s4 1966171168
          %v3187 = vunpack.c.0.s8 %v3186
          %v3188 = vlaneseq
          %v3189 = vshrl.u32 %v3188, 7
          %v3190 = vsub.s32 %v3187, %v3189
          %v3191 = vrot.slane %v3182, %v3190
          %v3193 = vunpack.c.l.s4 1966171168
          %v3194 = vunpack.c.0.s8 %v3193
          %v3195 = vlaneseq
          %v3196 = vshrl.u32 %v3195, 7
          %v3197 = vsub.s32 %v3194, %v3196
          %v3198 = vrot.slane %v3184, %v3197
          %v3199 = vcombine.high %v3191, %v3191
          %v3200 = vcombine.high %v3198, %v3198
          %v3202 = vunpack.c.l.s4 1966171168
          %v3203 = vunpack.c.0.s8 %v3202
          %v3204 = vlaneseq
          %v3205 = vshrl.u32 %v3204, 7
          %v3206 = vsub.s32 %v3203, %v3205
          %v3207 = vrot.slane %v3191, %v3206
          %v3209 = vunpack.c.l.s4 1966171168
          %v3210 = vunpack.c.0.s8 %v3209
          %v3211 = vlaneseq
          %v3212 = vshrl.u32 %v3211, 7
          %v3213 = vsub.s32 %v3210, %v3212
          %v3214 = vrot.slane %v3198, %v3213
          %v3216 = vunpack.c.l.s4 1966171168
          %v3217 = vunpack.c.0.s8 %v3216
          %v3218 = vlaneseq
          %v3219 = vshrl.u32 %v3218, 7
          %v3220 = vsub.s32 %v3217, %v3219
          %v3221 = vrot.slane %v3199, %v3220
          %v3223 = vunpack.c.l.s4 1966171168
          %v3224 = vunpack.c.0.s8 %v3223
          %v3225 = vlaneseq
          %v3226 = vshrl.u32 %v3225, 7
          %v3227 = vsub.s32 %v3224, %v3226
          %v3228 = vrot.slane %v3200, %v3227
          %v3229 = vcombine.high %v3207, %v3207
          %v3230 = vcombine.high %v3214, %v3214
          %v3231 = vcombine.high %v3221, %v3221
          %v3232 = vcombine.high %v3228, %v3228
          %3241 = vst [vmem:[#allocation5 + $0x6] sm:$0x1] %v3207
          %3242 = vst [vmem:[#allocation5 + $0xe] sm:$0x1] %v3221
          %3243 = vst [vmem:[#allocation5 + $0x16] sm:$0x1] %v3229
          %3244 = vst [vmem:[#allocation5 + $0x1e] sm:$0x1] %v3231
          %3245 = vst [vmem:[#allocation5 + $0x26] sm:$0x1] %v3214
          %3246 = vst [vmem:[#allocation5 + $0x2e] sm:$0x1] %v3228
          %3247 = vst [vmem:[#allocation5 + $0x36] sm:$0x1] %v3230
          %3248 = vst [vmem:[#allocation5 + $0x3e] sm:$0x1] %v3232
          %v3250 = vcombine.high %v3103, %v3103
          %v3252 = vunpack.c.l.s4 1966171168
          %v3253 = vunpack.c.0.s8 %v3252
          %v3254 = vlaneseq
          %v3255 = vshrl.u32 %v3254, 7
          %v3256 = vsub.s32 %v3253, %v3255
          %v3257 = vrot.slane %v3103, %v3256
          %v3259 = vunpack.c.l.s4 1966171168
          %v3260 = vunpack.c.0.s8 %v3259
          %v3261 = vlaneseq
          %v3262 = vshrl.u32 %v3261, 7
          %v3263 = vsub.s32 %v3260, %v3262
          %v3264 = vrot.slane %v3250, %v3263
          %v3265 = vcombine.high %v3257, %v3257
          %v3266 = vcombine.high %v3264, %v3264
          %v3268 = vunpack.c.l.s4 1966171168
          %v3269 = vunpack.c.0.s8 %v3268
          %v3270 = vlaneseq
          %v3271 = vshrl.u32 %v3270, 7
          %v3272 = vsub.s32 %v3269, %v3271
          %v3273 = vrot.slane %v3257, %v3272
          %v3275 = vunpack.c.l.s4 1966171168
          %v3276 = vunpack.c.0.s8 %v3275
          %v3277 = vlaneseq
          %v3278 = vshrl.u32 %v3277, 7
          %v3279 = vsub.s32 %v3276, %v3278
          %v3280 = vrot.slane %v3264, %v3279
          %v3282 = vunpack.c.l.s4 1966171168
          %v3283 = vunpack.c.0.s8 %v3282
          %v3284 = vlaneseq
          %v3285 = vshrl.u32 %v3284, 7
          %v3286 = vsub.s32 %v3283, %v3285
          %v3287 = vrot.slane %v3265, %v3286
          %v3289 = vunpack.c.l.s4 1966171168
          %v3290 = vunpack.c.0.s8 %v3289
          %v3291 = vlaneseq
          %v3292 = vshrl.u32 %v3291, 7
          %v3293 = vsub.s32 %v3290, %v3292
          %v3294 = vrot.slane %v3266, %v3293
          %v3295 = vcombine.high %v3273, %v3273
          %v3296 = vcombine.high %v3280, %v3280
          %v3297 = vcombine.high %v3287, %v3287
          %v3298 = vcombine.high %v3294, %v3294
          %3307 = vst [vmem:[#allocation6 + $0x6] sm:$0x1] %v3273
          %3308 = vst [vmem:[#allocation6 + $0xe] sm:$0x1] %v3287
          %3309 = vst [vmem:[#allocation6 + $0x16] sm:$0x1] %v3295
          %3310 = vst [vmem:[#allocation6 + $0x1e] sm:$0x1] %v3297
          %3311 = vst [vmem:[#allocation6 + $0x26] sm:$0x1] %v3280
          %3312 = vst [vmem:[#allocation6 + $0x2e] sm:$0x1] %v3294
          %3313 = vst [vmem:[#allocation6 + $0x36] sm:$0x1] %v3296
          %3314 = vst [vmem:[#allocation6 + $0x3e] sm:$0x1] %v3298
          %vm3315 = vcmp.gt.f32.partialorder %v3182, 0.999999
          %vm3316 = vcmp.lt.f32.partialorder %v3103, 1.000001
          %v3317 = vsub.f32 1.0, %v3103
          %v3318 = vmul.f32 %v3317, 1.442695
          %v3319 = vpow.pop %v3318
          %v3320 = vsub.f32 %v3103, 1.0
          %v3321 = vmul.f32 %v3320, 1.442695
          %v3322 = vpow.pop %v3321
          %v3324 = vrot.slane %v3319, 1
          %v3325 = vrot.slane %v3319, 2
          %v3326 = vrot.slane %v3319, 3
          %v3327 = vrot.slane %v3319, 4
          %v3328 = vrot.slane %v3319, 5
          %v3329 = vrot.slane %v3319, 6
          %v3330 = vrot.slane %v3319, 7
          %v3339 = vmul.f32 %v1250, %v3324
          %v3340 = vmul.f32 %v1251, %v3325
          %v3341 = vmul.f32 %v1252, %v3326
          %v3342 = vmul.f32 %v1253, %v3327
          %v3343 = vmul.f32 %v1254, %v3328
          %v3344 = vmul.f32 %v1255, %v3329
          %v3345 = vmul.f32 %v1256, %v3330
          %v3346 = vmul.f32 %v1257, %v3319
          %v3347 = vmul.f32 %v3322, 0.005
          %v3349 = vrot.slane %v3347, 1
          %v3350 = vrot.slane %v3347, 2
          %v3351 = vrot.slane %v3347, 3
          %v3352 = vrot.slane %v3347, 4
          %v3353 = vrot.slane %v3347, 5
          %v3354 = vrot.slane %v3347, 6
          %v3355 = vrot.slane %v3347, 7
          %v3364 = vsub.f32 %v3339, %v3349
          %v3365 = vsub.f32 %v3340, %v3350
          %v3366 = vsub.f32 %v3341, %v3351
          %v3367 = vsub.f32 %v3342, %v3352
          %v3368 = vsub.f32 %v3343, %v3353
          %v3369 = vsub.f32 %v3344, %v3354
          %v3370 = vsub.f32 %v3345, %v3355
          %v3371 = vsub.f32 %v3346, %v3347
          %v3380 = vrot.slane %v3364, 7
          %v3381 = vrot.slane %v3365, 6
          %v3382 = vsel %vm1316, %v3381, %v3380
          %v3383 = vrot.slane %v3366, 5
          %v3384 = vsel %vm1319, %v3383, %v3382
          %v3385 = vrot.slane %v3367, 4
          %v3386 = vsel %vm1322, %v3385, %v3384
          %v3387 = vrot.slane %v3368, 3
          %v3388 = vsel %vm1325, %v3387, %v3386
          %v3389 = vrot.slane %v3369, 2
          %v3390 = vsel %vm1328, %v3389, %v3388
          %v3391 = vrot.slane %v3370, 1
          %v3392 = vsel %vm1331, %v3391, %v3390
          %v3393 = vsel %vm1334, %v3371, %v3392
          %v3395 = vadd.f32 %v3103, %v3393
          %v3396 = vsel %vm3315, %v3395, %v3103
          %v3397 = vmax.f32 %v3396, 1.0
          %v3398 = vmul.f32 %v3178, 0.4
          %v3399 = vsel %vm3316, %v3398, %v3178
          %v3400 = vmul.f32 %v3179, 0.998
          %v3401 = vsel %vm3316, %v3400, %v3179
          %v3402 = vsub.f32 1.0, %v3182
          %v3403 = vadd.f32 %v3402, 0.01
          %v3404 = vrcp.pop %v3403
          %v3405 = vmul.f32 0.22, %v3404
          %v3407 = vrot.slane %v3405, 1
          %v3408 = vrot.slane %v3405, 2
          %v3409 = vrot.slane %v3405, 3
          %v3410 = vrot.slane %v3405, 4
          %v3411 = vrot.slane %v3405, 5
          %v3412 = vrot.slane %v3405, 6
          %v3413 = vrot.slane %v3405, 7
          %v3422 = vmul.f32 %v1231, %v3407
          %v3423 = vmul.f32 %v1232, %v3408
          %v3424 = vmul.f32 %v1233, %v3409
          %v3425 = vmul.f32 %v1234, %v3410
          %v3426 = vmul.f32 %v1235, %v3411
          %v3427 = vmul.f32 %v1236, %v3412
          %v3428 = vmul.f32 %v1237, %v3413
          %v3429 = vmul.f32 %v1238, %v3405
          %v3430 = vsub.f32 1.0, %v3399
          %v3431 = vsub.f32 %v3430, %v3401
          %v3432 = vmax.f32 %v3422, 0.0
          %v3433 = vmax.f32 %v3423, 0.0
          %v3434 = vmax.f32 %v3424, 0.0
          %v3435 = vmax.f32 %v3425, 0.0
          %v3436 = vmax.f32 %v3426, 0.0
          %v3437 = vmax.f32 %v3427, 0.0
          %v3438 = vmax.f32 %v3428, 0.0
          %v3439 = vmax.f32 %v3429, 0.0
          %v3448 = vrot.slane %v3432, 7
          %v3449 = vrot.slane %v3433, 6
          %v3450 = vsel %vm1316, %v3449, %v3448
          %v3451 = vrot.slane %v3434, 5
          %v3452 = vsel %vm1319, %v3451, %v3450
          %v3453 = vrot.slane %v3435, 4
          %v3454 = vsel %vm1322, %v3453, %v3452
          %v3455 = vrot.slane %v3436, 3
          %v3456 = vsel %vm1325, %v3455, %v3454
          %v3457 = vrot.slane %v3437, 2
          %v3458 = vsel %vm1328, %v3457, %v3456
          %v3459 = vrot.slane %v3438, 1
          %v3460 = vsel %vm1331, %v3459, %v3458
          %v3461 = vsel %vm1334, %v3439, %v3460
          %v3463 = vmin.f32 %v3431, %v3461
          %v3464 = vadd.f32 %v3399, %v3463
          %v3465 = vsel %vm3316, %v3464, %v3178
          %v3466 = vmul.f32 %v3465, 0.01
          %v3467 = vsub.f32 1.0, %v3401
          %v3468 = vmin.f32 %v3467, %v3465
          %v3469 = vmax.f32 %v3466, 0.0
          %v3470 = vmin.f32 %v3468, %v3469
          %v3471 = vsel %vm3316, %v3470, 0.0
          %v3472 = vsub.f32 %v3465, %v3471
          %v3473 = vadd.f32 %v3401, %v3471
          %v3474 = vadd.f32 %v3473, %v3472
          %v3475 = vmax.f32 %v3474, 0.0
          %v3476 = vmin.f32 %v3475, 1.0
          %v3478 = vcombine.high %v3476, %v3476
          %v3480 = vunpack.c.l.s4 1966171168
          %v3481 = vunpack.c.0.s8 %v3480
          %v3482 = vlaneseq
          %v3483 = vshrl.u32 %v3482, 7
          %v3484 = vsub.s32 %v3481, %v3483
          %v3485 = vrot.slane %v3476, %v3484
          %v3487 = vunpack.c.l.s4 1966171168
          %v3488 = vunpack.c.0.s8 %v3487
          %v3489 = vlaneseq
          %v3490 = vshrl.u32 %v3489, 7
          %v3491 = vsub.s32 %v3488, %v3490
          %v3492 = vrot.slane %v3478, %v3491
          %v3493 = vcombine.high %v3485, %v3485
          %v3494 = vcombine.high %v3492, %v3492
          %v3496 = vunpack.c.l.s4 1966171168
          %v3497 = vunpack.c.0.s8 %v3496
          %v3498 = vlaneseq
          %v3499 = vshrl.u32 %v3498, 7
          %v3500 = vsub.s32 %v3497, %v3499
          %v3501 = vrot.slane %v3485, %v3500
          %v3503 = vunpack.c.l.s4 1966171168
          %v3504 = vunpack.c.0.s8 %v3503
          %v3505 = vlaneseq
          %v3506 = vshrl.u32 %v3505, 7
          %v3507 = vsub.s32 %v3504, %v3506
          %v3508 = vrot.slane %v3492, %v3507
          %v3510 = vunpack.c.l.s4 1966171168
          %v3511 = vunpack.c.0.s8 %v3510
          %v3512 = vlaneseq
          %v3513 = vshrl.u32 %v3512, 7
          %v3514 = vsub.s32 %v3511, %v3513
          %v3515 = vrot.slane %v3493, %v3514
          %v3517 = vunpack.c.l.s4 1966171168
          %v3518 = vunpack.c.0.s8 %v3517
          %v3519 = vlaneseq
          %v3520 = vshrl.u32 %v3519, 7
          %v3521 = vsub.s32 %v3518, %v3520
          %v3522 = vrot.slane %v3494, %v3521
          %v3523 = vcombine.high %v3501, %v3501
          %v3524 = vcombine.high %v3508, %v3508
          %v3525 = vcombine.high %v3515, %v3515
          %v3526 = vcombine.high %v3522, %v3522
          %3535 = vst [vmem:[#allocation5 + $0x7] sm:$0x1] %v3501
          %3536 = vst [vmem:[#allocation5 + $0xf] sm:$0x1] %v3515
          %3537 = vst [vmem:[#allocation5 + $0x17] sm:$0x1] %v3523
          %3538 = vst [vmem:[#allocation5 + $0x1f] sm:$0x1] %v3525
          %3539 = vst [vmem:[#allocation5 + $0x27] sm:$0x1] %v3508
          %3540 = vst [vmem:[#allocation5 + $0x2f] sm:$0x1] %v3522
          %3541 = vst [vmem:[#allocation5 + $0x37] sm:$0x1] %v3524
          %3542 = vst [vmem:[#allocation5 + $0x3f] sm:$0x1] %v3526
          %v3544 = vcombine.high %v3397, %v3397
          %v3546 = vunpack.c.l.s4 1966171168
          %v3547 = vunpack.c.0.s8 %v3546
          %v3548 = vlaneseq
          %v3549 = vshrl.u32 %v3548, 7
          %v3550 = vsub.s32 %v3547, %v3549
          %v3551 = vrot.slane %v3397, %v3550
          %v3553 = vunpack.c.l.s4 1966171168
          %v3554 = vunpack.c.0.s8 %v3553
          %v3555 = vlaneseq
          %v3556 = vshrl.u32 %v3555, 7
          %v3557 = vsub.s32 %v3554, %v3556
          %v3558 = vrot.slane %v3544, %v3557
          %v3559 = vcombine.high %v3551, %v3551
          %v3560 = vcombine.high %v3558, %v3558
          %v3562 = vunpack.c.l.s4 1966171168
          %v3563 = vunpack.c.0.s8 %v3562
          %v3564 = vlaneseq
          %v3565 = vshrl.u32 %v3564, 7
          %v3566 = vsub.s32 %v3563, %v3565
          %v3567 = vrot.slane %v3551, %v3566
          %v3569 = vunpack.c.l.s4 1966171168
          %v3570 = vunpack.c.0.s8 %v3569
          %v3571 = vlaneseq
          %v3572 = vshrl.u32 %v3571, 7
          %v3573 = vsub.s32 %v3570, %v3572
          %v3574 = vrot.slane %v3558, %v3573
          %v3576 = vunpack.c.l.s4 1966171168
          %v3577 = vunpack.c.0.s8 %v3576
          %v3578 = vlaneseq
          %v3579 = vshrl.u32 %v3578, 7
          %v3580 = vsub.s32 %v3577, %v3579
          %v3581 = vrot.slane %v3559, %v3580
          %v3583 = vunpack.c.l.s4 1966171168
          %v3584 = vunpack.c.0.s8 %v3583
          %v3585 = vlaneseq
          %v3586 = vshrl.u32 %v3585, 7
          %v3587 = vsub.s32 %v3584, %v3586
          %v3588 = vrot.slane %v3560, %v3587
          %v3589 = vcombine.high %v3567, %v3567
          %v3590 = vcombine.high %v3574, %v3574
          %v3591 = vcombine.high %v3581, %v3581
          %v3592 = vcombine.high %v3588, %v3588
          %3601 = vst [vmem:[#allocation6 + $0x7] sm:$0x1] %v3567
          %3602 = vst [vmem:[#allocation6 + $0xf] sm:$0x1] %v3581
          %3603 = vst [vmem:[#allocation6 + $0x17] sm:$0x1] %v3589
          %3604 = vst [vmem:[#allocation6 + $0x1f] sm:$0x1] %v3591
          %3605 = vst [vmem:[#allocation6 + $0x27] sm:$0x1] %v3574
          %3606 = vst [vmem:[#allocation6 + $0x2f] sm:$0x1] %v3588
          %3607 = vst [vmem:[#allocation6 + $0x37] sm:$0x1] %v3590
          %3608 = vst [vmem:[#allocation6 + $0x3f] sm:$0x1] %v3592
          %v3609 = vld [vmem:[#allocation5] sm:$0xff]
          %v3610 = vld [vmem:[#allocation5 + $0x8] sm:$0xff]
          %v3611 = vld [vmem:[#allocation5 + $0x10] sm:$0xff]
          %v3612 = vld [vmem:[#allocation5 + $0x18] sm:$0xff]
          %v3613 = vld [vmem:[#allocation5 + $0x20] sm:$0xff]
          %v3614 = vld [vmem:[#allocation5 + $0x28] sm:$0xff]
          %v3615 = vld [vmem:[#allocation5 + $0x30] sm:$0xff]
          %v3616 = vld [vmem:[#allocation5 + $0x38] sm:$0xff]
          %v3617 = vld [vmem:[#allocation6] sm:$0xff]
          %v3618 = vld [vmem:[#allocation6 + $0x8] sm:$0xff]
          %v3619 = vld [vmem:[#allocation6 + $0x10] sm:$0xff]
          %v3620 = vld [vmem:[#allocation6 + $0x18] sm:$0xff]
          %v3621 = vld [vmem:[#allocation6 + $0x20] sm:$0xff]
          %v3622 = vld [vmem:[#allocation6 + $0x28] sm:$0xff]
          %v3623 = vld [vmem:[#allocation6 + $0x30] sm:$0xff]
          %v3624 = vld [vmem:[#allocation6 + $0x38] sm:$0xff]
          %v3625 = vmul.f32 %v3609, 10000000.0
          %v3626 = vmul.f32 %v3610, 10000000.0
          %v3627 = vmul.f32 %v3611, 10000000.0
          %v3628 = vmul.f32 %v3612, 10000000.0
          %v3629 = vmul.f32 %v3613, 10000000.0
          %v3630 = vmul.f32 %v3614, 10000000.0
          %v3631 = vmul.f32 %v3615, 10000000.0
          %v3632 = vmul.f32 %v3616, 10000000.0
          %v3633 = vmul.f32 %v3617, %v3617
          %v3634 = vmul.f32 %v3618, %v3618
          %v3635 = vmul.f32 %v3619, %v3619
          %v3636 = vmul.f32 %v3620, %v3620
          %v3637 = vmul.f32 %v3621, %v3621
          %v3638 = vmul.f32 %v3622, %v3622
          %v3639 = vmul.f32 %v3623, %v3623
          %v3640 = vmul.f32 %v3624, %v3624
          %v3641 = vrcp.pop %v3633
          %v3642 = vmul.f32 %v3625, %v3641
          %v3643 = vrcp.pop %v3634
          %v3644 = vmul.f32 %v3626, %v3643
          %v3645 = vrcp.pop %v3635
          %v3646 = vmul.f32 %v3627, %v3645
          %v3647 = vrcp.pop %v3636
          %v3648 = vmul.f32 %v3628, %v3647
          %v3649 = vrcp.pop %v3637
          %v3650 = vmul.f32 %v3629, %v3649
          %v3651 = vrcp.pop %v3638
          %v3652 = vmul.f32 %v3630, %v3651
          %v3653 = vrcp.pop %v3639
          %v3654 = vmul.f32 %v3631, %v3653
          %v3655 = vrcp.pop %v3640
          %v3656 = vmul.f32 %v3632, %v3655
          %v3657 = vsub.f32 1.0, %v3609
          %v3658 = vsub.f32 1.0, %v3610
          %v3659 = vsub.f32 1.0, %v3611
          %v3660 = vsub.f32 1.0, %v3612
          %v3661 = vsub.f32 1.0, %v3613
          %v3662 = vsub.f32 1.0, %v3614
          %v3663 = vsub.f32 1.0, %v3615
          %v3664 = vsub.f32 1.0, %v3616
          %v3665 = vmul.f32 %v3657, 5.0
          %v3666 = vmul.f32 %v3658, 5.0
          %v3667 = vmul.f32 %v3659, 5.0
          %v3668 = vmul.f32 %v3660, 5.0
          %v3669 = vmul.f32 %v3661, 5.0
          %v3670 = vmul.f32 %v3662, 5.0
          %v3671 = vmul.f32 %v3663, 5.0
          %v3672 = vmul.f32 %v3664, 5.0
          %v3673 = vmul.f32 %v3665, 1.442695
          %v3674 = vpow.pop %v3673
          %v3675 = vmul.f32 %v3666, 1.442695
          %v3676 = vpow.pop %v3675
          %v3677 = vmul.f32 %v3667, 1.442695
          %v3678 = vpow.pop %v3677
          %v3679 = vmul.f32 %v3668, 1.442695
          %v3680 = vpow.pop %v3679
          %v3681 = vmul.f32 %v3669, 1.442695
          %v3682 = vpow.pop %v3681
          %v3683 = vmul.f32 %v3670, 1.442695
          %v3684 = vpow.pop %v3683
          %v3685 = vmul.f32 %v3671, 1.442695
          %v3686 = vpow.pop %v3685
          %v3687 = vmul.f32 %v3672, 1.442695
          %v3688 = vpow.pop %v3687
          %v3689 = vsub.f32 %v3674, 1.0
          %v3690 = vsub.f32 %v3676, 1.0
          %v3691 = vsub.f32 %v3678, 1.0
          %v3692 = vsub.f32 %v3680, 1.0
          %v3693 = vsub.f32 %v3682, 1.0
          %v3694 = vsub.f32 %v3684, 1.0
          %v3695 = vsub.f32 %v3686, 1.0
          %v3696 = vsub.f32 %v3688, 1.0
          %v3697 = vmul.f32 %v3689, 6.783655e+09
          %v3698 = vmul.f32 %v3690, 6.783655e+09
          %v3699 = vmul.f32 %v3691, 6.783655e+09
          %v3700 = vmul.f32 %v3692, 6.783655e+09
          %v3701 = vmul.f32 %v3693, 6.783655e+09
          %v3702 = vmul.f32 %v3694, 6.783655e+09
          %v3703 = vmul.f32 %v3695, 6.783655e+09
          %v3704 = vmul.f32 %v3696, 6.783655e+09
          %v3705 = vadd.f32 %v3642, %v3697
          %v3706 = vadd.f32 %v3644, %v3698
          %v3707 = vadd.f32 %v3646, %v3699
          %v3708 = vadd.f32 %v3648, %v3700
          %v3709 = vadd.f32 %v3650, %v3701
          %v3710 = vadd.f32 %v3652, %v3702
          %v3711 = vadd.f32 %v3654, %v3703
          %v3712 = vadd.f32 %v3656, %v3704
          %v3713 = vrcp.pop %v3705
          %v3714 = vmul.f32 %v1223, %v3713
          %v3715 = vrcp.pop %v3706
          %v3716 = vmul.f32 %v1224, %v3715
          %v3717 = vrcp.pop %v3707
          %v3718 = vmul.f32 %v1225, %v3717
          %v3719 = vrcp.pop %v3708
          %v3720 = vmul.f32 %v1226, %v3719
          %v3721 = vrcp.pop %v3709
          %v3722 = vmul.f32 %v1227, %v3721
          %v3723 = vrcp.pop %v3710
          %v3724 = vmul.f32 %v1228, %v3723
          %v3725 = vrcp.pop %v3711
          %v3726 = vmul.f32 %v1229, %v3725
          %v3727 = vrcp.pop %v3712
          %v3728 = vmul.f32 %v1230, %v3727
          %s3729 = scalar_lea.vmem %s1197, %s1221 [#allocation8]
          %3730 = vst [vmem:[%s3729] sm:$0xff] %v3714
          %3731 = vst [vmem:[%s3729 + $0x100] sm:$0xff] %v3716
          %3732 = vst [vmem:[%s3729 + $0x200] sm:$0xff] %v3718
          %3733 = vst [vmem:[%s3729 + $0x300] sm:$0xff] %v3720
          %3734 = vst [vmem:[%s3729 + $0x400] sm:$0xff] %v3722
          %3735 = vst [vmem:[%s3729 + $0x500] sm:$0xff] %v3724
          %3736 = vst [vmem:[%s3729 + $0x600] sm:$0xff] %v3726
          %3737 = vst [vmem:[%s3729 + $0x700] sm:$0xff] %v3728
        $region71: #{memristor_forward.1} parent=57 // loop_footer
          %s1217 = sadd.s32 1, %s1213
        $region72: #{memristor_forward.1} parent=57 // loop_footer_branch
          %1212 = sbr.rel target = $region68
        $region73: #{memristor_forward.1} parent=57 // loop_exit
          _
        %3738 = vst [vmem:[#allocation2] sm:$0xff] %v1218
        %3739 = vst [vmem:[#allocation3] sm:$0xff] %v1219
        %3740 = vst [vmem:[#allocation4] sm:$0xff] %v1220
        %s3741 = sand.u32 %s73, 1
        %s3742 = sand.u32 %s73, 1
        %s3743 = smul.addr %s3742, 2048
        %s3744 = scalar_lea.vmem [#allocation8], %s3743
        // Predicated region
        $region74: #{memristor_forward.1} parent=57 // pred_check
          %p3745 = pneg %p83
        $region75: #{memristor_forward.1} parent=57 // pred_check_branch
          %3747 = sbr.rel (%p3745) target = $region77
        $region76: #{memristor_forward.1} parent=57 // pred_region
          %s3748 = smul.u32 8, %s17
          %s3749 = smul.u32 32, %s19
          %s3750 = sadd.s32 %s18, %s3749
          %s3751 = smul.addr %s3748, 64
          %s3752 = sadd.s32 %s3750, %s3751
          %s3753 = smul.addr %s3752, 8
          %s3754 = scalar_lea.vmem %s1, %s3753
          // Predicated region
          $region78: #{memristor_forward.1} parent=76 // pred_check
            _
          $region79: #{memristor_forward.1} parent=76 // pred_check_branch
            %3756 = sbr.rel (0) target = $region81
          $region80: #{memristor_forward.1} parent=76 // pred_region
            // Predicated region
            $region82: #{memristor_forward.1} parent=80 // pred_check
              _
            $region83: #{memristor_forward.1} parent=80 // pred_check_branch
              %3758 = sbr.rel (0) target = $region85
            $region84: #{memristor_forward.1} parent=80 // pred_region
              // Predicated region
              $region97: #{memristor_forward.1} parent=84 // pred_check
                _
              $region98: #{memristor_forward.1} parent=84 // pred_check_branch
                %4284 = sbr.rel (0) target = $region100
              $region99: #{memristor_forward.1} parent=84 // pred_region
                loop: start=0, step=1, limit=1
                $region101: #{memristor_forward.1} parent=99 // loop_pre_header
                  _
                $region102: #{memristor_forward.1} parent=99 // loop_header
                  %s4286 = sphi 0, %s4290
                  %p4287 = scmp.ge.s32.totalorder %s4286, 1
                  %s4291 = sphi %s3744, %s3744
                  %s4292 = sphi %s3754, %s3754
                $region103: #{memristor_forward.1} parent=99 // loop_header_branch
                  %4289 = sbr.rel (%p4287) target = $region107
                $region104: #{memristor_forward.1} parent=99 // loop_body
                  %v4293 = vld [vmem:[%s4291] sm:$0xff]
                  %4294 = vst [vmem:[%s4292] sm:$0xff] %v4293
                  %v4295 = vld [vmem:[%s4291 + $0x8] sm:$0xff]
                  %4296 = vst [vmem:[%s4292 + $0x8] sm:$0xff] %v4295
                  %v4297 = vld [vmem:[%s4291 + $0x10] sm:$0xff]
                  %4298 = vst [vmem:[%s4292 + $0x10] sm:$0xff] %v4297
                  %v4299 = vld [vmem:[%s4291 + $0x18] sm:$0xff]
                  %4300 = vst [vmem:[%s4292 + $0x18] sm:$0xff] %v4299
                  %v4301 = vld [vmem:[%s4291 + $0x20] sm:$0xff]
                  %4302 = vst [vmem:[%s4292 + $0x20] sm:$0xff] %v4301
                  %v4303 = vld [vmem:[%s4291 + $0x28] sm:$0xff]
                  %4304 = vst [vmem:[%s4292 + $0x28] sm:$0xff] %v4303
                  %v4305 = vld [vmem:[%s4291 + $0x30] sm:$0xff]
                  %4306 = vst [vmem:[%s4292 + $0x30] sm:$0xff] %v4305
                  %v4307 = vld [vmem:[%s4291 + $0x38] sm:$0xff]
                  %4308 = vst [vmem:[%s4292 + $0x38] sm:$0xff] %v4307
                  %v4309 = vld [vmem:[%s4291 + $0x40] sm:$0xff]
                  %4310 = vst [vmem:[%s4292 + $0x40] sm:$0xff] %v4309
                  %v4311 = vld [vmem:[%s4291 + $0x48] sm:$0xff]
                  %4312 = vst [vmem:[%s4292 + $0x48] sm:$0xff] %v4311
                  %v4313 = vld [vmem:[%s4291 + $0x50] sm:$0xff]
                  %4314 = vst [vmem:[%s4292 + $0x50] sm:$0xff] %v4313
                  %v4315 = vld [vmem:[%s4291 + $0x58] sm:$0xff]
                  %4316 = vst [vmem:[%s4292 + $0x58] sm:$0xff] %v4315
                  %v4317 = vld [vmem:[%s4291 + $0x60] sm:$0xff]
                  %4318 = vst [vmem:[%s4292 + $0x60] sm:$0xff] %v4317
                  %v4319 = vld [vmem:[%s4291 + $0x68] sm:$0xff]
                  %4320 = vst [vmem:[%s4292 + $0x68] sm:$0xff] %v4319
                  %v4321 = vld [vmem:[%s4291 + $0x70] sm:$0xff]
                  %4322 = vst [vmem:[%s4292 + $0x70] sm:$0xff] %v4321
                  %v4323 = vld [vmem:[%s4291 + $0x78] sm:$0xff]
                  %4324 = vst [vmem:[%s4292 + $0x78] sm:$0xff] %v4323
                  %v4325 = vld [vmem:[%s4291 + $0x80] sm:$0xff]
                  %4326 = vst [vmem:[%s4292 + $0x80] sm:$0xff] %v4325
                  %v4327 = vld [vmem:[%s4291 + $0x88] sm:$0xff]
                  %4328 = vst [vmem:[%s4292 + $0x88] sm:$0xff] %v4327
                  %v4329 = vld [vmem:[%s4291 + $0x90] sm:$0xff]
                  %4330 = vst [vmem:[%s4292 + $0x90] sm:$0xff] %v4329
                  %v4331 = vld [vmem:[%s4291 + $0x98] sm:$0xff]
                  %4332 = vst [vmem:[%s4292 + $0x98] sm:$0xff] %v4331
                  %v4333 = vld [vmem:[%s4291 + $0xa0] sm:$0xff]
                  %4334 = vst [vmem:[%s4292 + $0xa0] sm:$0xff] %v4333
                  %v4335 = vld [vmem:[%s4291 + $0xa8] sm:$0xff]
                  %4336 = vst [vmem:[%s4292 + $0xa8] sm:$0xff] %v4335
                  %v4337 = vld [vmem:[%s4291 + $0xb0] sm:$0xff]
                  %4338 = vst [vmem:[%s4292 + $0xb0] sm:$0xff] %v4337
                  %v4339 = vld [vmem:[%s4291 + $0xb8] sm:$0xff]
                  %4340 = vst [vmem:[%s4292 + $0xb8] sm:$0xff] %v4339
                  %v4341 = vld [vmem:[%s4291 + $0xc0] sm:$0xff]
                  %4342 = vst [vmem:[%s4292 + $0xc0] sm:$0xff] %v4341
                  %v4343 = vld [vmem:[%s4291 + $0xc8] sm:$0xff]
                  %4344 = vst [vmem:[%s4292 + $0xc8] sm:$0xff] %v4343
                  %v4345 = vld [vmem:[%s4291 + $0xd0] sm:$0xff]
                  %4346 = vst [vmem:[%s4292 + $0xd0] sm:$0xff] %v4345
                  %v4347 = vld [vmem:[%s4291 + $0xd8] sm:$0xff]
                  %4348 = vst [vmem:[%s4292 + $0xd8] sm:$0xff] %v4347
                  %v4349 = vld [vmem:[%s4291 + $0xe0] sm:$0xff]
                  %4350 = vst [vmem:[%s4292 + $0xe0] sm:$0xff] %v4349
                  %v4351 = vld [vmem:[%s4291 + $0xe8] sm:$0xff]
                  %4352 = vst [vmem:[%s4292 + $0xe8] sm:$0xff] %v4351
                  %v4353 = vld [vmem:[%s4291 + $0xf0] sm:$0xff]
                  %4354 = vst [vmem:[%s4292 + $0xf0] sm:$0xff] %v4353
                  %v4355 = vld [vmem:[%s4291 + $0xf8] sm:$0xff]
                  %4356 = vst [vmem:[%s4292 + $0xf8] sm:$0xff] %v4355
                  %v4357 = vld [vmem:[%s4291 + $0x100] sm:$0xff]
                  %4358 = vst [vmem:[%s4292 + $0x200] sm:$0xff] %v4357
                  %v4359 = vld [vmem:[%s4291 + $0x108] sm:$0xff]
                  %4360 = vst [vmem:[%s4292 + $0x208] sm:$0xff] %v4359
                  %v4361 = vld [vmem:[%s4291 + $0x110] sm:$0xff]
                  %4362 = vst [vmem:[%s4292 + $0x210] sm:$0xff] %v4361
                  %v4363 = vld [vmem:[%s4291 + $0x118] sm:$0xff]
                  %4364 = vst [vmem:[%s4292 + $0x218] sm:$0xff] %v4363
                  %v4365 = vld [vmem:[%s4291 + $0x120] sm:$0xff]
                  %4366 = vst [vmem:[%s4292 + $0x220] sm:$0xff] %v4365
                  %v4367 = vld [vmem:[%s4291 + $0x128] sm:$0xff]
                  %4368 = vst [vmem:[%s4292 + $0x228] sm:$0xff] %v4367
                  %v4369 = vld [vmem:[%s4291 + $0x130] sm:$0xff]
                  %4370 = vst [vmem:[%s4292 + $0x230] sm:$0xff] %v4369
                  %v4371 = vld [vmem:[%s4291 + $0x138] sm:$0xff]
                  %4372 = vst [vmem:[%s4292 + $0x238] sm:$0xff] %v4371
                  %v4373 = vld [vmem:[%s4291 + $0x140] sm:$0xff]
                  %4374 = vst [vmem:[%s4292 + $0x240] sm:$0xff] %v4373
                  %v4375 = vld [vmem:[%s4291 + $0x148] sm:$0xff]
                  %4376 = vst [vmem:[%s4292 + $0x248] sm:$0xff] %v4375
                  %v4377 = vld [vmem:[%s4291 + $0x150] sm:$0xff]
                  %4378 = vst [vmem:[%s4292 + $0x250] sm:$0xff] %v4377
                  %v4379 = vld [vmem:[%s4291 + $0x158] sm:$0xff]
                  %4380 = vst [vmem:[%s4292 + $0x258] sm:$0xff] %v4379
                  %v4381 = vld [vmem:[%s4291 + $0x160] sm:$0xff]
                  %4382 = vst [vmem:[%s4292 + $0x260] sm:$0xff] %v4381
                  %v4383 = vld [vmem:[%s4291 + $0x168] sm:$0xff]
                  %4384 = vst [vmem:[%s4292 + $0x268] sm:$0xff] %v4383
                  %v4385 = vld [vmem:[%s4291 + $0x170] sm:$0xff]
                  %4386 = vst [vmem:[%s4292 + $0x270] sm:$0xff] %v4385
                  %v4387 = vld [vmem:[%s4291 + $0x178] sm:$0xff]
                  %4388 = vst [vmem:[%s4292 + $0x278] sm:$0xff] %v4387
                  %v4389 = vld [vmem:[%s4291 + $0x180] sm:$0xff]
                  %4390 = vst [vmem:[%s4292 + $0x280] sm:$0xff] %v4389
                  %v4391 = vld [vmem:[%s4291 + $0x188] sm:$0xff]
                  %4392 = vst [vmem:[%s4292 + $0x288] sm:$0xff] %v4391
                  %v4393 = vld [vmem:[%s4291 + $0x190] sm:$0xff]
                  %4394 = vst [vmem:[%s4292 + $0x290] sm:$0xff] %v4393
                  %v4395 = vld [vmem:[%s4291 + $0x198] sm:$0xff]
                  %4396 = vst [vmem:[%s4292 + $0x298] sm:$0xff] %v4395
                  %v4397 = vld [vmem:[%s4291 + $0x1a0] sm:$0xff]
                  %4398 = vst [vmem:[%s4292 + $0x2a0] sm:$0xff] %v4397
                  %v4399 = vld [vmem:[%s4291 + $0x1a8] sm:$0xff]
                  %4400 = vst [vmem:[%s4292 + $0x2a8] sm:$0xff] %v4399
                  %v4401 = vld [vmem:[%s4291 + $0x1b0] sm:$0xff]
                  %4402 = vst [vmem:[%s4292 + $0x2b0] sm:$0xff] %v4401
                  %v4403 = vld [vmem:[%s4291 + $0x1b8] sm:$0xff]
                  %4404 = vst [vmem:[%s4292 + $0x2b8] sm:$0xff] %v4403
                  %v4405 = vld [vmem:[%s4291 + $0x1c0] sm:$0xff]
                  %4406 = vst [vmem:[%s4292 + $0x2c0] sm:$0xff] %v4405
                  %v4407 = vld [vmem:[%s4291 + $0x1c8] sm:$0xff]
                  %4408 = vst [vmem:[%s4292 + $0x2c8] sm:$0xff] %v4407
                  %v4409 = vld [vmem:[%s4291 + $0x1d0] sm:$0xff]
                  %4410 = vst [vmem:[%s4292 + $0x2d0] sm:$0xff] %v4409
                  %v4411 = vld [vmem:[%s4291 + $0x1d8] sm:$0xff]
                  %4412 = vst [vmem:[%s4292 + $0x2d8] sm:$0xff] %v4411
                  %v4413 = vld [vmem:[%s4291 + $0x1e0] sm:$0xff]
                  %4414 = vst [vmem:[%s4292 + $0x2e0] sm:$0xff] %v4413
                  %v4415 = vld [vmem:[%s4291 + $0x1e8] sm:$0xff]
                  %4416 = vst [vmem:[%s4292 + $0x2e8] sm:$0xff] %v4415
                  %v4417 = vld [vmem:[%s4291 + $0x1f0] sm:$0xff]
                  %4418 = vst [vmem:[%s4292 + $0x2f0] sm:$0xff] %v4417
                  %v4419 = vld [vmem:[%s4291 + $0x1f8] sm:$0xff]
                  %4420 = vst [vmem:[%s4292 + $0x2f8] sm:$0xff] %v4419
                  %v4421 = vld [vmem:[%s4291 + $0x200] sm:$0xff]
                  %4422 = vst [vmem:[%s4292 + $0x400] sm:$0xff] %v4421
                  %v4423 = vld [vmem:[%s4291 + $0x208] sm:$0xff]
                  %4424 = vst [vmem:[%s4292 + $0x408] sm:$0xff] %v4423
                  %v4425 = vld [vmem:[%s4291 + $0x210] sm:$0xff]
                  %4426 = vst [vmem:[%s4292 + $0x410] sm:$0xff] %v4425
                  %v4427 = vld [vmem:[%s4291 + $0x218] sm:$0xff]
                  %4428 = vst [vmem:[%s4292 + $0x418] sm:$0xff] %v4427
                  %v4429 = vld [vmem:[%s4291 + $0x220] sm:$0xff]
                  %4430 = vst [vmem:[%s4292 + $0x420] sm:$0xff] %v4429
                  %v4431 = vld [vmem:[%s4291 + $0x228] sm:$0xff]
                  %4432 = vst [vmem:[%s4292 + $0x428] sm:$0xff] %v4431
                  %v4433 = vld [vmem:[%s4291 + $0x230] sm:$0xff]
                  %4434 = vst [vmem:[%s4292 + $0x430] sm:$0xff] %v4433
                  %v4435 = vld [vmem:[%s4291 + $0x238] sm:$0xff]
                  %4436 = vst [vmem:[%s4292 + $0x438] sm:$0xff] %v4435
                  %v4437 = vld [vmem:[%s4291 + $0x240] sm:$0xff]
                  %4438 = vst [vmem:[%s4292 + $0x440] sm:$0xff] %v4437
                  %v4439 = vld [vmem:[%s4291 + $0x248] sm:$0xff]
                  %4440 = vst [vmem:[%s4292 + $0x448] sm:$0xff] %v4439
                  %v4441 = vld [vmem:[%s4291 + $0x250] sm:$0xff]
                  %4442 = vst [vmem:[%s4292 + $0x450] sm:$0xff] %v4441
                  %v4443 = vld [vmem:[%s4291 + $0x258] sm:$0xff]
                  %4444 = vst [vmem:[%s4292 + $0x458] sm:$0xff] %v4443
                  %v4445 = vld [vmem:[%s4291 + $0x260] sm:$0xff]
                  %4446 = vst [vmem:[%s4292 + $0x460] sm:$0xff] %v4445
                  %v4447 = vld [vmem:[%s4291 + $0x268] sm:$0xff]
                  %4448 = vst [vmem:[%s4292 + $0x468] sm:$0xff] %v4447
                  %v4449 = vld [vmem:[%s4291 + $0x270] sm:$0xff]
                  %4450 = vst [vmem:[%s4292 + $0x470] sm:$0xff] %v4449
                  %v4451 = vld [vmem:[%s4291 + $0x278] sm:$0xff]
                  %4452 = vst [vmem:[%s4292 + $0x478] sm:$0xff] %v4451
                  %v4453 = vld [vmem:[%s4291 + $0x280] sm:$0xff]
                  %4454 = vst [vmem:[%s4292 + $0x480] sm:$0xff] %v4453
                  %v4455 = vld [vmem:[%s4291 + $0x288] sm:$0xff]
                  %4456 = vst [vmem:[%s4292 + $0x488] sm:$0xff] %v4455
                  %v4457 = vld [vmem:[%s4291 + $0x290] sm:$0xff]
                  %4458 = vst [vmem:[%s4292 + $0x490] sm:$0xff] %v4457
                  %v4459 = vld [vmem:[%s4291 + $0x298] sm:$0xff]
                  %4460 = vst [vmem:[%s4292 + $0x498] sm:$0xff] %v4459
                  %v4461 = vld [vmem:[%s4291 + $0x2a0] sm:$0xff]
                  %4462 = vst [vmem:[%s4292 + $0x4a0] sm:$0xff] %v4461
                  %v4463 = vld [vmem:[%s4291 + $0x2a8] sm:$0xff]
                  %4464 = vst [vmem:[%s4292 + $0x4a8] sm:$0xff] %v4463
                  %v4465 = vld [vmem:[%s4291 + $0x2b0] sm:$0xff]
                  %4466 = vst [vmem:[%s4292 + $0x4b0] sm:$0xff] %v4465
                  %v4467 = vld [vmem:[%s4291 + $0x2b8] sm:$0xff]
                  %4468 = vst [vmem:[%s4292 + $0x4b8] sm:$0xff] %v4467
                  %v4469 = vld [vmem:[%s4291 + $0x2c0] sm:$0xff]
                  %4470 = vst [vmem:[%s4292 + $0x4c0] sm:$0xff] %v4469
                  %v4471 = vld [vmem:[%s4291 + $0x2c8] sm:$0xff]
                  %4472 = vst [vmem:[%s4292 + $0x4c8] sm:$0xff] %v4471
                  %v4473 = vld [vmem:[%s4291 + $0x2d0] sm:$0xff]
                  %4474 = vst [vmem:[%s4292 + $0x4d0] sm:$0xff] %v4473
                  %v4475 = vld [vmem:[%s4291 + $0x2d8] sm:$0xff]
                  %4476 = vst [vmem:[%s4292 + $0x4d8] sm:$0xff] %v4475
                  %v4477 = vld [vmem:[%s4291 + $0x2e0] sm:$0xff]
                  %4478 = vst [vmem:[%s4292 + $0x4e0] sm:$0xff] %v4477
                  %v4479 = vld [vmem:[%s4291 + $0x2e8] sm:$0xff]
                  %4480 = vst [vmem:[%s4292 + $0x4e8] sm:$0xff] %v4479
                  %v4481 = vld [vmem:[%s4291 + $0x2f0] sm:$0xff]
                  %4482 = vst [vmem:[%s4292 + $0x4f0] sm:$0xff] %v4481
                  %v4483 = vld [vmem:[%s4291 + $0x2f8] sm:$0xff]
                  %4484 = vst [vmem:[%s4292 + $0x4f8] sm:$0xff] %v4483
                  %v4485 = vld [vmem:[%s4291 + $0x300] sm:$0xff]
                  %4486 = vst [vmem:[%s4292 + $0x600] sm:$0xff] %v4485
                  %v4487 = vld [vmem:[%s4291 + $0x308] sm:$0xff]
                  %4488 = vst [vmem:[%s4292 + $0x608] sm:$0xff] %v4487
                  %v4489 = vld [vmem:[%s4291 + $0x310] sm:$0xff]
                  %4490 = vst [vmem:[%s4292 + $0x610] sm:$0xff] %v4489
                  %v4491 = vld [vmem:[%s4291 + $0x318] sm:$0xff]
                  %4492 = vst [vmem:[%s4292 + $0x618] sm:$0xff] %v4491
                  %v4493 = vld [vmem:[%s4291 + $0x320] sm:$0xff]
                  %4494 = vst [vmem:[%s4292 + $0x620] sm:$0xff] %v4493
                  %v4495 = vld [vmem:[%s4291 + $0x328] sm:$0xff]
                  %4496 = vst [vmem:[%s4292 + $0x628] sm:$0xff] %v4495
                  %v4497 = vld [vmem:[%s4291 + $0x330] sm:$0xff]
                  %4498 = vst [vmem:[%s4292 + $0x630] sm:$0xff] %v4497
                  %v4499 = vld [vmem:[%s4291 + $0x338] sm:$0xff]
                  %4500 = vst [vmem:[%s4292 + $0x638] sm:$0xff] %v4499
                  %v4501 = vld [vmem:[%s4291 + $0x340] sm:$0xff]
                  %4502 = vst [vmem:[%s4292 + $0x640] sm:$0xff] %v4501
                  %v4503 = vld [vmem:[%s4291 + $0x348] sm:$0xff]
                  %4504 = vst [vmem:[%s4292 + $0x648] sm:$0xff] %v4503
                  %v4505 = vld [vmem:[%s4291 + $0x350] sm:$0xff]
                  %4506 = vst [vmem:[%s4292 + $0x650] sm:$0xff] %v4505
                  %v4507 = vld [vmem:[%s4291 + $0x358] sm:$0xff]
                  %4508 = vst [vmem:[%s4292 + $0x658] sm:$0xff] %v4507
                  %v4509 = vld [vmem:[%s4291 + $0x360] sm:$0xff]
                  %4510 = vst [vmem:[%s4292 + $0x660] sm:$0xff] %v4509
                  %v4511 = vld [vmem:[%s4291 + $0x368] sm:$0xff]
                  %4512 = vst [vmem:[%s4292 + $0x668] sm:$0xff] %v4511
                  %v4513 = vld [vmem:[%s4291 + $0x370] sm:$0xff]
                  %4514 = vst [vmem:[%s4292 + $0x670] sm:$0xff] %v4513
                  %v4515 = vld [vmem:[%s4291 + $0x378] sm:$0xff]
                  %4516 = vst [vmem:[%s4292 + $0x678] sm:$0xff] %v4515
                  %v4517 = vld [vmem:[%s4291 + $0x380] sm:$0xff]
                  %4518 = vst [vmem:[%s4292 + $0x680] sm:$0xff] %v4517
                  %v4519 = vld [vmem:[%s4291 + $0x388] sm:$0xff]
                  %4520 = vst [vmem:[%s4292 + $0x688] sm:$0xff] %v4519
                  %v4521 = vld [vmem:[%s4291 + $0x390] sm:$0xff]
                  %4522 = vst [vmem:[%s4292 + $0x690] sm:$0xff] %v4521
                  %v4523 = vld [vmem:[%s4291 + $0x398] sm:$0xff]
                  %4524 = vst [vmem:[%s4292 + $0x698] sm:$0xff] %v4523
                  %v4525 = vld [vmem:[%s4291 + $0x3a0] sm:$0xff]
                  %4526 = vst [vmem:[%s4292 + $0x6a0] sm:$0xff] %v4525
                  %v4527 = vld [vmem:[%s4291 + $0x3a8] sm:$0xff]
                  %4528 = vst [vmem:[%s4292 + $0x6a8] sm:$0xff] %v4527
                  %v4529 = vld [vmem:[%s4291 + $0x3b0] sm:$0xff]
                  %4530 = vst [vmem:[%s4292 + $0x6b0] sm:$0xff] %v4529
                  %v4531 = vld [vmem:[%s4291 + $0x3b8] sm:$0xff]
                  %4532 = vst [vmem:[%s4292 + $0x6b8] sm:$0xff] %v4531
                  %v4533 = vld [vmem:[%s4291 + $0x3c0] sm:$0xff]
                  %4534 = vst [vmem:[%s4292 + $0x6c0] sm:$0xff] %v4533
                  %v4535 = vld [vmem:[%s4291 + $0x3c8] sm:$0xff]
                  %4536 = vst [vmem:[%s4292 + $0x6c8] sm:$0xff] %v4535
                  %v4537 = vld [vmem:[%s4291 + $0x3d0] sm:$0xff]
                  %4538 = vst [vmem:[%s4292 + $0x6d0] sm:$0xff] %v4537
                  %v4539 = vld [vmem:[%s4291 + $0x3d8] sm:$0xff]
                  %4540 = vst [vmem:[%s4292 + $0x6d8] sm:$0xff] %v4539
                  %v4541 = vld [vmem:[%s4291 + $0x3e0] sm:$0xff]
                  %4542 = vst [vmem:[%s4292 + $0x6e0] sm:$0xff] %v4541
                  %v4543 = vld [vmem:[%s4291 + $0x3e8] sm:$0xff]
                  %4544 = vst [vmem:[%s4292 + $0x6e8] sm:$0xff] %v4543
                  %v4545 = vld [vmem:[%s4291 + $0x3f0] sm:$0xff]
                  %4546 = vst [vmem:[%s4292 + $0x6f0] sm:$0xff] %v4545
                  %v4547 = vld [vmem:[%s4291 + $0x3f8] sm:$0xff]
                  %4548 = vst [vmem:[%s4292 + $0x6f8] sm:$0xff] %v4547
                  %v4549 = vld [vmem:[%s4291 + $0x400] sm:$0xff]
                  %4550 = vst [vmem:[%s4292 + $0x800] sm:$0xff] %v4549
                  %v4551 = vld [vmem:[%s4291 + $0x408] sm:$0xff]
                  %4552 = vst [vmem:[%s4292 + $0x808] sm:$0xff] %v4551
                  %v4553 = vld [vmem:[%s4291 + $0x410] sm:$0xff]
                  %4554 = vst [vmem:[%s4292 + $0x810] sm:$0xff] %v4553
                  %v4555 = vld [vmem:[%s4291 + $0x418] sm:$0xff]
                  %4556 = vst [vmem:[%s4292 + $0x818] sm:$0xff] %v4555
                  %v4557 = vld [vmem:[%s4291 + $0x420] sm:$0xff]
                  %4558 = vst [vmem:[%s4292 + $0x820] sm:$0xff] %v4557
                  %v4559 = vld [vmem:[%s4291 + $0x428] sm:$0xff]
                  %4560 = vst [vmem:[%s4292 + $0x828] sm:$0xff] %v4559
                  %v4561 = vld [vmem:[%s4291 + $0x430] sm:$0xff]
                  %4562 = vst [vmem:[%s4292 + $0x830] sm:$0xff] %v4561
                  %v4563 = vld [vmem:[%s4291 + $0x438] sm:$0xff]
                  %4564 = vst [vmem:[%s4292 + $0x838] sm:$0xff] %v4563
                  %v4565 = vld [vmem:[%s4291 + $0x440] sm:$0xff]
                  %4566 = vst [vmem:[%s4292 + $0x840] sm:$0xff] %v4565
                  %v4567 = vld [vmem:[%s4291 + $0x448] sm:$0xff]
                  %4568 = vst [vmem:[%s4292 + $0x848] sm:$0xff] %v4567
                  %v4569 = vld [vmem:[%s4291 + $0x450] sm:$0xff]
                  %4570 = vst [vmem:[%s4292 + $0x850] sm:$0xff] %v4569
                  %v4571 = vld [vmem:[%s4291 + $0x458] sm:$0xff]
                  %4572 = vst [vmem:[%s4292 + $0x858] sm:$0xff] %v4571
                  %v4573 = vld [vmem:[%s4291 + $0x460] sm:$0xff]
                  %4574 = vst [vmem:[%s4292 + $0x860] sm:$0xff] %v4573
                  %v4575 = vld [vmem:[%s4291 + $0x468] sm:$0xff]
                  %4576 = vst [vmem:[%s4292 + $0x868] sm:$0xff] %v4575
                  %v4577 = vld [vmem:[%s4291 + $0x470] sm:$0xff]
                  %4578 = vst [vmem:[%s4292 + $0x870] sm:$0xff] %v4577
                  %v4579 = vld [vmem:[%s4291 + $0x478] sm:$0xff]
                  %4580 = vst [vmem:[%s4292 + $0x878] sm:$0xff] %v4579
                  %v4581 = vld [vmem:[%s4291 + $0x480] sm:$0xff]
                  %4582 = vst [vmem:[%s4292 + $0x880] sm:$0xff] %v4581
                  %v4583 = vld [vmem:[%s4291 + $0x488] sm:$0xff]
                  %4584 = vst [vmem:[%s4292 + $0x888] sm:$0xff] %v4583
                  %v4585 = vld [vmem:[%s4291 + $0x490] sm:$0xff]
                  %4586 = vst [vmem:[%s4292 + $0x890] sm:$0xff] %v4585
                  %v4587 = vld [vmem:[%s4291 + $0x498] sm:$0xff]
                  %4588 = vst [vmem:[%s4292 + $0x898] sm:$0xff] %v4587
                  %v4589 = vld [vmem:[%s4291 + $0x4a0] sm:$0xff]
                  %4590 = vst [vmem:[%s4292 + $0x8a0] sm:$0xff] %v4589
                  %v4591 = vld [vmem:[%s4291 + $0x4a8] sm:$0xff]
                  %4592 = vst [vmem:[%s4292 + $0x8a8] sm:$0xff] %v4591
                  %v4593 = vld [vmem:[%s4291 + $0x4b0] sm:$0xff]
                  %4594 = vst [vmem:[%s4292 + $0x8b0] sm:$0xff] %v4593
                  %v4595 = vld [vmem:[%s4291 + $0x4b8] sm:$0xff]
                  %4596 = vst [vmem:[%s4292 + $0x8b8] sm:$0xff] %v4595
                  %v4597 = vld [vmem:[%s4291 + $0x4c0] sm:$0xff]
                  %4598 = vst [vmem:[%s4292 + $0x8c0] sm:$0xff] %v4597
                  %v4599 = vld [vmem:[%s4291 + $0x4c8] sm:$0xff]
                  %4600 = vst [vmem:[%s4292 + $0x8c8] sm:$0xff] %v4599
                  %v4601 = vld [vmem:[%s4291 + $0x4d0] sm:$0xff]
                  %4602 = vst [vmem:[%s4292 + $0x8d0] sm:$0xff] %v4601
                  %v4603 = vld [vmem:[%s4291 + $0x4d8] sm:$0xff]
                  %4604 = vst [vmem:[%s4292 + $0x8d8] sm:$0xff] %v4603
                  %v4605 = vld [vmem:[%s4291 + $0x4e0] sm:$0xff]
                  %4606 = vst [vmem:[%s4292 + $0x8e0] sm:$0xff] %v4605
                  %v4607 = vld [vmem:[%s4291 + $0x4e8] sm:$0xff]
                  %4608 = vst [vmem:[%s4292 + $0x8e8] sm:$0xff] %v4607
                  %v4609 = vld [vmem:[%s4291 + $0x4f0] sm:$0xff]
                  %4610 = vst [vmem:[%s4292 + $0x8f0] sm:$0xff] %v4609
                  %v4611 = vld [vmem:[%s4291 + $0x4f8] sm:$0xff]
                  %4612 = vst [vmem:[%s4292 + $0x8f8] sm:$0xff] %v4611
                  %v4613 = vld [vmem:[%s4291 + $0x500] sm:$0xff]
                  %4614 = vst [vmem:[%s4292 + $0xa00] sm:$0xff] %v4613
                  %v4615 = vld [vmem:[%s4291 + $0x508] sm:$0xff]
                  %4616 = vst [vmem:[%s4292 + $0xa08] sm:$0xff] %v4615
                  %v4617 = vld [vmem:[%s4291 + $0x510] sm:$0xff]
                  %4618 = vst [vmem:[%s4292 + $0xa10] sm:$0xff] %v4617
                  %v4619 = vld [vmem:[%s4291 + $0x518] sm:$0xff]
                  %4620 = vst [vmem:[%s4292 + $0xa18] sm:$0xff] %v4619
                  %v4621 = vld [vmem:[%s4291 + $0x520] sm:$0xff]
                  %4622 = vst [vmem:[%s4292 + $0xa20] sm:$0xff] %v4621
                  %v4623 = vld [vmem:[%s4291 + $0x528] sm:$0xff]
                  %4624 = vst [vmem:[%s4292 + $0xa28] sm:$0xff] %v4623
                  %v4625 = vld [vmem:[%s4291 + $0x530] sm:$0xff]
                  %4626 = vst [vmem:[%s4292 + $0xa30] sm:$0xff] %v4625
                  %v4627 = vld [vmem:[%s4291 + $0x538] sm:$0xff]
                  %4628 = vst [vmem:[%s4292 + $0xa38] sm:$0xff] %v4627
                  %v4629 = vld [vmem:[%s4291 + $0x540] sm:$0xff]
                  %4630 = vst [vmem:[%s4292 + $0xa40] sm:$0xff] %v4629
                  %v4631 = vld [vmem:[%s4291 + $0x548] sm:$0xff]
                  %4632 = vst [vmem:[%s4292 + $0xa48] sm:$0xff] %v4631
                  %v4633 = vld [vmem:[%s4291 + $0x550] sm:$0xff]
                  %4634 = vst [vmem:[%s4292 + $0xa50] sm:$0xff] %v4633
                  %v4635 = vld [vmem:[%s4291 + $0x558] sm:$0xff]
                  %4636 = vst [vmem:[%s4292 + $0xa58] sm:$0xff] %v4635
                  %v4637 = vld [vmem:[%s4291 + $0x560] sm:$0xff]
                  %4638 = vst [vmem:[%s4292 + $0xa60] sm:$0xff] %v4637
                  %v4639 = vld [vmem:[%s4291 + $0x568] sm:$0xff]
                  %4640 = vst [vmem:[%s4292 + $0xa68] sm:$0xff] %v4639
                  %v4641 = vld [vmem:[%s4291 + $0x570] sm:$0xff]
                  %4642 = vst [vmem:[%s4292 + $0xa70] sm:$0xff] %v4641
                  %v4643 = vld [vmem:[%s4291 + $0x578] sm:$0xff]
                  %4644 = vst [vmem:[%s4292 + $0xa78] sm:$0xff] %v4643
                  %v4645 = vld [vmem:[%s4291 + $0x580] sm:$0xff]
                  %4646 = vst [vmem:[%s4292 + $0xa80] sm:$0xff] %v4645
                  %v4647 = vld [vmem:[%s4291 + $0x588] sm:$0xff]
                  %4648 = vst [vmem:[%s4292 + $0xa88] sm:$0xff] %v4647
                  %v4649 = vld [vmem:[%s4291 + $0x590] sm:$0xff]
                  %4650 = vst [vmem:[%s4292 + $0xa90] sm:$0xff] %v4649
                  %v4651 = vld [vmem:[%s4291 + $0x598] sm:$0xff]
                  %4652 = vst [vmem:[%s4292 + $0xa98] sm:$0xff] %v4651
                  %v4653 = vld [vmem:[%s4291 + $0x5a0] sm:$0xff]
                  %4654 = vst [vmem:[%s4292 + $0xaa0] sm:$0xff] %v4653
                  %v4655 = vld [vmem:[%s4291 + $0x5a8] sm:$0xff]
                  %4656 = vst [vmem:[%s4292 + $0xaa8] sm:$0xff] %v4655
                  %v4657 = vld [vmem:[%s4291 + $0x5b0] sm:$0xff]
                  %4658 = vst [vmem:[%s4292 + $0xab0] sm:$0xff] %v4657
                  %v4659 = vld [vmem:[%s4291 + $0x5b8] sm:$0xff]
                  %4660 = vst [vmem:[%s4292 + $0xab8] sm:$0xff] %v4659
                  %v4661 = vld [vmem:[%s4291 + $0x5c0] sm:$0xff]
                  %4662 = vst [vmem:[%s4292 + $0xac0] sm:$0xff] %v4661
                  %v4663 = vld [vmem:[%s4291 + $0x5c8] sm:$0xff]
                  %4664 = vst [vmem:[%s4292 + $0xac8] sm:$0xff] %v4663
                  %v4665 = vld [vmem:[%s4291 + $0x5d0] sm:$0xff]
                  %4666 = vst [vmem:[%s4292 + $0xad0] sm:$0xff] %v4665
                  %v4667 = vld [vmem:[%s4291 + $0x5d8] sm:$0xff]
                  %4668 = vst [vmem:[%s4292 + $0xad8] sm:$0xff] %v4667
                  %v4669 = vld [vmem:[%s4291 + $0x5e0] sm:$0xff]
                  %4670 = vst [vmem:[%s4292 + $0xae0] sm:$0xff] %v4669
                  %v4671 = vld [vmem:[%s4291 + $0x5e8] sm:$0xff]
                  %4672 = vst [vmem:[%s4292 + $0xae8] sm:$0xff] %v4671
                  %v4673 = vld [vmem:[%s4291 + $0x5f0] sm:$0xff]
                  %4674 = vst [vmem:[%s4292 + $0xaf0] sm:$0xff] %v4673
                  %v4675 = vld [vmem:[%s4291 + $0x5f8] sm:$0xff]
                  %4676 = vst [vmem:[%s4292 + $0xaf8] sm:$0xff] %v4675
                  %v4677 = vld [vmem:[%s4291 + $0x600] sm:$0xff]
                  %4678 = vst [vmem:[%s4292 + $0xc00] sm:$0xff] %v4677
                  %v4679 = vld [vmem:[%s4291 + $0x608] sm:$0xff]
                  %4680 = vst [vmem:[%s4292 + $0xc08] sm:$0xff] %v4679
                  %v4681 = vld [vmem:[%s4291 + $0x610] sm:$0xff]
                  %4682 = vst [vmem:[%s4292 + $0xc10] sm:$0xff] %v4681
                  %v4683 = vld [vmem:[%s4291 + $0x618] sm:$0xff]
                  %4684 = vst [vmem:[%s4292 + $0xc18] sm:$0xff] %v4683
                  %v4685 = vld [vmem:[%s4291 + $0x620] sm:$0xff]
                  %4686 = vst [vmem:[%s4292 + $0xc20] sm:$0xff] %v4685
                  %v4687 = vld [vmem:[%s4291 + $0x628] sm:$0xff]
                  %4688 = vst [vmem:[%s4292 + $0xc28] sm:$0xff] %v4687
                  %v4689 = vld [vmem:[%s4291 + $0x630] sm:$0xff]
                  %4690 = vst [vmem:[%s4292 + $0xc30] sm:$0xff] %v4689
                  %v4691 = vld [vmem:[%s4291 + $0x638] sm:$0xff]
                  %4692 = vst [vmem:[%s4292 + $0xc38] sm:$0xff] %v4691
                  %v4693 = vld [vmem:[%s4291 + $0x640] sm:$0xff]
                  %4694 = vst [vmem:[%s4292 + $0xc40] sm:$0xff] %v4693
                  %v4695 = vld [vmem:[%s4291 + $0x648] sm:$0xff]
                  %4696 = vst [vmem:[%s4292 + $0xc48] sm:$0xff] %v4695
                  %v4697 = vld [vmem:[%s4291 + $0x650] sm:$0xff]
                  %4698 = vst [vmem:[%s4292 + $0xc50] sm:$0xff] %v4697
                  %v4699 = vld [vmem:[%s4291 + $0x658] sm:$0xff]
                  %4700 = vst [vmem:[%s4292 + $0xc58] sm:$0xff] %v4699
                  %v4701 = vld [vmem:[%s4291 + $0x660] sm:$0xff]
                  %4702 = vst [vmem:[%s4292 + $0xc60] sm:$0xff] %v4701
                  %v4703 = vld [vmem:[%s4291 + $0x668] sm:$0xff]
                  %4704 = vst [vmem:[%s4292 + $0xc68] sm:$0xff] %v4703
                  %v4705 = vld [vmem:[%s4291 + $0x670] sm:$0xff]
                  %4706 = vst [vmem:[%s4292 + $0xc70] sm:$0xff] %v4705
                  %v4707 = vld [vmem:[%s4291 + $0x678] sm:$0xff]
                  %4708 = vst [vmem:[%s4292 + $0xc78] sm:$0xff] %v4707
                  %v4709 = vld [vmem:[%s4291 + $0x680] sm:$0xff]
                  %4710 = vst [vmem:[%s4292 + $0xc80] sm:$0xff] %v4709
                  %v4711 = vld [vmem:[%s4291 + $0x688] sm:$0xff]
                  %4712 = vst [vmem:[%s4292 + $0xc88] sm:$0xff] %v4711
                  %v4713 = vld [vmem:[%s4291 + $0x690] sm:$0xff]
                  %4714 = vst [vmem:[%s4292 + $0xc90] sm:$0xff] %v4713
                  %v4715 = vld [vmem:[%s4291 + $0x698] sm:$0xff]
                  %4716 = vst [vmem:[%s4292 + $0xc98] sm:$0xff] %v4715
                  %v4717 = vld [vmem:[%s4291 + $0x6a0] sm:$0xff]
                  %4718 = vst [vmem:[%s4292 + $0xca0] sm:$0xff] %v4717
                  %v4719 = vld [vmem:[%s4291 + $0x6a8] sm:$0xff]
                  %4720 = vst [vmem:[%s4292 + $0xca8] sm:$0xff] %v4719
                  %v4721 = vld [vmem:[%s4291 + $0x6b0] sm:$0xff]
                  %4722 = vst [vmem:[%s4292 + $0xcb0] sm:$0xff] %v4721
                  %v4723 = vld [vmem:[%s4291 + $0x6b8] sm:$0xff]
                  %4724 = vst [vmem:[%s4292 + $0xcb8] sm:$0xff] %v4723
                  %v4725 = vld [vmem:[%s4291 + $0x6c0] sm:$0xff]
                  %4726 = vst [vmem:[%s4292 + $0xcc0] sm:$0xff] %v4725
                  %v4727 = vld [vmem:[%s4291 + $0x6c8] sm:$0xff]
                  %4728 = vst [vmem:[%s4292 + $0xcc8] sm:$0xff] %v4727
                  %v4729 = vld [vmem:[%s4291 + $0x6d0] sm:$0xff]
                  %4730 = vst [vmem:[%s4292 + $0xcd0] sm:$0xff] %v4729
                  %v4731 = vld [vmem:[%s4291 + $0x6d8] sm:$0xff]
                  %4732 = vst [vmem:[%s4292 + $0xcd8] sm:$0xff] %v4731
                  %v4733 = vld [vmem:[%s4291 + $0x6e0] sm:$0xff]
                  %4734 = vst [vmem:[%s4292 + $0xce0] sm:$0xff] %v4733
                  %v4735 = vld [vmem:[%s4291 + $0x6e8] sm:$0xff]
                  %4736 = vst [vmem:[%s4292 + $0xce8] sm:$0xff] %v4735
                  %v4737 = vld [vmem:[%s4291 + $0x6f0] sm:$0xff]
                  %4738 = vst [vmem:[%s4292 + $0xcf0] sm:$0xff] %v4737
                  %v4739 = vld [vmem:[%s4291 + $0x6f8] sm:$0xff]
                  %4740 = vst [vmem:[%s4292 + $0xcf8] sm:$0xff] %v4739
                  %v4741 = vld [vmem:[%s4291 + $0x700] sm:$0xff]
                  %4742 = vst [vmem:[%s4292 + $0xe00] sm:$0xff] %v4741
                  %v4743 = vld [vmem:[%s4291 + $0x708] sm:$0xff]
                  %4744 = vst [vmem:[%s4292 + $0xe08] sm:$0xff] %v4743
                  %v4745 = vld [vmem:[%s4291 + $0x710] sm:$0xff]
                  %4746 = vst [vmem:[%s4292 + $0xe10] sm:$0xff] %v4745
                  %v4747 = vld [vmem:[%s4291 + $0x718] sm:$0xff]
                  %4748 = vst [vmem:[%s4292 + $0xe18] sm:$0xff] %v4747
                  %v4749 = vld [vmem:[%s4291 + $0x720] sm:$0xff]
                  %4750 = vst [vmem:[%s4292 + $0xe20] sm:$0xff] %v4749
                  %v4751 = vld [vmem:[%s4291 + $0x728] sm:$0xff]
                  %4752 = vst [vmem:[%s4292 + $0xe28] sm:$0xff] %v4751
                  %v4753 = vld [vmem:[%s4291 + $0x730] sm:$0xff]
                  %4754 = vst [vmem:[%s4292 + $0xe30] sm:$0xff] %v4753
                  %v4755 = vld [vmem:[%s4291 + $0x738] sm:$0xff]
                  %4756 = vst [vmem:[%s4292 + $0xe38] sm:$0xff] %v4755
                  %v4757 = vld [vmem:[%s4291 + $0x740] sm:$0xff]
                  %4758 = vst [vmem:[%s4292 + $0xe40] sm:$0xff] %v4757
                  %v4759 = vld [vmem:[%s4291 + $0x748] sm:$0xff]
                  %4760 = vst [vmem:[%s4292 + $0xe48] sm:$0xff] %v4759
                  %v4761 = vld [vmem:[%s4291 + $0x750] sm:$0xff]
                  %4762 = vst [vmem:[%s4292 + $0xe50] sm:$0xff] %v4761
                  %v4763 = vld [vmem:[%s4291 + $0x758] sm:$0xff]
                  %4764 = vst [vmem:[%s4292 + $0xe58] sm:$0xff] %v4763
                  %v4765 = vld [vmem:[%s4291 + $0x760] sm:$0xff]
                  %4766 = vst [vmem:[%s4292 + $0xe60] sm:$0xff] %v4765
                  %v4767 = vld [vmem:[%s4291 + $0x768] sm:$0xff]
                  %4768 = vst [vmem:[%s4292 + $0xe68] sm:$0xff] %v4767
                  %v4769 = vld [vmem:[%s4291 + $0x770] sm:$0xff]
                  %4770 = vst [vmem:[%s4292 + $0xe70] sm:$0xff] %v4769
                  %v4771 = vld [vmem:[%s4291 + $0x778] sm:$0xff]
                  %4772 = vst [vmem:[%s4292 + $0xe78] sm:$0xff] %v4771
                  %v4773 = vld [vmem:[%s4291 + $0x780] sm:$0xff]
                  %4774 = vst [vmem:[%s4292 + $0xe80] sm:$0xff] %v4773
                  %v4775 = vld [vmem:[%s4291 + $0x788] sm:$0xff]
                  %4776 = vst [vmem:[%s4292 + $0xe88] sm:$0xff] %v4775
                  %v4777 = vld [vmem:[%s4291 + $0x790] sm:$0xff]
                  %4778 = vst [vmem:[%s4292 + $0xe90] sm:$0xff] %v4777
                  %v4779 = vld [vmem:[%s4291 + $0x798] sm:$0xff]
                  %4780 = vst [vmem:[%s4292 + $0xe98] sm:$0xff] %v4779
                  %v4781 = vld [vmem:[%s4291 + $0x7a0] sm:$0xff]
                  %4782 = vst [vmem:[%s4292 + $0xea0] sm:$0xff] %v4781
                  %v4783 = vld [vmem:[%s4291 + $0x7a8] sm:$0xff]
                  %4784 = vst [vmem:[%s4292 + $0xea8] sm:$0xff] %v4783
                  %v4785 = vld [vmem:[%s4291 + $0x7b0] sm:$0xff]
                  %4786 = vst [vmem:[%s4292 + $0xeb0] sm:$0xff] %v4785
                  %v4787 = vld [vmem:[%s4291 + $0x7b8] sm:$0xff]
                  %4788 = vst [vmem:[%s4292 + $0xeb8] sm:$0xff] %v4787
                  %v4789 = vld [vmem:[%s4291 + $0x7c0] sm:$0xff]
                  %4790 = vst [vmem:[%s4292 + $0xec0] sm:$0xff] %v4789
                  %v4791 = vld [vmem:[%s4291 + $0x7c8] sm:$0xff]
                  %4792 = vst [vmem:[%s4292 + $0xec8] sm:$0xff] %v4791
                  %v4793 = vld [vmem:[%s4291 + $0x7d0] sm:$0xff]
                  %4794 = vst [vmem:[%s4292 + $0xed0] sm:$0xff] %v4793
                  %v4795 = vld [vmem:[%s4291 + $0x7d8] sm:$0xff]
                  %4796 = vst [vmem:[%s4292 + $0xed8] sm:$0xff] %v4795
                  %v4797 = vld [vmem:[%s4291 + $0x7e0] sm:$0xff]
                  %4798 = vst [vmem:[%s4292 + $0xee0] sm:$0xff] %v4797
                  %v4799 = vld [vmem:[%s4291 + $0x7e8] sm:$0xff]
                  %4800 = vst [vmem:[%s4292 + $0xee8] sm:$0xff] %v4799
                  %v4801 = vld [vmem:[%s4291 + $0x7f0] sm:$0xff]
                  %4802 = vst [vmem:[%s4292 + $0xef0] sm:$0xff] %v4801
                  %v4803 = vld [vmem:[%s4291 + $0x7f8] sm:$0xff]
                  %4804 = vst [vmem:[%s4292 + $0xef8] sm:$0xff] %v4803
                $region105: #{memristor_forward.1} parent=99 // loop_footer
                  %s4290 = sadd.s32 1, %s4286
                $region106: #{memristor_forward.1} parent=99 // loop_footer_branch
                  %4285 = sbr.rel target = $region102
                $region107: #{memristor_forward.1} parent=99 // loop_exit
                  _
              $region100: #{memristor_forward.1} parent=84 // pred_fallthru
                _
              // Predicated region
              $region108: #{memristor_forward.1} parent=84 // pred_check
                _
              $region109: #{memristor_forward.1} parent=84 // pred_check_branch
                %4806 = sbr.rel target = $region111
              $region110: #{memristor_forward.1} parent=84 // pred_region
                _
              $region111: #{memristor_forward.1} parent=84 // pred_fallthru
                _
            $region85: #{memristor_forward.1} parent=80 // pred_fallthru
              _
            // Predicated region
            $region86: #{memristor_forward.1} parent=80 // pred_check
              _
            $region87: #{memristor_forward.1} parent=80 // pred_check_branch
              %3760 = sbr.rel target = $region89
            $region88: #{memristor_forward.1} parent=80 // pred_region
              %s3762 = ssub.s32 256, 1
              loop: start=0, step=1, limit=1
              $region90: #{memristor_forward.1} parent=88 // loop_pre_header
                _
              $region91: #{memristor_forward.1} parent=88 // loop_header
                %s3764 = sphi 0, %s3768
                %p3765 = scmp.ge.s32.totalorder %s3764, 1
                %s3769 = sphi %s3744, %s3744
                %s3770 = sphi %s3754, %s3754
              $region92: #{memristor_forward.1} parent=88 // loop_header_branch
                %3767 = sbr.rel (%p3765) target = $region96
              $region93: #{memristor_forward.1} parent=88 // loop_body
                %v3771 = vld [vmem:[%s3769] sm:%s3762]
                %3772 = vst [vmem:[%s3770] sm:%s3762] %v3771
                %v3773 = vld [vmem:[%s3769 + $0x8] sm:%s3762]
                %3774 = vst [vmem:[%s3770 + $0x8] sm:%s3762] %v3773
                %v3775 = vld [vmem:[%s3769 + $0x10] sm:%s3762]
                %3776 = vst [vmem:[%s3770 + $0x10] sm:%s3762] %v3775
                %v3777 = vld [vmem:[%s3769 + $0x18] sm:%s3762]
                %3778 = vst [vmem:[%s3770 + $0x18] sm:%s3762] %v3777
                %v3779 = vld [vmem:[%s3769 + $0x20] sm:%s3762]
                %3780 = vst [vmem:[%s3770 + $0x20] sm:%s3762] %v3779
                %v3781 = vld [vmem:[%s3769 + $0x28] sm:%s3762]
                %3782 = vst [vmem:[%s3770 + $0x28] sm:%s3762] %v3781
                %v3783 = vld [vmem:[%s3769 + $0x30] sm:%s3762]
                %3784 = vst [vmem:[%s3770 + $0x30] sm:%s3762] %v3783
                %v3785 = vld [vmem:[%s3769 + $0x38] sm:%s3762]
                %3786 = vst [vmem:[%s3770 + $0x38] sm:%s3762] %v3785
                %v3787 = vld [vmem:[%s3769 + $0x40] sm:%s3762]
                %3788 = vst [vmem:[%s3770 + $0x40] sm:%s3762] %v3787
                %v3789 = vld [vmem:[%s3769 + $0x48] sm:%s3762]
                %3790 = vst [vmem:[%s3770 + $0x48] sm:%s3762] %v3789
                %v3791 = vld [vmem:[%s3769 + $0x50] sm:%s3762]
                %3792 = vst [vmem:[%s3770 + $0x50] sm:%s3762] %v3791
                %v3793 = vld [vmem:[%s3769 + $0x58] sm:%s3762]
                %3794 = vst [vmem:[%s3770 + $0x58] sm:%s3762] %v3793
                %v3795 = vld [vmem:[%s3769 + $0x60] sm:%s3762]
                %3796 = vst [vmem:[%s3770 + $0x60] sm:%s3762] %v3795
                %v3797 = vld [vmem:[%s3769 + $0x68] sm:%s3762]
                %3798 = vst [vmem:[%s3770 + $0x68] sm:%s3762] %v3797
                %v3799 = vld [vmem:[%s3769 + $0x70] sm:%s3762]
                %3800 = vst [vmem:[%s3770 + $0x70] sm:%s3762] %v3799
                %v3801 = vld [vmem:[%s3769 + $0x78] sm:%s3762]
                %3802 = vst [vmem:[%s3770 + $0x78] sm:%s3762] %v3801
                %v3803 = vld [vmem:[%s3769 + $0x80] sm:%s3762]
                %3804 = vst [vmem:[%s3770 + $0x80] sm:%s3762] %v3803
                %v3805 = vld [vmem:[%s3769 + $0x88] sm:%s3762]
                %3806 = vst [vmem:[%s3770 + $0x88] sm:%s3762] %v3805
                %v3807 = vld [vmem:[%s3769 + $0x90] sm:%s3762]
                %3808 = vst [vmem:[%s3770 + $0x90] sm:%s3762] %v3807
                %v3809 = vld [vmem:[%s3769 + $0x98] sm:%s3762]
                %3810 = vst [vmem:[%s3770 + $0x98] sm:%s3762] %v3809
                %v3811 = vld [vmem:[%s3769 + $0xa0] sm:%s3762]
                %3812 = vst [vmem:[%s3770 + $0xa0] sm:%s3762] %v3811
                %v3813 = vld [vmem:[%s3769 + $0xa8] sm:%s3762]
                %3814 = vst [vmem:[%s3770 + $0xa8] sm:%s3762] %v3813
                %v3815 = vld [vmem:[%s3769 + $0xb0] sm:%s3762]
                %3816 = vst [vmem:[%s3770 + $0xb0] sm:%s3762] %v3815
                %v3817 = vld [vmem:[%s3769 + $0xb8] sm:%s3762]
                %3818 = vst [vmem:[%s3770 + $0xb8] sm:%s3762] %v3817
                %v3819 = vld [vmem:[%s3769 + $0xc0] sm:%s3762]
                %3820 = vst [vmem:[%s3770 + $0xc0] sm:%s3762] %v3819
                %v3821 = vld [vmem:[%s3769 + $0xc8] sm:%s3762]
                %3822 = vst [vmem:[%s3770 + $0xc8] sm:%s3762] %v3821
                %v3823 = vld [vmem:[%s3769 + $0xd0] sm:%s3762]
                %3824 = vst [vmem:[%s3770 + $0xd0] sm:%s3762] %v3823
                %v3825 = vld [vmem:[%s3769 + $0xd8] sm:%s3762]
                %3826 = vst [vmem:[%s3770 + $0xd8] sm:%s3762] %v3825
                %v3827 = vld [vmem:[%s3769 + $0xe0] sm:%s3762]
                %3828 = vst [vmem:[%s3770 + $0xe0] sm:%s3762] %v3827
                %v3829 = vld [vmem:[%s3769 + $0xe8] sm:%s3762]
                %3830 = vst [vmem:[%s3770 + $0xe8] sm:%s3762] %v3829
                %v3831 = vld [vmem:[%s3769 + $0xf0] sm:%s3762]
                %3832 = vst [vmem:[%s3770 + $0xf0] sm:%s3762] %v3831
                %v3833 = vld [vmem:[%s3769 + $0xf8] sm:%s3762]
                %3834 = vst [vmem:[%s3770 + $0xf8] sm:%s3762] %v3833
                %v3835 = vld [vmem:[%s3769 + $0x100] sm:%s3762]
                %3836 = vst [vmem:[%s3770 + $0x200] sm:%s3762] %v3835
                %v3837 = vld [vmem:[%s3769 + $0x108] sm:%s3762]
                %3838 = vst [vmem:[%s3770 + $0x208] sm:%s3762] %v3837
                %v3839 = vld [vmem:[%s3769 + $0x110] sm:%s3762]
                %3840 = vst [vmem:[%s3770 + $0x210] sm:%s3762] %v3839
                %v3841 = vld [vmem:[%s3769 + $0x118] sm:%s3762]
                %3842 = vst [vmem:[%s3770 + $0x218] sm:%s3762] %v3841
                %v3843 = vld [vmem:[%s3769 + $0x120] sm:%s3762]
                %3844 = vst [vmem:[%s3770 + $0x220] sm:%s3762] %v3843
                %v3845 = vld [vmem:[%s3769 + $0x128] sm:%s3762]
                %3846 = vst [vmem:[%s3770 + $0x228] sm:%s3762] %v3845
                %v3847 = vld [vmem:[%s3769 + $0x130] sm:%s3762]
                %3848 = vst [vmem:[%s3770 + $0x230] sm:%s3762] %v3847
                %v3849 = vld [vmem:[%s3769 + $0x138] sm:%s3762]
                %3850 = vst [vmem:[%s3770 + $0x238] sm:%s3762] %v3849
                %v3851 = vld [vmem:[%s3769 + $0x140] sm:%s3762]
                %3852 = vst [vmem:[%s3770 + $0x240] sm:%s3762] %v3851
                %v3853 = vld [vmem:[%s3769 + $0x148] sm:%s3762]
                %3854 = vst [vmem:[%s3770 + $0x248] sm:%s3762] %v3853
                %v3855 = vld [vmem:[%s3769 + $0x150] sm:%s3762]
                %3856 = vst [vmem:[%s3770 + $0x250] sm:%s3762] %v3855
                %v3857 = vld [vmem:[%s3769 + $0x158] sm:%s3762]
                %3858 = vst [vmem:[%s3770 + $0x258] sm:%s3762] %v3857
                %v3859 = vld [vmem:[%s3769 + $0x160] sm:%s3762]
                %3860 = vst [vmem:[%s3770 + $0x260] sm:%s3762] %v3859
                %v3861 = vld [vmem:[%s3769 + $0x168] sm:%s3762]
                %3862 = vst [vmem:[%s3770 + $0x268] sm:%s3762] %v3861
                %v3863 = vld [vmem:[%s3769 + $0x170] sm:%s3762]
                %3864 = vst [vmem:[%s3770 + $0x270] sm:%s3762] %v3863
                %v3865 = vld [vmem:[%s3769 + $0x178] sm:%s3762]
                %3866 = vst [vmem:[%s3770 + $0x278] sm:%s3762] %v3865
                %v3867 = vld [vmem:[%s3769 + $0x180] sm:%s3762]
                %3868 = vst [vmem:[%s3770 + $0x280] sm:%s3762] %v3867
                %v3869 = vld [vmem:[%s3769 + $0x188] sm:%s3762]
                %3870 = vst [vmem:[%s3770 + $0x288] sm:%s3762] %v3869
                %v3871 = vld [vmem:[%s3769 + $0x190] sm:%s3762]
                %3872 = vst [vmem:[%s3770 + $0x290] sm:%s3762] %v3871
                %v3873 = vld [vmem:[%s3769 + $0x198] sm:%s3762]
                %3874 = vst [vmem:[%s3770 + $0x298] sm:%s3762] %v3873
                %v3875 = vld [vmem:[%s3769 + $0x1a0] sm:%s3762]
                %3876 = vst [vmem:[%s3770 + $0x2a0] sm:%s3762] %v3875
                %v3877 = vld [vmem:[%s3769 + $0x1a8] sm:%s3762]
                %3878 = vst [vmem:[%s3770 + $0x2a8] sm:%s3762] %v3877
                %v3879 = vld [vmem:[%s3769 + $0x1b0] sm:%s3762]
                %3880 = vst [vmem:[%s3770 + $0x2b0] sm:%s3762] %v3879
                %v3881 = vld [vmem:[%s3769 + $0x1b8] sm:%s3762]
                %3882 = vst [vmem:[%s3770 + $0x2b8] sm:%s3762] %v3881
                %v3883 = vld [vmem:[%s3769 + $0x1c0] sm:%s3762]
                %3884 = vst [vmem:[%s3770 + $0x2c0] sm:%s3762] %v3883
                %v3885 = vld [vmem:[%s3769 + $0x1c8] sm:%s3762]
                %3886 = vst [vmem:[%s3770 + $0x2c8] sm:%s3762] %v3885
                %v3887 = vld [vmem:[%s3769 + $0x1d0] sm:%s3762]
                %3888 = vst [vmem:[%s3770 + $0x2d0] sm:%s3762] %v3887
                %v3889 = vld [vmem:[%s3769 + $0x1d8] sm:%s3762]
                %3890 = vst [vmem:[%s3770 + $0x2d8] sm:%s3762] %v3889
                %v3891 = vld [vmem:[%s3769 + $0x1e0] sm:%s3762]
                %3892 = vst [vmem:[%s3770 + $0x2e0] sm:%s3762] %v3891
                %v3893 = vld [vmem:[%s3769 + $0x1e8] sm:%s3762]
                %3894 = vst [vmem:[%s3770 + $0x2e8] sm:%s3762] %v3893
                %v3895 = vld [vmem:[%s3769 + $0x1f0] sm:%s3762]
                %3896 = vst [vmem:[%s3770 + $0x2f0] sm:%s3762] %v3895
                %v3897 = vld [vmem:[%s3769 + $0x1f8] sm:%s3762]
                %3898 = vst [vmem:[%s3770 + $0x2f8] sm:%s3762] %v3897
                %v3899 = vld [vmem:[%s3769 + $0x200] sm:%s3762]
                %3900 = vst [vmem:[%s3770 + $0x400] sm:%s3762] %v3899
                %v3901 = vld [vmem:[%s3769 + $0x208] sm:%s3762]
                %3902 = vst [vmem:[%s3770 + $0x408] sm:%s3762] %v3901
                %v3903 = vld [vmem:[%s3769 + $0x210] sm:%s3762]
                %3904 = vst [vmem:[%s3770 + $0x410] sm:%s3762] %v3903
                %v3905 = vld [vmem:[%s3769 + $0x218] sm:%s3762]
                %3906 = vst [vmem:[%s3770 + $0x418] sm:%s3762] %v3905
                %v3907 = vld [vmem:[%s3769 + $0x220] sm:%s3762]
                %3908 = vst [vmem:[%s3770 + $0x420] sm:%s3762] %v3907
                %v3909 = vld [vmem:[%s3769 + $0x228] sm:%s3762]
                %3910 = vst [vmem:[%s3770 + $0x428] sm:%s3762] %v3909
                %v3911 = vld [vmem:[%s3769 + $0x230] sm:%s3762]
                %3912 = vst [vmem:[%s3770 + $0x430] sm:%s3762] %v3911
                %v3913 = vld [vmem:[%s3769 + $0x238] sm:%s3762]
                %3914 = vst [vmem:[%s3770 + $0x438] sm:%s3762] %v3913
                %v3915 = vld [vmem:[%s3769 + $0x240] sm:%s3762]
                %3916 = vst [vmem:[%s3770 + $0x440] sm:%s3762] %v3915
                %v3917 = vld [vmem:[%s3769 + $0x248] sm:%s3762]
                %3918 = vst [vmem:[%s3770 + $0x448] sm:%s3762] %v3917
                %v3919 = vld [vmem:[%s3769 + $0x250] sm:%s3762]
                %3920 = vst [vmem:[%s3770 + $0x450] sm:%s3762] %v3919
                %v3921 = vld [vmem:[%s3769 + $0x258] sm:%s3762]
                %3922 = vst [vmem:[%s3770 + $0x458] sm:%s3762] %v3921
                %v3923 = vld [vmem:[%s3769 + $0x260] sm:%s3762]
                %3924 = vst [vmem:[%s3770 + $0x460] sm:%s3762] %v3923
                %v3925 = vld [vmem:[%s3769 + $0x268] sm:%s3762]
                %3926 = vst [vmem:[%s3770 + $0x468] sm:%s3762] %v3925
                %v3927 = vld [vmem:[%s3769 + $0x270] sm:%s3762]
                %3928 = vst [vmem:[%s3770 + $0x470] sm:%s3762] %v3927
                %v3929 = vld [vmem:[%s3769 + $0x278] sm:%s3762]
                %3930 = vst [vmem:[%s3770 + $0x478] sm:%s3762] %v3929
                %v3931 = vld [vmem:[%s3769 + $0x280] sm:%s3762]
                %3932 = vst [vmem:[%s3770 + $0x480] sm:%s3762] %v3931
                %v3933 = vld [vmem:[%s3769 + $0x288] sm:%s3762]
                %3934 = vst [vmem:[%s3770 + $0x488] sm:%s3762] %v3933
                %v3935 = vld [vmem:[%s3769 + $0x290] sm:%s3762]
                %3936 = vst [vmem:[%s3770 + $0x490] sm:%s3762] %v3935
                %v3937 = vld [vmem:[%s3769 + $0x298] sm:%s3762]
                %3938 = vst [vmem:[%s3770 + $0x498] sm:%s3762] %v3937
                %v3939 = vld [vmem:[%s3769 + $0x2a0] sm:%s3762]
                %3940 = vst [vmem:[%s3770 + $0x4a0] sm:%s3762] %v3939
                %v3941 = vld [vmem:[%s3769 + $0x2a8] sm:%s3762]
                %3942 = vst [vmem:[%s3770 + $0x4a8] sm:%s3762] %v3941
                %v3943 = vld [vmem:[%s3769 + $0x2b0] sm:%s3762]
                %3944 = vst [vmem:[%s3770 + $0x4b0] sm:%s3762] %v3943
                %v3945 = vld [vmem:[%s3769 + $0x2b8] sm:%s3762]
                %3946 = vst [vmem:[%s3770 + $0x4b8] sm:%s3762] %v3945
                %v3947 = vld [vmem:[%s3769 + $0x2c0] sm:%s3762]
                %3948 = vst [vmem:[%s3770 + $0x4c0] sm:%s3762] %v3947
                %v3949 = vld [vmem:[%s3769 + $0x2c8] sm:%s3762]
                %3950 = vst [vmem:[%s3770 + $0x4c8] sm:%s3762] %v3949
                %v3951 = vld [vmem:[%s3769 + $0x2d0] sm:%s3762]
                %3952 = vst [vmem:[%s3770 + $0x4d0] sm:%s3762] %v3951
                %v3953 = vld [vmem:[%s3769 + $0x2d8] sm:%s3762]
                %3954 = vst [vmem:[%s3770 + $0x4d8] sm:%s3762] %v3953
                %v3955 = vld [vmem:[%s3769 + $0x2e0] sm:%s3762]
                %3956 = vst [vmem:[%s3770 + $0x4e0] sm:%s3762] %v3955
                %v3957 = vld [vmem:[%s3769 + $0x2e8] sm:%s3762]
                %3958 = vst [vmem:[%s3770 + $0x4e8] sm:%s3762] %v3957
                %v3959 = vld [vmem:[%s3769 + $0x2f0] sm:%s3762]
                %3960 = vst [vmem:[%s3770 + $0x4f0] sm:%s3762] %v3959
                %v3961 = vld [vmem:[%s3769 + $0x2f8] sm:%s3762]
                %3962 = vst [vmem:[%s3770 + $0x4f8] sm:%s3762] %v3961
                %v3963 = vld [vmem:[%s3769 + $0x300] sm:%s3762]
                %3964 = vst [vmem:[%s3770 + $0x600] sm:%s3762] %v3963
                %v3965 = vld [vmem:[%s3769 + $0x308] sm:%s3762]
                %3966 = vst [vmem:[%s3770 + $0x608] sm:%s3762] %v3965
                %v3967 = vld [vmem:[%s3769 + $0x310] sm:%s3762]
                %3968 = vst [vmem:[%s3770 + $0x610] sm:%s3762] %v3967
                %v3969 = vld [vmem:[%s3769 + $0x318] sm:%s3762]
                %3970 = vst [vmem:[%s3770 + $0x618] sm:%s3762] %v3969
                %v3971 = vld [vmem:[%s3769 + $0x320] sm:%s3762]
                %3972 = vst [vmem:[%s3770 + $0x620] sm:%s3762] %v3971
                %v3973 = vld [vmem:[%s3769 + $0x328] sm:%s3762]
                %3974 = vst [vmem:[%s3770 + $0x628] sm:%s3762] %v3973
                %v3975 = vld [vmem:[%s3769 + $0x330] sm:%s3762]
                %3976 = vst [vmem:[%s3770 + $0x630] sm:%s3762] %v3975
                %v3977 = vld [vmem:[%s3769 + $0x338] sm:%s3762]
                %3978 = vst [vmem:[%s3770 + $0x638] sm:%s3762] %v3977
                %v3979 = vld [vmem:[%s3769 + $0x340] sm:%s3762]
                %3980 = vst [vmem:[%s3770 + $0x640] sm:%s3762] %v3979
                %v3981 = vld [vmem:[%s3769 + $0x348] sm:%s3762]
                %3982 = vst [vmem:[%s3770 + $0x648] sm:%s3762] %v3981
                %v3983 = vld [vmem:[%s3769 + $0x350] sm:%s3762]
                %3984 = vst [vmem:[%s3770 + $0x650] sm:%s3762] %v3983
                %v3985 = vld [vmem:[%s3769 + $0x358] sm:%s3762]
                %3986 = vst [vmem:[%s3770 + $0x658] sm:%s3762] %v3985
                %v3987 = vld [vmem:[%s3769 + $0x360] sm:%s3762]
                %3988 = vst [vmem:[%s3770 + $0x660] sm:%s3762] %v3987
                %v3989 = vld [vmem:[%s3769 + $0x368] sm:%s3762]
                %3990 = vst [vmem:[%s3770 + $0x668] sm:%s3762] %v3989
                %v3991 = vld [vmem:[%s3769 + $0x370] sm:%s3762]
                %3992 = vst [vmem:[%s3770 + $0x670] sm:%s3762] %v3991
                %v3993 = vld [vmem:[%s3769 + $0x378] sm:%s3762]
                %3994 = vst [vmem:[%s3770 + $0x678] sm:%s3762] %v3993
                %v3995 = vld [vmem:[%s3769 + $0x380] sm:%s3762]
                %3996 = vst [vmem:[%s3770 + $0x680] sm:%s3762] %v3995
                %v3997 = vld [vmem:[%s3769 + $0x388] sm:%s3762]
                %3998 = vst [vmem:[%s3770 + $0x688] sm:%s3762] %v3997
                %v3999 = vld [vmem:[%s3769 + $0x390] sm:%s3762]
                %4000 = vst [vmem:[%s3770 + $0x690] sm:%s3762] %v3999
                %v4001 = vld [vmem:[%s3769 + $0x398] sm:%s3762]
                %4002 = vst [vmem:[%s3770 + $0x698] sm:%s3762] %v4001
                %v4003 = vld [vmem:[%s3769 + $0x3a0] sm:%s3762]
                %4004 = vst [vmem:[%s3770 + $0x6a0] sm:%s3762] %v4003
                %v4005 = vld [vmem:[%s3769 + $0x3a8] sm:%s3762]
                %4006 = vst [vmem:[%s3770 + $0x6a8] sm:%s3762] %v4005
                %v4007 = vld [vmem:[%s3769 + $0x3b0] sm:%s3762]
                %4008 = vst [vmem:[%s3770 + $0x6b0] sm:%s3762] %v4007
                %v4009 = vld [vmem:[%s3769 + $0x3b8] sm:%s3762]
                %4010 = vst [vmem:[%s3770 + $0x6b8] sm:%s3762] %v4009
                %v4011 = vld [vmem:[%s3769 + $0x3c0] sm:%s3762]
                %4012 = vst [vmem:[%s3770 + $0x6c0] sm:%s3762] %v4011
                %v4013 = vld [vmem:[%s3769 + $0x3c8] sm:%s3762]
                %4014 = vst [vmem:[%s3770 + $0x6c8] sm:%s3762] %v4013
                %v4015 = vld [vmem:[%s3769 + $0x3d0] sm:%s3762]
                %4016 = vst [vmem:[%s3770 + $0x6d0] sm:%s3762] %v4015
                %v4017 = vld [vmem:[%s3769 + $0x3d8] sm:%s3762]
                %4018 = vst [vmem:[%s3770 + $0x6d8] sm:%s3762] %v4017
                %v4019 = vld [vmem:[%s3769 + $0x3e0] sm:%s3762]
                %4020 = vst [vmem:[%s3770 + $0x6e0] sm:%s3762] %v4019
                %v4021 = vld [vmem:[%s3769 + $0x3e8] sm:%s3762]
                %4022 = vst [vmem:[%s3770 + $0x6e8] sm:%s3762] %v4021
                %v4023 = vld [vmem:[%s3769 + $0x3f0] sm:%s3762]
                %4024 = vst [vmem:[%s3770 + $0x6f0] sm:%s3762] %v4023
                %v4025 = vld [vmem:[%s3769 + $0x3f8] sm:%s3762]
                %4026 = vst [vmem:[%s3770 + $0x6f8] sm:%s3762] %v4025
                %v4027 = vld [vmem:[%s3769 + $0x400] sm:%s3762]
                %4028 = vst [vmem:[%s3770 + $0x800] sm:%s3762] %v4027
                %v4029 = vld [vmem:[%s3769 + $0x408] sm:%s3762]
                %4030 = vst [vmem:[%s3770 + $0x808] sm:%s3762] %v4029
                %v4031 = vld [vmem:[%s3769 + $0x410] sm:%s3762]
                %4032 = vst [vmem:[%s3770 + $0x810] sm:%s3762] %v4031
                %v4033 = vld [vmem:[%s3769 + $0x418] sm:%s3762]
                %4034 = vst [vmem:[%s3770 + $0x818] sm:%s3762] %v4033
                %v4035 = vld [vmem:[%s3769 + $0x420] sm:%s3762]
                %4036 = vst [vmem:[%s3770 + $0x820] sm:%s3762] %v4035
                %v4037 = vld [vmem:[%s3769 + $0x428] sm:%s3762]
                %4038 = vst [vmem:[%s3770 + $0x828] sm:%s3762] %v4037
                %v4039 = vld [vmem:[%s3769 + $0x430] sm:%s3762]
                %4040 = vst [vmem:[%s3770 + $0x830] sm:%s3762] %v4039
                %v4041 = vld [vmem:[%s3769 + $0x438] sm:%s3762]
                %4042 = vst [vmem:[%s3770 + $0x838] sm:%s3762] %v4041
                %v4043 = vld [vmem:[%s3769 + $0x440] sm:%s3762]
                %4044 = vst [vmem:[%s3770 + $0x840] sm:%s3762] %v4043
                %v4045 = vld [vmem:[%s3769 + $0x448] sm:%s3762]
                %4046 = vst [vmem:[%s3770 + $0x848] sm:%s3762] %v4045
                %v4047 = vld [vmem:[%s3769 + $0x450] sm:%s3762]
                %4048 = vst [vmem:[%s3770 + $0x850] sm:%s3762] %v4047
                %v4049 = vld [vmem:[%s3769 + $0x458] sm:%s3762]
                %4050 = vst [vmem:[%s3770 + $0x858] sm:%s3762] %v4049
                %v4051 = vld [vmem:[%s3769 + $0x460] sm:%s3762]
                %4052 = vst [vmem:[%s3770 + $0x860] sm:%s3762] %v4051
                %v4053 = vld [vmem:[%s3769 + $0x468] sm:%s3762]
                %4054 = vst [vmem:[%s3770 + $0x868] sm:%s3762] %v4053
                %v4055 = vld [vmem:[%s3769 + $0x470] sm:%s3762]
                %4056 = vst [vmem:[%s3770 + $0x870] sm:%s3762] %v4055
                %v4057 = vld [vmem:[%s3769 + $0x478] sm:%s3762]
                %4058 = vst [vmem:[%s3770 + $0x878] sm:%s3762] %v4057
                %v4059 = vld [vmem:[%s3769 + $0x480] sm:%s3762]
                %4060 = vst [vmem:[%s3770 + $0x880] sm:%s3762] %v4059
                %v4061 = vld [vmem:[%s3769 + $0x488] sm:%s3762]
                %4062 = vst [vmem:[%s3770 + $0x888] sm:%s3762] %v4061
                %v4063 = vld [vmem:[%s3769 + $0x490] sm:%s3762]
                %4064 = vst [vmem:[%s3770 + $0x890] sm:%s3762] %v4063
                %v4065 = vld [vmem:[%s3769 + $0x498] sm:%s3762]
                %4066 = vst [vmem:[%s3770 + $0x898] sm:%s3762] %v4065
                %v4067 = vld [vmem:[%s3769 + $0x4a0] sm:%s3762]
                %4068 = vst [vmem:[%s3770 + $0x8a0] sm:%s3762] %v4067
                %v4069 = vld [vmem:[%s3769 + $0x4a8] sm:%s3762]
                %4070 = vst [vmem:[%s3770 + $0x8a8] sm:%s3762] %v4069
                %v4071 = vld [vmem:[%s3769 + $0x4b0] sm:%s3762]
                %4072 = vst [vmem:[%s3770 + $0x8b0] sm:%s3762] %v4071
                %v4073 = vld [vmem:[%s3769 + $0x4b8] sm:%s3762]
                %4074 = vst [vmem:[%s3770 + $0x8b8] sm:%s3762] %v4073
                %v4075 = vld [vmem:[%s3769 + $0x4c0] sm:%s3762]
                %4076 = vst [vmem:[%s3770 + $0x8c0] sm:%s3762] %v4075
                %v4077 = vld [vmem:[%s3769 + $0x4c8] sm:%s3762]
                %4078 = vst [vmem:[%s3770 + $0x8c8] sm:%s3762] %v4077
                %v4079 = vld [vmem:[%s3769 + $0x4d0] sm:%s3762]
                %4080 = vst [vmem:[%s3770 + $0x8d0] sm:%s3762] %v4079
                %v4081 = vld [vmem:[%s3769 + $0x4d8] sm:%s3762]
                %4082 = vst [vmem:[%s3770 + $0x8d8] sm:%s3762] %v4081
                %v4083 = vld [vmem:[%s3769 + $0x4e0] sm:%s3762]
                %4084 = vst [vmem:[%s3770 + $0x8e0] sm:%s3762] %v4083
                %v4085 = vld [vmem:[%s3769 + $0x4e8] sm:%s3762]
                %4086 = vst [vmem:[%s3770 + $0x8e8] sm:%s3762] %v4085
                %v4087 = vld [vmem:[%s3769 + $0x4f0] sm:%s3762]
                %4088 = vst [vmem:[%s3770 + $0x8f0] sm:%s3762] %v4087
                %v4089 = vld [vmem:[%s3769 + $0x4f8] sm:%s3762]
                %4090 = vst [vmem:[%s3770 + $0x8f8] sm:%s3762] %v4089
                %v4091 = vld [vmem:[%s3769 + $0x500] sm:%s3762]
                %4092 = vst [vmem:[%s3770 + $0xa00] sm:%s3762] %v4091
                %v4093 = vld [vmem:[%s3769 + $0x508] sm:%s3762]
                %4094 = vst [vmem:[%s3770 + $0xa08] sm:%s3762] %v4093
                %v4095 = vld [vmem:[%s3769 + $0x510] sm:%s3762]
                %4096 = vst [vmem:[%s3770 + $0xa10] sm:%s3762] %v4095
                %v4097 = vld [vmem:[%s3769 + $0x518] sm:%s3762]
                %4098 = vst [vmem:[%s3770 + $0xa18] sm:%s3762] %v4097
                %v4099 = vld [vmem:[%s3769 + $0x520] sm:%s3762]
                %4100 = vst [vmem:[%s3770 + $0xa20] sm:%s3762] %v4099
                %v4101 = vld [vmem:[%s3769 + $0x528] sm:%s3762]
                %4102 = vst [vmem:[%s3770 + $0xa28] sm:%s3762] %v4101
                %v4103 = vld [vmem:[%s3769 + $0x530] sm:%s3762]
                %4104 = vst [vmem:[%s3770 + $0xa30] sm:%s3762] %v4103
                %v4105 = vld [vmem:[%s3769 + $0x538] sm:%s3762]
                %4106 = vst [vmem:[%s3770 + $0xa38] sm:%s3762] %v4105
                %v4107 = vld [vmem:[%s3769 + $0x540] sm:%s3762]
                %4108 = vst [vmem:[%s3770 + $0xa40] sm:%s3762] %v4107
                %v4109 = vld [vmem:[%s3769 + $0x548] sm:%s3762]
                %4110 = vst [vmem:[%s3770 + $0xa48] sm:%s3762] %v4109
                %v4111 = vld [vmem:[%s3769 + $0x550] sm:%s3762]
                %4112 = vst [vmem:[%s3770 + $0xa50] sm:%s3762] %v4111
                %v4113 = vld [vmem:[%s3769 + $0x558] sm:%s3762]
                %4114 = vst [vmem:[%s3770 + $0xa58] sm:%s3762] %v4113
                %v4115 = vld [vmem:[%s3769 + $0x560] sm:%s3762]
                %4116 = vst [vmem:[%s3770 + $0xa60] sm:%s3762] %v4115
                %v4117 = vld [vmem:[%s3769 + $0x568] sm:%s3762]
                %4118 = vst [vmem:[%s3770 + $0xa68] sm:%s3762] %v4117
                %v4119 = vld [vmem:[%s3769 + $0x570] sm:%s3762]
                %4120 = vst [vmem:[%s3770 + $0xa70] sm:%s3762] %v4119
                %v4121 = vld [vmem:[%s3769 + $0x578] sm:%s3762]
                %4122 = vst [vmem:[%s3770 + $0xa78] sm:%s3762] %v4121
                %v4123 = vld [vmem:[%s3769 + $0x580] sm:%s3762]
                %4124 = vst [vmem:[%s3770 + $0xa80] sm:%s3762] %v4123
                %v4125 = vld [vmem:[%s3769 + $0x588] sm:%s3762]
                %4126 = vst [vmem:[%s3770 + $0xa88] sm:%s3762] %v4125
                %v4127 = vld [vmem:[%s3769 + $0x590] sm:%s3762]
                %4128 = vst [vmem:[%s3770 + $0xa90] sm:%s3762] %v4127
                %v4129 = vld [vmem:[%s3769 + $0x598] sm:%s3762]
                %4130 = vst [vmem:[%s3770 + $0xa98] sm:%s3762] %v4129
                %v4131 = vld [vmem:[%s3769 + $0x5a0] sm:%s3762]
                %4132 = vst [vmem:[%s3770 + $0xaa0] sm:%s3762] %v4131
                %v4133 = vld [vmem:[%s3769 + $0x5a8] sm:%s3762]
                %4134 = vst [vmem:[%s3770 + $0xaa8] sm:%s3762] %v4133
                %v4135 = vld [vmem:[%s3769 + $0x5b0] sm:%s3762]
                %4136 = vst [vmem:[%s3770 + $0xab0] sm:%s3762] %v4135
                %v4137 = vld [vmem:[%s3769 + $0x5b8] sm:%s3762]
                %4138 = vst [vmem:[%s3770 + $0xab8] sm:%s3762] %v4137
                %v4139 = vld [vmem:[%s3769 + $0x5c0] sm:%s3762]
                %4140 = vst [vmem:[%s3770 + $0xac0] sm:%s3762] %v4139
                %v4141 = vld [vmem:[%s3769 + $0x5c8] sm:%s3762]
                %4142 = vst [vmem:[%s3770 + $0xac8] sm:%s3762] %v4141
                %v4143 = vld [vmem:[%s3769 + $0x5d0] sm:%s3762]
                %4144 = vst [vmem:[%s3770 + $0xad0] sm:%s3762] %v4143
                %v4145 = vld [vmem:[%s3769 + $0x5d8] sm:%s3762]
                %4146 = vst [vmem:[%s3770 + $0xad8] sm:%s3762] %v4145
                %v4147 = vld [vmem:[%s3769 + $0x5e0] sm:%s3762]
                %4148 = vst [vmem:[%s3770 + $0xae0] sm:%s3762] %v4147
                %v4149 = vld [vmem:[%s3769 + $0x5e8] sm:%s3762]
                %4150 = vst [vmem:[%s3770 + $0xae8] sm:%s3762] %v4149
                %v4151 = vld [vmem:[%s3769 + $0x5f0] sm:%s3762]
                %4152 = vst [vmem:[%s3770 + $0xaf0] sm:%s3762] %v4151
                %v4153 = vld [vmem:[%s3769 + $0x5f8] sm:%s3762]
                %4154 = vst [vmem:[%s3770 + $0xaf8] sm:%s3762] %v4153
                %v4155 = vld [vmem:[%s3769 + $0x600] sm:%s3762]
                %4156 = vst [vmem:[%s3770 + $0xc00] sm:%s3762] %v4155
                %v4157 = vld [vmem:[%s3769 + $0x608] sm:%s3762]
                %4158 = vst [vmem:[%s3770 + $0xc08] sm:%s3762] %v4157
                %v4159 = vld [vmem:[%s3769 + $0x610] sm:%s3762]
                %4160 = vst [vmem:[%s3770 + $0xc10] sm:%s3762] %v4159
                %v4161 = vld [vmem:[%s3769 + $0x618] sm:%s3762]
                %4162 = vst [vmem:[%s3770 + $0xc18] sm:%s3762] %v4161
                %v4163 = vld [vmem:[%s3769 + $0x620] sm:%s3762]
                %4164 = vst [vmem:[%s3770 + $0xc20] sm:%s3762] %v4163
                %v4165 = vld [vmem:[%s3769 + $0x628] sm:%s3762]
                %4166 = vst [vmem:[%s3770 + $0xc28] sm:%s3762] %v4165
                %v4167 = vld [vmem:[%s3769 + $0x630] sm:%s3762]
                %4168 = vst [vmem:[%s3770 + $0xc30] sm:%s3762] %v4167
                %v4169 = vld [vmem:[%s3769 + $0x638] sm:%s3762]
                %4170 = vst [vmem:[%s3770 + $0xc38] sm:%s3762] %v4169
                %v4171 = vld [vmem:[%s3769 + $0x640] sm:%s3762]
                %4172 = vst [vmem:[%s3770 + $0xc40] sm:%s3762] %v4171
                %v4173 = vld [vmem:[%s3769 + $0x648] sm:%s3762]
                %4174 = vst [vmem:[%s3770 + $0xc48] sm:%s3762] %v4173
                %v4175 = vld [vmem:[%s3769 + $0x650] sm:%s3762]
                %4176 = vst [vmem:[%s3770 + $0xc50] sm:%s3762] %v4175
                %v4177 = vld [vmem:[%s3769 + $0x658] sm:%s3762]
                %4178 = vst [vmem:[%s3770 + $0xc58] sm:%s3762] %v4177
                %v4179 = vld [vmem:[%s3769 + $0x660] sm:%s3762]
                %4180 = vst [vmem:[%s3770 + $0xc60] sm:%s3762] %v4179
                %v4181 = vld [vmem:[%s3769 + $0x668] sm:%s3762]
                %4182 = vst [vmem:[%s3770 + $0xc68] sm:%s3762] %v4181
                %v4183 = vld [vmem:[%s3769 + $0x670] sm:%s3762]
                %4184 = vst [vmem:[%s3770 + $0xc70] sm:%s3762] %v4183
                %v4185 = vld [vmem:[%s3769 + $0x678] sm:%s3762]
                %4186 = vst [vmem:[%s3770 + $0xc78] sm:%s3762] %v4185
                %v4187 = vld [vmem:[%s3769 + $0x680] sm:%s3762]
                %4188 = vst [vmem:[%s3770 + $0xc80] sm:%s3762] %v4187
                %v4189 = vld [vmem:[%s3769 + $0x688] sm:%s3762]
                %4190 = vst [vmem:[%s3770 + $0xc88] sm:%s3762] %v4189
                %v4191 = vld [vmem:[%s3769 + $0x690] sm:%s3762]
                %4192 = vst [vmem:[%s3770 + $0xc90] sm:%s3762] %v4191
                %v4193 = vld [vmem:[%s3769 + $0x698] sm:%s3762]
                %4194 = vst [vmem:[%s3770 + $0xc98] sm:%s3762] %v4193
                %v4195 = vld [vmem:[%s3769 + $0x6a0] sm:%s3762]
                %4196 = vst [vmem:[%s3770 + $0xca0] sm:%s3762] %v4195
                %v4197 = vld [vmem:[%s3769 + $0x6a8] sm:%s3762]
                %4198 = vst [vmem:[%s3770 + $0xca8] sm:%s3762] %v4197
                %v4199 = vld [vmem:[%s3769 + $0x6b0] sm:%s3762]
                %4200 = vst [vmem:[%s3770 + $0xcb0] sm:%s3762] %v4199
                %v4201 = vld [vmem:[%s3769 + $0x6b8] sm:%s3762]
                %4202 = vst [vmem:[%s3770 + $0xcb8] sm:%s3762] %v4201
                %v4203 = vld [vmem:[%s3769 + $0x6c0] sm:%s3762]
                %4204 = vst [vmem:[%s3770 + $0xcc0] sm:%s3762] %v4203
                %v4205 = vld [vmem:[%s3769 + $0x6c8] sm:%s3762]
                %4206 = vst [vmem:[%s3770 + $0xcc8] sm:%s3762] %v4205
                %v4207 = vld [vmem:[%s3769 + $0x6d0] sm:%s3762]
                %4208 = vst [vmem:[%s3770 + $0xcd0] sm:%s3762] %v4207
                %v4209 = vld [vmem:[%s3769 + $0x6d8] sm:%s3762]
                %4210 = vst [vmem:[%s3770 + $0xcd8] sm:%s3762] %v4209
                %v4211 = vld [vmem:[%s3769 + $0x6e0] sm:%s3762]
                %4212 = vst [vmem:[%s3770 + $0xce0] sm:%s3762] %v4211
                %v4213 = vld [vmem:[%s3769 + $0x6e8] sm:%s3762]
                %4214 = vst [vmem:[%s3770 + $0xce8] sm:%s3762] %v4213
                %v4215 = vld [vmem:[%s3769 + $0x6f0] sm:%s3762]
                %4216 = vst [vmem:[%s3770 + $0xcf0] sm:%s3762] %v4215
                %v4217 = vld [vmem:[%s3769 + $0x6f8] sm:%s3762]
                %4218 = vst [vmem:[%s3770 + $0xcf8] sm:%s3762] %v4217
                %v4219 = vld [vmem:[%s3769 + $0x700] sm:%s3762]
                %4220 = vst [vmem:[%s3770 + $0xe00] sm:%s3762] %v4219
                %v4221 = vld [vmem:[%s3769 + $0x708] sm:%s3762]
                %4222 = vst [vmem:[%s3770 + $0xe08] sm:%s3762] %v4221
                %v4223 = vld [vmem:[%s3769 + $0x710] sm:%s3762]
                %4224 = vst [vmem:[%s3770 + $0xe10] sm:%s3762] %v4223
                %v4225 = vld [vmem:[%s3769 + $0x718] sm:%s3762]
                %4226 = vst [vmem:[%s3770 + $0xe18] sm:%s3762] %v4225
                %v4227 = vld [vmem:[%s3769 + $0x720] sm:%s3762]
                %4228 = vst [vmem:[%s3770 + $0xe20] sm:%s3762] %v4227
                %v4229 = vld [vmem:[%s3769 + $0x728] sm:%s3762]
                %4230 = vst [vmem:[%s3770 + $0xe28] sm:%s3762] %v4229
                %v4231 = vld [vmem:[%s3769 + $0x730] sm:%s3762]
                %4232 = vst [vmem:[%s3770 + $0xe30] sm:%s3762] %v4231
                %v4233 = vld [vmem:[%s3769 + $0x738] sm:%s3762]
                %4234 = vst [vmem:[%s3770 + $0xe38] sm:%s3762] %v4233
                %v4235 = vld [vmem:[%s3769 + $0x740] sm:%s3762]
                %4236 = vst [vmem:[%s3770 + $0xe40] sm:%s3762] %v4235
                %v4237 = vld [vmem:[%s3769 + $0x748] sm:%s3762]
                %4238 = vst [vmem:[%s3770 + $0xe48] sm:%s3762] %v4237
                %v4239 = vld [vmem:[%s3769 + $0x750] sm:%s3762]
                %4240 = vst [vmem:[%s3770 + $0xe50] sm:%s3762] %v4239
                %v4241 = vld [vmem:[%s3769 + $0x758] sm:%s3762]
                %4242 = vst [vmem:[%s3770 + $0xe58] sm:%s3762] %v4241
                %v4243 = vld [vmem:[%s3769 + $0x760] sm:%s3762]
                %4244 = vst [vmem:[%s3770 + $0xe60] sm:%s3762] %v4243
                %v4245 = vld [vmem:[%s3769 + $0x768] sm:%s3762]
                %4246 = vst [vmem:[%s3770 + $0xe68] sm:%s3762] %v4245
                %v4247 = vld [vmem:[%s3769 + $0x770] sm:%s3762]
                %4248 = vst [vmem:[%s3770 + $0xe70] sm:%s3762] %v4247
                %v4249 = vld [vmem:[%s3769 + $0x778] sm:%s3762]
                %4250 = vst [vmem:[%s3770 + $0xe78] sm:%s3762] %v4249
                %v4251 = vld [vmem:[%s3769 + $0x780] sm:%s3762]
                %4252 = vst [vmem:[%s3770 + $0xe80] sm:%s3762] %v4251
                %v4253 = vld [vmem:[%s3769 + $0x788] sm:%s3762]
                %4254 = vst [vmem:[%s3770 + $0xe88] sm:%s3762] %v4253
                %v4255 = vld [vmem:[%s3769 + $0x790] sm:%s3762]
                %4256 = vst [vmem:[%s3770 + $0xe90] sm:%s3762] %v4255
                %v4257 = vld [vmem:[%s3769 + $0x798] sm:%s3762]
                %4258 = vst [vmem:[%s3770 + $0xe98] sm:%s3762] %v4257
                %v4259 = vld [vmem:[%s3769 + $0x7a0] sm:%s3762]
                %4260 = vst [vmem:[%s3770 + $0xea0] sm:%s3762] %v4259
                %v4261 = vld [vmem:[%s3769 + $0x7a8] sm:%s3762]
                %4262 = vst [vmem:[%s3770 + $0xea8] sm:%s3762] %v4261
                %v4263 = vld [vmem:[%s3769 + $0x7b0] sm:%s3762]
                %4264 = vst [vmem:[%s3770 + $0xeb0] sm:%s3762] %v4263
                %v4265 = vld [vmem:[%s3769 + $0x7b8] sm:%s3762]
                %4266 = vst [vmem:[%s3770 + $0xeb8] sm:%s3762] %v4265
                %v4267 = vld [vmem:[%s3769 + $0x7c0] sm:%s3762]
                %4268 = vst [vmem:[%s3770 + $0xec0] sm:%s3762] %v4267
                %v4269 = vld [vmem:[%s3769 + $0x7c8] sm:%s3762]
                %4270 = vst [vmem:[%s3770 + $0xec8] sm:%s3762] %v4269
                %v4271 = vld [vmem:[%s3769 + $0x7d0] sm:%s3762]
                %4272 = vst [vmem:[%s3770 + $0xed0] sm:%s3762] %v4271
                %v4273 = vld [vmem:[%s3769 + $0x7d8] sm:%s3762]
                %4274 = vst [vmem:[%s3770 + $0xed8] sm:%s3762] %v4273
                %v4275 = vld [vmem:[%s3769 + $0x7e0] sm:%s3762]
                %4276 = vst [vmem:[%s3770 + $0xee0] sm:%s3762] %v4275
                %v4277 = vld [vmem:[%s3769 + $0x7e8] sm:%s3762]
                %4278 = vst [vmem:[%s3770 + $0xee8] sm:%s3762] %v4277
                %v4279 = vld [vmem:[%s3769 + $0x7f0] sm:%s3762]
                %4280 = vst [vmem:[%s3770 + $0xef0] sm:%s3762] %v4279
                %v4281 = vld [vmem:[%s3769 + $0x7f8] sm:%s3762]
                %4282 = vst [vmem:[%s3770 + $0xef8] sm:%s3762] %v4281
              $region94: #{memristor_forward.1} parent=88 // loop_footer
                %s3768 = sadd.s32 1, %s3764
              $region95: #{memristor_forward.1} parent=88 // loop_footer_branch
                %3763 = sbr.rel target = $region91
              $region96: #{memristor_forward.1} parent=88 // loop_exit
                _
            $region89: #{memristor_forward.1} parent=80 // pred_fallthru
              _
          $region81: #{memristor_forward.1} parent=76 // pred_fallthru
            _
          %4807 = vnop
        $region77: #{memristor_forward.1} parent=57 // pred_fallthru
          _
      $region58: #{memristor_forward.1} parent=5 // pred_fallthru
        _
      %p4808 = scmp.le.s32.totalorder 2, %s7
      // Predicated region
      $region112: #{memristor_forward.1} parent=5 // pred_check
        %p4809 = pneg %p4808
      $region113: #{memristor_forward.1} parent=5 // pred_check_branch
        %4811 = sbr.rel (%p4809) target = $region115
      $region114: #{memristor_forward.1} parent=5 // pred_region
        %s4812 = ssub.s32 %s7, 2
        // Predicated region
        $region116: #{memristor_forward.1} parent=114 // pred_check
          %p4813 = pneg %p89
        $region117: #{memristor_forward.1} parent=114 // pred_check_branch
          %4815 = sbr.rel (%p4813) target = $region119
        $region118: #{memristor_forward.1} parent=114 // pred_region
          %s4816 = sand.u32 %s74, 1
          %s4817 = sand.u32 %s74, 1
          %s4818 = smul.addr %s4817, 2048
          %s4819 = scalar_lea.vmem [#allocation8], %s4818
        $region119: #{memristor_forward.1} parent=114 // pred_fallthru
          _
      $region115: #{memristor_forward.1} parent=5 // pred_fallthru
        _
    $region6: #{memristor_forward.1} parent=1 // loop_footer
      %s11 = sadd.s32 1, %s7
    $region7: #{memristor_forward.1} parent=1 // loop_footer_branch
      %6 = sbr.rel target = $region3
    $region8: #{memristor_forward.1} parent=1 // loop_exit
      _

</llo_original>
